<compile_context>
chip_gen: v7x
topology: tpu7x:2x2x1
jax: 0.10.0
libtpu: 0.0.40
codegen_flags: <defaults>
</compile_context>

<pallas_src>
import jax
import jax.numpy as jnp
from jax import lax
from jax.experimental import pallas as pl
from jax.experimental.pallas import tpu as pltpu

# ----------------------------- config (small) -------------------------------
BATCH = 2
SEQ = 8
HIDDEN = 32
NUM_HEADS = 2
HEAD_DIM = HIDDEN // NUM_HEADS
INTERMEDIATE = 64
NUM_LAYERS = 2
VOCAB = 64
NUM_CLASSES = 3
LN_EPS = 1e-12


# ------------------------------ math helpers --------------------------------
def _layernorm(x, gamma, beta):
    mu = jnp.mean(x, axis=-1, keepdims=True)
    var = jnp.mean((x - mu) ** 2, axis=-1, keepdims=True)
    return (x - mu) * lax.rsqrt(var + LN_EPS) * gamma + beta


def _gelu(x):
    # TODO(synk): BERT uses erf-GELU; tanh-approximate GELU is numerically ~identical.
    c = 0.7978845608028654  # sqrt(2/pi)
    return 0.5 * x * (1.0 + jnp.tanh(c * (x + 0.044715 * x * x * x)))


# ------------------------------- fused kernel -------------------------------
def fused_bert_kernel(
    ids_ref,            # (B*S, 1) int32, VMEM
    mask_ref,           # (B, 1, S) float32, VMEM
    word_emb_ref,       # (VOCAB, H)
    pos_emb_ref,        # (S, H)
    type_emb_ref,       # (2, H)
    emb_ln_g_ref, emb_ln_b_ref,            # (1, H)
    wqkv_ref, bqkv_ref,                    # (L, H, 3H), (L, 1, 3H)
    wo_ref, bo_ref,                        # (L, H, H),  (L, 1, H)
    ln1_g_ref, ln1_b_ref,                  # (L, 1, H)
    w1_ref, b1_ref,                        # (L, H, I),  (L, 1, I)
    w2_ref, b2_ref,                        # (L, I, H),  (L, 1, H)
    ln2_g_ref, ln2_b_ref,                  # (L, 1, H)
    whead_ref, bhead_ref,                  # (H, C+1), (1, C+1)
    out_ref,                               # (B, C+1)
):
    B, S, H, NH, HD = BATCH, SEQ, HIDDEN, NUM_HEADS, HEAD_DIM
    M = B * S

    # ---- word embedding gather as a one-hot MXU matmul ----
    vocab_iota = lax.broadcasted_iota(jnp.int32, (M, VOCAB), 1)
    onehot = (ids_ref[...] == vocab_iota).astype(jnp.float32)          # (M, VOCAB)
    word = jnp.dot(onehot, word_emb_ref[...],
                   preferred_element_type=jnp.float32)                 # (M, H)

    # position embedding tiled over the batch; token_type_ids == 0 everywhere
    pos = jnp.concatenate([pos_emb_ref[...]] * B, axis=0)              # (M, H)
    x = word + pos + type_emb_ref[0:1, :]                              # (M, H)
    x = _layernorm(x, emb_ln_g_ref[...], emb_ln_b_ref[...])

    # additive attention mask over keys: 0 attended, -1e9 masked -> (B, 1, S)
    add_mask = (1.0 - mask_ref[...]) * -1e9

    scale = 1.0 / (HD ** 0.5)
    for l in range(NUM_LAYERS):                                        # unrolled (L=2)
        # ---- fused QKV projection: one (M, H) x (H, 3H) matmul ----
        qkv = jnp.dot(x, wqkv_ref[l],
                      preferred_element_type=jnp.float32) + bqkv_ref[l]  # (M, 3H)
        q = qkv[:, 0:H].reshape(B, S, H)
        k = qkv[:, H:2 * H].reshape(B, S, H)
        v = qkv[:, 2 * H:3 * H].reshape(B, S, H)

        wo = wo_ref[l]                                                 # (H, H)
        attn = jnp.zeros((M, H), jnp.float32)
        for h in range(NH):                                            # heads unrolled,
            sl = slice(h * HD, (h + 1) * HD)                           # batch dim einsum'd
            qh, kh, vh = q[:, :, sl], k[:, :, sl], v[:, :, sl]         # (B, S, HD)
            sc = jnp.einsum('bqd,bkd->bqk', qh, kh,
                            preferred_element_type=jnp.float32) * scale
            sc = sc + add_mask                                         # (B, S, S)
            m = jnp.max(sc, axis=-1, keepdims=True)
            p = jnp.exp(sc - m)
            # divide -> EUP reciprocal (frees VALU slots)
            p = p * pl.reciprocal(jnp.sum(p, axis=-1, keepdims=True), approx=True)
            ctx = jnp.einsum('bqk,bkd->bqd', p, vh,
                             preferred_element_type=jnp.float32)       # (B, S, HD)
            # ctx @ Wo == sum_h ctx_h @ Wo[h*hd:(h+1)*hd, :] -> no concat needed
            attn = attn + jnp.dot(ctx.reshape(M, HD), wo[sl, :],
                                  preferred_element_type=jnp.float32)
        attn = attn + bo_ref[l]

        h1 = _layernorm(x + attn, ln1_g_ref[l], ln1_b_ref[l])

        ffn = jnp.dot(h1, w1_ref[l],
                      preferred_element_type=jnp.float32) + b1_ref[l]
        ffn = _gelu(ffn)
        ffn = jnp.dot(ffn, w2_ref[l],
                      preferred_element_type=jnp.float32) + b2_ref[l]

        x = _layernorm(h1 + ffn, ln2_g_ref[l], ln2_b_ref[l])

    # ---- CLS pooling: row 0 of each batch element (static slices) ----
    pooled = jnp.concatenate([x[b * S:b * S + 1, :] for b in range(B)], axis=0)

    # nn.Dropout(0.1) is the identity at inference time.
    # ---- fused heads: classification | regression in one matmul ----
    out_ref[...] = jnp.dot(pooled, whead_ref[...],
                           preferred_element_type=jnp.float32) + bhead_ref[...]


# ------------------------------- wrapper -------------------------------------
def _forward(params, ids_col, mask_b1s):
    n_vmem_inputs = 21
    out = pl.pallas_call(
        fused_bert_kernel,
        out_shape=jax.ShapeDtypeStruct((BATCH, NUM_CLASSES + 1), jnp.float32),
        in_specs=[pl.BlockSpec(memory_space=pltpu.MemorySpace.VMEM)] * n_vmem_inputs,
        out_specs=pl.BlockSpec(memory_space=pltpu.MemorySpace.VMEM),
    )(
        ids_col, mask_b1s,
        params["word_emb"], params["pos_emb"], params["type_emb"],
        params["emb_ln_g"], params["emb_ln_b"],
        params["wqkv"], params["bqkv"], params["wo"], params["bo"],
        params["ln1_g"], params["ln1_b"],
        params["w1"], params["b1"], params["w2"], params["b2"],
        params["ln2_g"], params["ln2_b"],
        params["whead"], params["bhead"],
    )
    variety = out[:, :NUM_CLASSES]
    rating = out[:, NUM_CLASSES:NUM_CLASSES + 1]
    return variety, rating


_forward_jit = jax.jit(_forward)


def multitask_bert_forward(params, input_ids, attention_mask):
    ids_col = input_ids.astype(jnp.int32).reshape(BATCH * SEQ, 1)
    mask_b1s = attention_mask.astype(jnp.float32).reshape(BATCH, 1, SEQ)
    return _forward_jit(params, ids_col, mask_b1s)


# ------------------------------ parameter init ------------------------------
def init_params(key):
    keys = jax.random.split(key, 4 + NUM_LAYERS)

    def dense(k, fan_in, fan_out):
        kw, kb = jax.random.split(k)
        w = 0.02 * jax.random.normal(kw, (fan_in, fan_out), jnp.float32)
        b = 0.02 * jax.random.normal(kb, (1, fan_out), jnp.float32)
        return w, b

    params = {
        "word_emb": 0.02 * jax.random.normal(keys[0], (VOCAB, HIDDEN), jnp.float32),
        "pos_emb": 0.02 * jax.random.normal(keys[1], (SEQ, HIDDEN), jnp.float32),
        "type_emb": 0.02 * jax.random.normal(keys[2], (2, HIDDEN), jnp.float32),
        "emb_ln_g": jnp.ones((1, HIDDEN), jnp.float32),
        "emb_ln_b": jnp.zeros((1, HIDDEN), jnp.float32),
    }

    names = ["wqkv", "bqkv", "wo", "bo", "ln1_g", "ln1_b",
             "w1", "b1", "w2", "b2", "ln2_g", "ln2_b"]
    per_layer = {n: [] for n in names}
    for i in range(NUM_LAYERS):
        kk = jax.random.split(keys[3 + i], 6)
        wq, bq = dense(kk[0], HIDDEN, HIDDEN)
        wk, bk = dense(kk[1], HIDDEN, HIDDEN)
        wv, bv = dense(kk[2], HIDDEN, HIDDEN)
        wo, bo = dense(kk[3], HIDDEN, HIDDEN)
        w1, b1 = dense(kk[4], HIDDEN, INTERMEDIATE)
        w2, b2 = dense(kk[5], INTERMEDIATE, HIDDEN)
        per_layer["wqkv"].append(jnp.concatenate([wq, wk, wv], axis=1))   # (H, 3H)
        per_layer["bqkv"].append(jnp.concatenate([bq, bk, bv], axis=1))   # (1, 3H)
        per_layer["wo"].append(wo)
        per_layer["bo"].append(bo)
        per_layer["ln1_g"].append(jnp.ones((1, HIDDEN), jnp.float32))
        per_layer["ln1_b"].append(jnp.zeros((1, HIDDEN), jnp.float32))
        per_layer["w1"].append(w1)
        per_layer["b1"].append(b1)
        per_layer["w2"].append(w2)
        per_layer["b2"].append(b2)
        per_layer["ln2_g"].append(jnp.ones((1, HIDDEN), jnp.float32))
        per_layer["ln2_b"].append(jnp.zeros((1, HIDDEN), jnp.float32))
    for n in names:
        params[n] = jnp.stack(per_layer[n], axis=0)          # (L, ...)

    kc, kr = jax.random.split(keys[3 + NUM_LAYERS])
    wc, bc = dense(kc, HIDDEN, NUM_CLASSES)
    wr, br = dense(kr, HIDDEN, 1)
    params["whead"] = jnp.concatenate([wc, wr], axis=1)      # (H, C+1) fused heads
    params["bhead"] = jnp.concatenate([bc, br], axis=1)      # (1, C+1)
    return params


# ----------------------------------- main ------------------------------------
if __name__ == "__main__":
    key = jax.random.PRNGKey(0)
    k_param, k_ids = jax.random.split(key)
    params = init_params(k_param)

    input_ids = jax.random.randint(k_ids, (BATCH, SEQ), 0, VOCAB, dtype=jnp.int32)
    attention_mask = jnp.ones((BATCH, SEQ), jnp.int32).at[1, -2:].set(0)

    variety, rating = multitask_bert_forward(params, input_ids, attention_mask)
    variety = jax.block_until_ready(variety)
    rating = jax.block_until_ready(rating)

    assert variety.shape == (BATCH, NUM_CLASSES) and variety.dtype == jnp.float32
    assert rating.shape == (BATCH, 1) and rating.dtype == jnp.float32
    assert bool(jnp.all(jnp.isfinite(variety))) and bool(jnp.all(jnp.isfinite(rating)))
    print("KERNEL_OK")
</pallas_src>

<mosaic_0001>
module attributes {stable_mosaic.version = 11 : i64} {
  func.func @fused_bert_kernel(%arg0: memref<16x1xi32, #tpu.memory_space<vmem>>, %arg1: memref<2x1x8xf32, #tpu.memory_space<vmem>>, %arg2: memref<64x32xf32, #tpu.memory_space<vmem>>, %arg3: memref<8x32xf32, #tpu.memory_space<vmem>>, %arg4: memref<2x32xf32, #tpu.memory_space<vmem>>, %arg5: memref<1x32xf32, #tpu.memory_space<vmem>>, %arg6: memref<1x32xf32, #tpu.memory_space<vmem>>, %arg7: memref<2x32x96xf32, #tpu.memory_space<vmem>>, %arg8: memref<2x1x96xf32, #tpu.memory_space<vmem>>, %arg9: memref<2x32x32xf32, #tpu.memory_space<vmem>>, %arg10: memref<2x1x32xf32, #tpu.memory_space<vmem>>, %arg11: memref<2x1x32xf32, #tpu.memory_space<vmem>>, %arg12: memref<2x1x32xf32, #tpu.memory_space<vmem>>, %arg13: memref<2x32x64xf32, #tpu.memory_space<vmem>>, %arg14: memref<2x1x64xf32, #tpu.memory_space<vmem>>, %arg15: memref<2x64x32xf32, #tpu.memory_space<vmem>>, %arg16: memref<2x1x32xf32, #tpu.memory_space<vmem>>, %arg17: memref<2x1x32xf32, #tpu.memory_space<vmem>>, %arg18: memref<2x1x32xf32, #tpu.memory_space<vmem>>, %arg19: memref<32x4xf32, #tpu.memory_space<vmem>>, %arg20: memref<1x4xf32, #tpu.memory_space<vmem>>, %arg21: memref<2x4xf32, #tpu.memory_space<vmem>>) attributes {dimension_semantics = [], scalar_prefetch = 0 : i64, scratch_operands = 0 : i64, tpu.core_type = #tpu.core_type<tc>} {
    %0 = tpu.iota {dimensions = array<i32: 1>} : vector<16x64xi32>
    %c0 = arith.constant 0 : index
    %c0_0 = arith.constant 0 : index
    %1 = vector.load %arg0[%c0, %c0_0] : memref<16x1xi32, #tpu.memory_space<vmem>>, vector<16x1xi32>
    %2 = vector.broadcast %1 : vector<16x1xi32> to vector<16x64xi32>
    %3 = arith.cmpi eq, %2, %0 : vector<16x64xi32>
    %4 = arith.extui %3 : vector<16x64xi1> to vector<16x64xi32>
    %5 = arith.sitofp %4 : vector<16x64xi32> to vector<16x64xf32>
    %c0_1 = arith.constant 0 : index
    %c0_2 = arith.constant 0 : index
    %6 = vector.load %arg2[%c0_1, %c0_2] : memref<64x32xf32, #tpu.memory_space<vmem>>, vector<64x32xf32>
    %cst = arith.constant dense<0.000000e+00> : vector<16x32xf32>
    %7 = tpu.matmul %5, %6, %cst {dimension_numbers = #tpu.dot_dimension_numbers<[1], [0], [0], [1], [0, 0, 1, 1], [], []>} : vector<16x64xf32>, vector<64x32xf32>, vector<16x32xf32> -> vector<16x32xf32>
    %c0_3 = arith.constant 0 : index
    %c0_4 = arith.constant 0 : index
    %8 = vector.load %arg3[%c0_3, %c0_4] : memref<8x32xf32, #tpu.memory_space<vmem>>, vector<8x32xf32>
    %9 = tpu.concatenate %8, %8 in 0 : vector<8x32xf32>, vector<8x32xf32> -> vector<16x32xf32>
    %10 = arith.addf %7, %9 : vector<16x32xf32>
    %c0_5 = arith.constant 0 : index
    %c0_6 = arith.constant 0 : index
    %11 = vector.load %arg4[%c0_5, %c0_6] : memref<2x32xf32, #tpu.memory_space<vmem>>, vector<1x32xf32>
    %12 = vector.broadcast %11 : vector<1x32xf32> to vector<16x32xf32>
    %13 = arith.addf %10, %12 : vector<16x32xf32>
    %c0_7 = arith.constant 0 : index
    %c0_8 = arith.constant 0 : index
    %14 = vector.load %arg5[%c0_7, %c0_8] : memref<1x32xf32, #tpu.memory_space<vmem>>, vector<1x32xf32>
    %c0_9 = arith.constant 0 : index
    %c0_10 = arith.constant 0 : index
    %15 = vector.load %arg6[%c0_9, %c0_10] : memref<1x32xf32, #tpu.memory_space<vmem>>, vector<1x32xf32>
    %cst_11 = arith.constant dense<0.000000e+00> : vector<16xf32>
    %16 = vector.multi_reduction <add>, %13, %cst_11 [1] : vector<16x32xf32> to vector<16xf32>
    %17 = vector.shape_cast %16 : vector<16xf32> to vector<16x1xf32>
    %cst_12 = arith.constant 3.200000e+01 : f32
    %18 = vector.broadcast %cst_12 : f32 to vector<16x1xf32>
    %19 = arith.divf %17, %18 : vector<16x1xf32>
    %20 = vector.broadcast %19 : vector<16x1xf32> to vector<16x32xf32>
    %21 = arith.subf %13, %20 : vector<16x32xf32>
    %22 = arith.mulf %21, %21 : vector<16x32xf32>
    %cst_13 = arith.constant dense<0.000000e+00> : vector<16xf32>
    %23 = vector.multi_reduction <add>, %22, %cst_13 [1] : vector<16x32xf32> to vector<16xf32>
    %24 = vector.shape_cast %23 : vector<16xf32> to vector<16x1xf32>
    %cst_14 = arith.constant 3.200000e+01 : f32
    %25 = vector.broadcast %cst_14 : f32 to vector<16x1xf32>
    %26 = arith.divf %24, %25 : vector<16x1xf32>
    %27 = vector.broadcast %19 : vector<16x1xf32> to vector<16x32xf32>
    %28 = arith.subf %13, %27 : vector<16x32xf32>
    %cst_15 = arith.constant 9.99999996E-13 : f32
    %29 = vector.broadcast %cst_15 : f32 to vector<16x1xf32>
    %30 = arith.addf %26, %29 : vector<16x1xf32>
    %31 = math.rsqrt %30 : vector<16x1xf32>
    %32 = vector.broadcast %31 : vector<16x1xf32> to vector<16x32xf32>
    %33 = arith.mulf %28, %32 : vector<16x32xf32>
    %34 = vector.broadcast %14 : vector<1x32xf32> to vector<16x32xf32>
    %35 = arith.mulf %33, %34 : vector<16x32xf32>
    %36 = vector.broadcast %15 : vector<1x32xf32> to vector<16x32xf32>
    %37 = arith.addf %35, %36 : vector<16x32xf32>
    %c0_16 = arith.constant 0 : index
    %c0_17 = arith.constant 0 : index
    %c0_18 = arith.constant 0 : index
    %38 = vector.load %arg1[%c0_16, %c0_17, %c0_18] : memref<2x1x8xf32, #tpu.memory_space<vmem>>, vector<2x1x8xf32>
    %cst_19 = arith.constant 1.000000e+00 : f32
    %39 = vector.broadcast %cst_19 : f32 to vector<2x1x8xf32>
    %40 = arith.subf %39, %38 : vector<2x1x8xf32>
    %cst_20 = arith.constant -1.000000e+09 : f32
    %41 = vector.broadcast %cst_20 : f32 to vector<2x1x8xf32>
    %42 = arith.mulf %40, %41 : vector<2x1x8xf32>
    %c0_21 = arith.constant 0 : index
    %c0_22 = arith.constant 0 : index
    %c0_23 = arith.constant 0 : index
    %43 = vector.load %arg7[%c0_21, %c0_22, %c0_23] : memref<2x32x96xf32, #tpu.memory_space<vmem>>, vector<1x32x96xf32>
    %44 = vector.shape_cast %43 : vector<1x32x96xf32> to vector<32x96xf32>
    %cst_24 = arith.constant dense<0.000000e+00> : vector<16x96xf32>
    %45 = tpu.matmul %37, %44, %cst_24 {dimension_numbers = #tpu.dot_dimension_numbers<[1], [0], [0], [1], [0, 0, 1, 1], [], []>} : vector<16x32xf32>, vector<32x96xf32>, vector<16x96xf32> -> vector<16x96xf32>
    %c0_25 = arith.constant 0 : index
    %c0_26 = arith.constant 0 : index
    %c0_27 = arith.constant 0 : index
    %46 = vector.load %arg8[%c0_25, %c0_26, %c0_27] : memref<2x1x96xf32, #tpu.memory_space<vmem>>, vector<1x1x96xf32>
    %47 = vector.shape_cast %46 : vector<1x1x96xf32> to vector<1x96xf32>
    %48 = vector.broadcast %47 : vector<1x96xf32> to vector<16x96xf32>
    %49 = arith.addf %45, %48 : vector<16x96xf32>
    %50 = vector.extract_strided_slice %49 {offsets = [0, 0], sizes = [16, 32], strides = [1, 1]} : vector<16x96xf32> to vector<16x32xf32>
    %51 = vector.shape_cast %50 : vector<16x32xf32> to vector<2x8x32xf32>
    %52 = vector.extract_strided_slice %49 {offsets = [0, 32], sizes = [16, 32], strides = [1, 1]} : vector<16x96xf32> to vector<16x32xf32>
    %53 = vector.shape_cast %52 : vector<16x32xf32> to vector<2x8x32xf32>
    %54 = vector.extract_strided_slice %49 {offsets = [0, 64], sizes = [16, 32], strides = [1, 1]} : vector<16x96xf32> to vector<16x32xf32>
    %55 = vector.shape_cast %54 : vector<16x32xf32> to vector<2x8x32xf32>
    %c0_28 = arith.constant 0 : index
    %c0_29 = arith.constant 0 : index
    %c0_30 = arith.constant 0 : index
    %56 = vector.load %arg9[%c0_28, %c0_29, %c0_30] : memref<2x32x32xf32, #tpu.memory_space<vmem>>, vector<1x32x32xf32>
    %57 = vector.shape_cast %56 : vector<1x32x32xf32> to vector<32x32xf32>
    %cst_31 = arith.constant 0.000000e+00 : f32
    %58 = vector.broadcast %cst_31 : f32 to vector<16x32xf32>
    %59 = vector.extract_strided_slice %51 {offsets = [0, 0, 0], sizes = [2, 8, 16], strides = [1, 1, 1]} : vector<2x8x32xf32> to vector<2x8x16xf32>
    %60 = vector.extract_strided_slice %53 {offsets = [0, 0, 0], sizes = [2, 8, 16], strides = [1, 1, 1]} : vector<2x8x32xf32> to vector<2x8x16xf32>
    %61 = vector.extract_strided_slice %55 {offsets = [0, 0, 0], sizes = [2, 8, 16], strides = [1, 1, 1]} : vector<2x8x32xf32> to vector<2x8x16xf32>
    "tpu.trace_start"() <{level = 10 : i32, message = "bqd,bkd->bqk"}> : () -> ()
    %cst_32 = arith.constant dense<0.000000e+00> : vector<2x8x8xf32>
    %62 = tpu.matmul %59, %60, %cst_32 {dimension_numbers = #tpu.dot_dimension_numbers<[2], [2], [1], [1], [0, 0, 0, 1, 1, 1], [0], [0]>} : vector<2x8x16xf32>, vector<2x8x16xf32>, vector<2x8x8xf32> -> vector<2x8x8xf32>
    "tpu.trace_stop"() : () -> ()
    %cst_33 = arith.constant 2.500000e-01 : f32
    %63 = vector.broadcast %cst_33 : f32 to vector<2x8x8xf32>
    %64 = arith.mulf %62, %63 : vector<2x8x8xf32>
    %65 = vector.broadcast %42 : vector<2x1x8xf32> to vector<2x8x8xf32>
    %66 = arith.addf %64, %65 : vector<2x8x8xf32>
    %cst_34 = arith.constant dense<0xFF800000> : vector<2x8xf32>
    %67 = vector.multi_reduction <maximumf>, %66, %cst_34 [2] : vector<2x8x8xf32> to vector<2x8xf32>
    %68 = vector.shape_cast %67 : vector<2x8xf32> to vector<2x8x1xf32>
    %69 = vector.broadcast %68 : vector<2x8x1xf32> to vector<2x8x8xf32>
    %70 = arith.subf %66, %69 : vector<2x8x8xf32>
    %71 = math.exp %70 : vector<2x8x8xf32>
    %cst_35 = arith.constant dense<0.000000e+00> : vector<2x8xf32>
    %72 = vector.multi_reduction <add>, %71, %cst_35 [2] : vector<2x8x8xf32> to vector<2x8xf32>
    %73 = vector.shape_cast %72 : vector<2x8xf32> to vector<2x8x1xf32>
    %74 = tpu.reciprocal %73 {approx = true} : vector<2x8x1xf32> -> vector<2x8x1xf32>
    %75 = vector.broadcast %74 : vector<2x8x1xf32> to vector<2x8x8xf32>
    %76 = arith.mulf %71, %75 : vector<2x8x8xf32>
    "tpu.trace_start"() <{level = 10 : i32, message = "bqk,bkd->bqd"}> : () -> ()
    %cst_36 = arith.constant dense<0.000000e+00> : vector<2x8x16xf32>
    %77 = tpu.matmul %76, %61, %cst_36 {dimension_numbers = #tpu.dot_dimension_numbers<[2], [1], [1], [2], [0, 0, 0, 1, 1, 2], [0], [0]>} : vector<2x8x8xf32>, vector<2x8x16xf32>, vector<2x8x16xf32> -> vector<2x8x16xf32>
    "tpu.trace_stop"() : () -> ()
    %78 = vector.shape_cast %77 : vector<2x8x16xf32> to vector<16x16xf32>
    %79 = vector.extract_strided_slice %57 {offsets = [0, 0], sizes = [16, 32], strides = [1, 1]} : vector<32x32xf32> to vector<16x32xf32>
    %cst_37 = arith.constant dense<0.000000e+00> : vector<16x32xf32>
    %80 = tpu.matmul %78, %79, %cst_37 {dimension_numbers = #tpu.dot_dimension_numbers<[1], [0], [0], [1], [0, 0, 1, 1], [], []>} : vector<16x16xf32>, vector<16x32xf32>, vector<16x32xf32> -> vector<16x32xf32>
    %81 = arith.addf %58, %80 : vector<16x32xf32>
    %82 = vector.extract_strided_slice %51 {offsets = [0, 0, 16], sizes = [2, 8, 16], strides = [1, 1, 1]} : vector<2x8x32xf32> to vector<2x8x16xf32>
    %83 = vector.extract_strided_slice %53 {offsets = [0, 0, 16], sizes = [2, 8, 16], strides = [1, 1, 1]} : vector<2x8x32xf32> to vector<2x8x16xf32>
    %84 = vector.extract_strided_slice %55 {offsets = [0, 0, 16], sizes = [2, 8, 16], strides = [1, 1, 1]} : vector<2x8x32xf32> to vector<2x8x16xf32>
    "tpu.trace_start"() <{level = 10 : i32, message = "bqd,bkd->bqk"}> : () -> ()
    %cst_38 = arith.constant dense<0.000000e+00> : vector<2x8x8xf32>
    %85 = tpu.matmul %82, %83, %cst_38 {dimension_numbers = #tpu.dot_dimension_numbers<[2], [2], [1], [1], [0, 0, 0, 1, 1, 1], [0], [0]>} : vector<2x8x16xf32>, vector<2x8x16xf32>, vector<2x8x8xf32> -> vector<2x8x8xf32>
    "tpu.trace_stop"() : () -> ()
    %cst_39 = arith.constant 2.500000e-01 : f32
    %86 = vector.broadcast %cst_39 : f32 to vector<2x8x8xf32>
    %87 = arith.mulf %85, %86 : vector<2x8x8xf32>
    %88 = vector.broadcast %42 : vector<2x1x8xf32> to vector<2x8x8xf32>
    %89 = arith.addf %87, %88 : vector<2x8x8xf32>
    %cst_40 = arith.constant dense<0xFF800000> : vector<2x8xf32>
    %90 = vector.multi_reduction <maximumf>, %89, %cst_40 [2] : vector<2x8x8xf32> to vector<2x8xf32>
    %91 = vector.shape_cast %90 : vector<2x8xf32> to vector<2x8x1xf32>
    %92 = vector.broadcast %91 : vector<2x8x1xf32> to vector<2x8x8xf32>
    %93 = arith.subf %89, %92 : vector<2x8x8xf32>
    %94 = math.exp %93 : vector<2x8x8xf32>
    %cst_41 = arith.constant dense<0.000000e+00> : vector<2x8xf32>
    %95 = vector.multi_reduction <add>, %94, %cst_41 [2] : vector<2x8x8xf32> to vector<2x8xf32>
    %96 = vector.shape_cast %95 : vector<2x8xf32> to vector<2x8x1xf32>
    %97 = tpu.reciprocal %96 {approx = true} : vector<2x8x1xf32> -> vector<2x8x1xf32>
    %98 = vector.broadcast %97 : vector<2x8x1xf32> to vector<2x8x8xf32>
    %99 = arith.mulf %94, %98 : vector<2x8x8xf32>
    "tpu.trace_start"() <{level = 10 : i32, message = "bqk,bkd->bqd"}> : () -> ()
    %cst_42 = arith.constant dense<0.000000e+00> : vector<2x8x16xf32>
    %100 = tpu.matmul %99, %84, %cst_42 {dimension_numbers = #tpu.dot_dimension_numbers<[2], [1], [1], [2], [0, 0, 0, 1, 1, 2], [0], [0]>} : vector<2x8x8xf32>, vector<2x8x16xf32>, vector<2x8x16xf32> -> vector<2x8x16xf32>
    "tpu.trace_stop"() : () -> ()
    %101 = vector.shape_cast %100 : vector<2x8x16xf32> to vector<16x16xf32>
    %102 = vector.extract_strided_slice %57 {offsets = [16, 0], sizes = [16, 32], strides = [1, 1]} : vector<32x32xf32> to vector<16x32xf32>
    %cst_43 = arith.constant dense<0.000000e+00> : vector<16x32xf32>
    %103 = tpu.matmul %101, %102, %cst_43 {dimension_numbers = #tpu.dot_dimension_numbers<[1], [0], [0], [1], [0, 0, 1, 1], [], []>} : vector<16x16xf32>, vector<16x32xf32>, vector<16x32xf32> -> vector<16x32xf32>
    %104 = arith.addf %81, %103 : vector<16x32xf32>
    %c0_44 = arith.constant 0 : index
    %c0_45 = arith.constant 0 : index
    %c0_46 = arith.constant 0 : index
    %105 = vector.load %arg10[%c0_44, %c0_45, %c0_46] : memref<2x1x32xf32, #tpu.memory_space<vmem>>, vector<1x1x32xf32>
    %106 = vector.shape_cast %105 : vector<1x1x32xf32> to vector<1x32xf32>
    %107 = vector.broadcast %106 : vector<1x32xf32> to vector<16x32xf32>
    %108 = arith.addf %104, %107 : vector<16x32xf32>
    %109 = arith.addf %37, %108 : vector<16x32xf32>
    %c0_47 = arith.constant 0 : index
    %c0_48 = arith.constant 0 : index
    %c0_49 = arith.constant 0 : index
    %110 = vector.load %arg11[%c0_47, %c0_48, %c0_49] : memref<2x1x32xf32, #tpu.memory_space<vmem>>, vector<1x1x32xf32>
    %111 = vector.shape_cast %110 : vector<1x1x32xf32> to vector<1x32xf32>
    %c0_50 = arith.constant 0 : index
    %c0_51 = arith.constant 0 : index
    %c0_52 = arith.constant 0 : index
    %112 = vector.load %arg12[%c0_50, %c0_51, %c0_52] : memref<2x1x32xf32, #tpu.memory_space<vmem>>, vector<1x1x32xf32>
    %113 = vector.shape_cast %112 : vector<1x1x32xf32> to vector<1x32xf32>
    %cst_53 = arith.constant dense<0.000000e+00> : vector<16xf32>
    %114 = vector.multi_reduction <add>, %109, %cst_53 [1] : vector<16x32xf32> to vector<16xf32>
    %115 = vector.shape_cast %114 : vector<16xf32> to vector<16x1xf32>
    %cst_54 = arith.constant 3.200000e+01 : f32
    %116 = vector.broadcast %cst_54 : f32 to vector<16x1xf32>
    %117 = arith.divf %115, %116 : vector<16x1xf32>
    %118 = vector.broadcast %117 : vector<16x1xf32> to vector<16x32xf32>
    %119 = arith.subf %109, %118 : vector<16x32xf32>
    %120 = arith.mulf %119, %119 : vector<16x32xf32>
    %cst_55 = arith.constant dense<0.000000e+00> : vector<16xf32>
    %121 = vector.multi_reduction <add>, %120, %cst_55 [1] : vector<16x32xf32> to vector<16xf32>
    %122 = vector.shape_cast %121 : vector<16xf32> to vector<16x1xf32>
    %cst_56 = arith.constant 3.200000e+01 : f32
    %123 = vector.broadcast %cst_56 : f32 to vector<16x1xf32>
    %124 = arith.divf %122, %123 : vector<16x1xf32>
    %125 = vector.broadcast %117 : vector<16x1xf32> to vector<16x32xf32>
    %126 = arith.subf %109, %125 : vector<16x32xf32>
    %cst_57 = arith.constant 9.99999996E-13 : f32
    %127 = vector.broadcast %cst_57 : f32 to vector<16x1xf32>
    %128 = arith.addf %124, %127 : vector<16x1xf32>
    %129 = math.rsqrt %128 : vector<16x1xf32>
    %130 = vector.broadcast %129 : vector<16x1xf32> to vector<16x32xf32>
    %131 = arith.mulf %126, %130 : vector<16x32xf32>
    %132 = vector.broadcast %111 : vector<1x32xf32> to vector<16x32xf32>
    %133 = arith.mulf %131, %132 : vector<16x32xf32>
    %134 = vector.broadcast %113 : vector<1x32xf32> to vector<16x32xf32>
    %135 = arith.addf %133, %134 : vector<16x32xf32>
    %c0_58 = arith.constant 0 : index
    %c0_59 = arith.constant 0 : index
    %c0_60 = arith.constant 0 : index
    %136 = vector.load %arg13[%c0_58, %c0_59, %c0_60] : memref<2x32x64xf32, #tpu.memory_space<vmem>>, vector<1x32x64xf32>
    %137 = vector.shape_cast %136 : vector<1x32x64xf32> to vector<32x64xf32>
    %cst_61 = arith.constant dense<0.000000e+00> : vector<16x64xf32>
    %138 = tpu.matmul %135, %137, %cst_61 {dimension_numbers = #tpu.dot_dimension_numbers<[1], [0], [0], [1], [0, 0, 1, 1], [], []>} : vector<16x32xf32>, vector<32x64xf32>, vector<16x64xf32> -> vector<16x64xf32>
    %c0_62 = arith.constant 0 : index
    %c0_63 = arith.constant 0 : index
    %c0_64 = arith.constant 0 : index
    %139 = vector.load %arg14[%c0_62, %c0_63, %c0_64] : memref<2x1x64xf32, #tpu.memory_space<vmem>>, vector<1x1x64xf32>
    %140 = vector.shape_cast %139 : vector<1x1x64xf32> to vector<1x64xf32>
    %141 = vector.broadcast %140 : vector<1x64xf32> to vector<16x64xf32>
    %142 = arith.addf %138, %141 : vector<16x64xf32>
    %cst_65 = arith.constant 5.000000e-01 : f32
    %143 = vector.broadcast %cst_65 : f32 to vector<16x64xf32>
    %144 = arith.mulf %143, %142 : vector<16x64xf32>
    %cst_66 = arith.constant 4.471500e-02 : f32
    %145 = vector.broadcast %cst_66 : f32 to vector<16x64xf32>
    %146 = arith.mulf %145, %142 : vector<16x64xf32>
    %147 = arith.mulf %146, %142 : vector<16x64xf32>
    %148 = arith.mulf %147, %142 : vector<16x64xf32>
    %149 = arith.addf %142, %148 : vector<16x64xf32>
    %cst_67 = arith.constant 0.797884583 : f32
    %150 = vector.broadcast %cst_67 : f32 to vector<16x64xf32>
    %151 = arith.mulf %150, %149 : vector<16x64xf32>
    %152 = math.tanh %151 : vector<16x64xf32>
    %cst_68 = arith.constant 1.000000e+00 : f32
    %153 = vector.broadcast %cst_68 : f32 to vector<16x64xf32>
    %154 = arith.addf %153, %152 : vector<16x64xf32>
    %155 = arith.mulf %144, %154 : vector<16x64xf32>
    %c0_69 = arith.constant 0 : index
    %c0_70 = arith.constant 0 : index
    %c0_71 = arith.constant 0 : index
    %156 = vector.load %arg15[%c0_69, %c0_70, %c0_71] : memref<2x64x32xf32, #tpu.memory_space<vmem>>, vector<1x64x32xf32>
    %157 = vector.shape_cast %156 : vector<1x64x32xf32> to vector<64x32xf32>
    %cst_72 = arith.constant dense<0.000000e+00> : vector<16x32xf32>
    %158 = tpu.matmul %155, %157, %cst_72 {dimension_numbers = #tpu.dot_dimension_numbers<[1], [0], [0], [1], [0, 0, 1, 1], [], []>} : vector<16x64xf32>, vector<64x32xf32>, vector<16x32xf32> -> vector<16x32xf32>
    %c0_73 = arith.constant 0 : index
    %c0_74 = arith.constant 0 : index
    %c0_75 = arith.constant 0 : index
    %159 = vector.load %arg16[%c0_73, %c0_74, %c0_75] : memref<2x1x32xf32, #tpu.memory_space<vmem>>, vector<1x1x32xf32>
    %160 = vector.shape_cast %159 : vector<1x1x32xf32> to vector<1x32xf32>
    %161 = vector.broadcast %160 : vector<1x32xf32> to vector<16x32xf32>
    %162 = arith.addf %158, %161 : vector<16x32xf32>
    %163 = arith.addf %135, %162 : vector<16x32xf32>
    %c0_76 = arith.constant 0 : index
    %c0_77 = arith.constant 0 : index
    %c0_78 = arith.constant 0 : index
    %164 = vector.load %arg17[%c0_76, %c0_77, %c0_78] : memref<2x1x32xf32, #tpu.memory_space<vmem>>, vector<1x1x32xf32>
    %165 = vector.shape_cast %164 : vector<1x1x32xf32> to vector<1x32xf32>
    %c0_79 = arith.constant 0 : index
    %c0_80 = arith.constant 0 : index
    %c0_81 = arith.constant 0 : index
    %166 = vector.load %arg18[%c0_79, %c0_80, %c0_81] : memref<2x1x32xf32, #tpu.memory_space<vmem>>, vector<1x1x32xf32>
    %167 = vector.shape_cast %166 : vector<1x1x32xf32> to vector<1x32xf32>
    %cst_82 = arith.constant dense<0.000000e+00> : vector<16xf32>
    %168 = vector.multi_reduction <add>, %163, %cst_82 [1] : vector<16x32xf32> to vector<16xf32>
    %169 = vector.shape_cast %168 : vector<16xf32> to vector<16x1xf32>
    %cst_83 = arith.constant 3.200000e+01 : f32
    %170 = vector.broadcast %cst_83 : f32 to vector<16x1xf32>
    %171 = arith.divf %169, %170 : vector<16x1xf32>
    %172 = vector.broadcast %171 : vector<16x1xf32> to vector<16x32xf32>
    %173 = arith.subf %163, %172 : vector<16x32xf32>
    %174 = arith.mulf %173, %173 : vector<16x32xf32>
    %cst_84 = arith.constant dense<0.000000e+00> : vector<16xf32>
    %175 = vector.multi_reduction <add>, %174, %cst_84 [1] : vector<16x32xf32> to vector<16xf32>
    %176 = vector.shape_cast %175 : vector<16xf32> to vector<16x1xf32>
    %cst_85 = arith.constant 3.200000e+01 : f32
    %177 = vector.broadcast %cst_85 : f32 to vector<16x1xf32>
    %178 = arith.divf %176, %177 : vector<16x1xf32>
    %179 = vector.broadcast %171 : vector<16x1xf32> to vector<16x32xf32>
    %180 = arith.subf %163, %179 : vector<16x32xf32>
    %cst_86 = arith.constant 9.99999996E-13 : f32
    %181 = vector.broadcast %cst_86 : f32 to vector<16x1xf32>
    %182 = arith.addf %178, %181 : vector<16x1xf32>
    %183 = math.rsqrt %182 : vector<16x1xf32>
    %184 = vector.broadcast %183 : vector<16x1xf32> to vector<16x32xf32>
    %185 = arith.mulf %180, %184 : vector<16x32xf32>
    %186 = vector.broadcast %165 : vector<1x32xf32> to vector<16x32xf32>
    %187 = arith.mulf %185, %186 : vector<16x32xf32>
    %188 = vector.broadcast %167 : vector<1x32xf32> to vector<16x32xf32>
    %189 = arith.addf %187, %188 : vector<16x32xf32>
    %c1 = arith.constant 1 : index
    %c0_87 = arith.constant 0 : index
    %c0_88 = arith.constant 0 : index
    %190 = vector.load %arg7[%c1, %c0_87, %c0_88] : memref<2x32x96xf32, #tpu.memory_space<vmem>>, vector<1x32x96xf32>
    %191 = vector.shape_cast %190 : vector<1x32x96xf32> to vector<32x96xf32>
    %cst_89 = arith.constant dense<0.000000e+00> : vector<16x96xf32>
    %192 = tpu.matmul %189, %191, %cst_89 {dimension_numbers = #tpu.dot_dimension_numbers<[1], [0], [0], [1], [0, 0, 1, 1], [], []>} : vector<16x32xf32>, vector<32x96xf32>, vector<16x96xf32> -> vector<16x96xf32>
    %c1_90 = arith.constant 1 : index
    %c0_91 = arith.constant 0 : index
    %c0_92 = arith.constant 0 : index
    %193 = vector.load %arg8[%c1_90, %c0_91, %c0_92] : memref<2x1x96xf32, #tpu.memory_space<vmem>>, vector<1x1x96xf32>
    %194 = vector.shape_cast %193 : vector<1x1x96xf32> to vector<1x96xf32>
    %195 = vector.broadcast %194 : vector<1x96xf32> to vector<16x96xf32>
    %196 = arith.addf %192, %195 : vector<16x96xf32>
    %197 = vector.extract_strided_slice %196 {offsets = [0, 0], sizes = [16, 32], strides = [1, 1]} : vector<16x96xf32> to vector<16x32xf32>
    %198 = vector.shape_cast %197 : vector<16x32xf32> to vector<2x8x32xf32>
    %199 = vector.extract_strided_slice %196 {offsets = [0, 32], sizes = [16, 32], strides = [1, 1]} : vector<16x96xf32> to vector<16x32xf32>
    %200 = vector.shape_cast %199 : vector<16x32xf32> to vector<2x8x32xf32>
    %201 = vector.extract_strided_slice %196 {offsets = [0, 64], sizes = [16, 32], strides = [1, 1]} : vector<16x96xf32> to vector<16x32xf32>
    %202 = vector.shape_cast %201 : vector<16x32xf32> to vector<2x8x32xf32>
    %c1_93 = arith.constant 1 : index
    %c0_94 = arith.constant 0 : index
    %c0_95 = arith.constant 0 : index
    %203 = vector.load %arg9[%c1_93, %c0_94, %c0_95] : memref<2x32x32xf32, #tpu.memory_space<vmem>>, vector<1x32x32xf32>
    %204 = vector.shape_cast %203 : vector<1x32x32xf32> to vector<32x32xf32>
    %cst_96 = arith.constant 0.000000e+00 : f32
    %205 = vector.broadcast %cst_96 : f32 to vector<16x32xf32>
    %206 = vector.extract_strided_slice %198 {offsets = [0, 0, 0], sizes = [2, 8, 16], strides = [1, 1, 1]} : vector<2x8x32xf32> to vector<2x8x16xf32>
    %207 = vector.extract_strided_slice %200 {offsets = [0, 0, 0], sizes = [2, 8, 16], strides = [1, 1, 1]} : vector<2x8x32xf32> to vector<2x8x16xf32>
    %208 = vector.extract_strided_slice %202 {offsets = [0, 0, 0], sizes = [2, 8, 16], strides = [1, 1, 1]} : vector<2x8x32xf32> to vector<2x8x16xf32>
    "tpu.trace_start"() <{level = 10 : i32, message = "bqd,bkd->bqk"}> : () -> ()
    %cst_97 = arith.constant dense<0.000000e+00> : vector<2x8x8xf32>
    %209 = tpu.matmul %206, %207, %cst_97 {dimension_numbers = #tpu.dot_dimension_numbers<[2], [2], [1], [1], [0, 0, 0, 1, 1, 1], [0], [0]>} : vector<2x8x16xf32>, vector<2x8x16xf32>, vector<2x8x8xf32> -> vector<2x8x8xf32>
    "tpu.trace_stop"() : () -> ()
    %cst_98 = arith.constant 2.500000e-01 : f32
    %210 = vector.broadcast %cst_98 : f32 to vector<2x8x8xf32>
    %211 = arith.mulf %209, %210 : vector<2x8x8xf32>
    %212 = vector.broadcast %42 : vector<2x1x8xf32> to vector<2x8x8xf32>
    %213 = arith.addf %211, %212 : vector<2x8x8xf32>
    %cst_99 = arith.constant dense<0xFF800000> : vector<2x8xf32>
    %214 = vector.multi_reduction <maximumf>, %213, %cst_99 [2] : vector<2x8x8xf32> to vector<2x8xf32>
    %215 = vector.shape_cast %214 : vector<2x8xf32> to vector<2x8x1xf32>
    %216 = vector.broadcast %215 : vector<2x8x1xf32> to vector<2x8x8xf32>
    %217 = arith.subf %213, %216 : vector<2x8x8xf32>
    %218 = math.exp %217 : vector<2x8x8xf32>
    %cst_100 = arith.constant dense<0.000000e+00> : vector<2x8xf32>
    %219 = vector.multi_reduction <add>, %218, %cst_100 [2] : vector<2x8x8xf32> to vector<2x8xf32>
    %220 = vector.shape_cast %219 : vector<2x8xf32> to vector<2x8x1xf32>
    %221 = tpu.reciprocal %220 {approx = true} : vector<2x8x1xf32> -> vector<2x8x1xf32>
    %222 = vector.broadcast %221 : vector<2x8x1xf32> to vector<2x8x8xf32>
    %223 = arith.mulf %218, %222 : vector<2x8x8xf32>
    "tpu.trace_start"() <{level = 10 : i32, message = "bqk,bkd->bqd"}> : () -> ()
    %cst_101 = arith.constant dense<0.000000e+00> : vector<2x8x16xf32>
    %224 = tpu.matmul %223, %208, %cst_101 {dimension_numbers = #tpu.dot_dimension_numbers<[2], [1], [1], [2], [0, 0, 0, 1, 1, 2], [0], [0]>} : vector<2x8x8xf32>, vector<2x8x16xf32>, vector<2x8x16xf32> -> vector<2x8x16xf32>
    "tpu.trace_stop"() : () -> ()
    %225 = vector.shape_cast %224 : vector<2x8x16xf32> to vector<16x16xf32>
    %226 = vector.extract_strided_slice %204 {offsets = [0, 0], sizes = [16, 32], strides = [1, 1]} : vector<32x32xf32> to vector<16x32xf32>
    %cst_102 = arith.constant dense<0.000000e+00> : vector<16x32xf32>
    %227 = tpu.matmul %225, %226, %cst_102 {dimension_numbers = #tpu.dot_dimension_numbers<[1], [0], [0], [1], [0, 0, 1, 1], [], []>} : vector<16x16xf32>, vector<16x32xf32>, vector<16x32xf32> -> vector<16x32xf32>
    %228 = arith.addf %205, %227 : vector<16x32xf32>
    %229 = vector.extract_strided_slice %198 {offsets = [0, 0, 16], sizes = [2, 8, 16], strides = [1, 1, 1]} : vector<2x8x32xf32> to vector<2x8x16xf32>
    %230 = vector.extract_strided_slice %200 {offsets = [0, 0, 16], sizes = [2, 8, 16], strides = [1, 1, 1]} : vector<2x8x32xf32> to vector<2x8x16xf32>
    %231 = vector.extract_strided_slice %202 {offsets = [0, 0, 16], sizes = [2, 8, 16], strides = [1, 1, 1]} : vector<2x8x32xf32> to vector<2x8x16xf32>
    "tpu.trace_start"() <{level = 10 : i32, message = "bqd,bkd->bqk"}> : () -> ()
    %cst_103 = arith.constant dense<0.000000e+00> : vector<2x8x8xf32>
    %232 = tpu.matmul %229, %230, %cst_103 {dimension_numbers = #tpu.dot_dimension_numbers<[2], [2], [1], [1], [0, 0, 0, 1, 1, 1], [0], [0]>} : vector<2x8x16xf32>, vector<2x8x16xf32>, vector<2x8x8xf32> -> vector<2x8x8xf32>
    "tpu.trace_stop"() : () -> ()
    %cst_104 = arith.constant 2.500000e-01 : f32
    %233 = vector.broadcast %cst_104 : f32 to vector<2x8x8xf32>
    %234 = arith.mulf %232, %233 : vector<2x8x8xf32>
    %235 = vector.broadcast %42 : vector<2x1x8xf32> to vector<2x8x8xf32>
    %236 = arith.addf %234, %235 : vector<2x8x8xf32>
    %cst_105 = arith.constant dense<0xFF800000> : vector<2x8xf32>
    %237 = vector.multi_reduction <maximumf>, %236, %cst_105 [2] : vector<2x8x8xf32> to vector<2x8xf32>
    %238 = vector.shape_cast %237 : vector<2x8xf32> to vector<2x8x1xf32>
    %239 = vector.broadcast %238 : vector<2x8x1xf32> to vector<2x8x8xf32>
    %240 = arith.subf %236, %239 : vector<2x8x8xf32>
    %241 = math.exp %240 : vector<2x8x8xf32>
    %cst_106 = arith.constant dense<0.000000e+00> : vector<2x8xf32>
    %242 = vector.multi_reduction <add>, %241, %cst_106 [2] : vector<2x8x8xf32> to vector<2x8xf32>
    %243 = vector.shape_cast %242 : vector<2x8xf32> to vector<2x8x1xf32>
    %244 = tpu.reciprocal %243 {approx = true} : vector<2x8x1xf32> -> vector<2x8x1xf32>
    %245 = vector.broadcast %244 : vector<2x8x1xf32> to vector<2x8x8xf32>
    %246 = arith.mulf %241, %245 : vector<2x8x8xf32>
    "tpu.trace_start"() <{level = 10 : i32, message = "bqk,bkd->bqd"}> : () -> ()
    %cst_107 = arith.constant dense<0.000000e+00> : vector<2x8x16xf32>
    %247 = tpu.matmul %246, %231, %cst_107 {dimension_numbers = #tpu.dot_dimension_numbers<[2], [1], [1], [2], [0, 0, 0, 1, 1, 2], [0], [0]>} : vector<2x8x8xf32>, vector<2x8x16xf32>, vector<2x8x16xf32> -> vector<2x8x16xf32>
    "tpu.trace_stop"() : () -> ()
    %248 = vector.shape_cast %247 : vector<2x8x16xf32> to vector<16x16xf32>
    %249 = vector.extract_strided_slice %204 {offsets = [16, 0], sizes = [16, 32], strides = [1, 1]} : vector<32x32xf32> to vector<16x32xf32>
    %cst_108 = arith.constant dense<0.000000e+00> : vector<16x32xf32>
    %250 = tpu.matmul %248, %249, %cst_108 {dimension_numbers = #tpu.dot_dimension_numbers<[1], [0], [0], [1], [0, 0, 1, 1], [], []>} : vector<16x16xf32>, vector<16x32xf32>, vector<16x32xf32> -> vector<16x32xf32>
    %251 = arith.addf %228, %250 : vector<16x32xf32>
    %c1_109 = arith.constant 1 : index
    %c0_110 = arith.constant 0 : index
    %c0_111 = arith.constant 0 : index
    %252 = vector.load %arg10[%c1_109, %c0_110, %c0_111] : memref<2x1x32xf32, #tpu.memory_space<vmem>>, vector<1x1x32xf32>
    %253 = vector.shape_cast %252 : vector<1x1x32xf32> to vector<1x32xf32>
    %254 = vector.broadcast %253 : vector<1x32xf32> to vector<16x32xf32>
    %255 = arith.addf %251, %254 : vector<16x32xf32>
    %256 = arith.addf %189, %255 : vector<16x32xf32>
    %c1_112 = arith.constant 1 : index
    %c0_113 = arith.constant 0 : index
    %c0_114 = arith.constant 0 : index
    %257 = vector.load %arg11[%c1_112, %c0_113, %c0_114] : memref<2x1x32xf32, #tpu.memory_space<vmem>>, vector<1x1x32xf32>
    %258 = vector.shape_cast %257 : vector<1x1x32xf32> to vector<1x32xf32>
    %c1_115 = arith.constant 1 : index
    %c0_116 = arith.constant 0 : index
    %c0_117 = arith.constant 0 : index
    %259 = vector.load %arg12[%c1_115, %c0_116, %c0_117] : memref<2x1x32xf32, #tpu.memory_space<vmem>>, vector<1x1x32xf32>
    %260 = vector.shape_cast %259 : vector<1x1x32xf32> to vector<1x32xf32>
    %cst_118 = arith.constant dense<0.000000e+00> : vector<16xf32>
    %261 = vector.multi_reduction <add>, %256, %cst_118 [1] : vector<16x32xf32> to vector<16xf32>
    %262 = vector.shape_cast %261 : vector<16xf32> to vector<16x1xf32>
    %cst_119 = arith.constant 3.200000e+01 : f32
    %263 = vector.broadcast %cst_119 : f32 to vector<16x1xf32>
    %264 = arith.divf %262, %263 : vector<16x1xf32>
    %265 = vector.broadcast %264 : vector<16x1xf32> to vector<16x32xf32>
    %266 = arith.subf %256, %265 : vector<16x32xf32>
    %267 = arith.mulf %266, %266 : vector<16x32xf32>
    %cst_120 = arith.constant dense<0.000000e+00> : vector<16xf32>
    %268 = vector.multi_reduction <add>, %267, %cst_120 [1] : vector<16x32xf32> to vector<16xf32>
    %269 = vector.shape_cast %268 : vector<16xf32> to vector<16x1xf32>
    %cst_121 = arith.constant 3.200000e+01 : f32
    %270 = vector.broadcast %cst_121 : f32 to vector<16x1xf32>
    %271 = arith.divf %269, %270 : vector<16x1xf32>
    %272 = vector.broadcast %264 : vector<16x1xf32> to vector<16x32xf32>
    %273 = arith.subf %256, %272 : vector<16x32xf32>
    %cst_122 = arith.constant 9.99999996E-13 : f32
    %274 = vector.broadcast %cst_122 : f32 to vector<16x1xf32>
    %275 = arith.addf %271, %274 : vector<16x1xf32>
    %276 = math.rsqrt %275 : vector<16x1xf32>
    %277 = vector.broadcast %276 : vector<16x1xf32> to vector<16x32xf32>
    %278 = arith.mulf %273, %277 : vector<16x32xf32>
    %279 = vector.broadcast %258 : vector<1x32xf32> to vector<16x32xf32>
    %280 = arith.mulf %278, %279 : vector<16x32xf32>
    %281 = vector.broadcast %260 : vector<1x32xf32> to vector<16x32xf32>
    %282 = arith.addf %280, %281 : vector<16x32xf32>
    %c1_123 = arith.constant 1 : index
    %c0_124 = arith.constant 0 : index
    %c0_125 = arith.constant 0 : index
    %283 = vector.load %arg13[%c1_123, %c0_124, %c0_125] : memref<2x32x64xf32, #tpu.memory_space<vmem>>, vector<1x32x64xf32>
    %284 = vector.shape_cast %283 : vector<1x32x64xf32> to vector<32x64xf32>
    %cst_126 = arith.constant dense<0.000000e+00> : vector<16x64xf32>
    %285 = tpu.matmul %282, %284, %cst_126 {dimension_numbers = #tpu.dot_dimension_numbers<[1], [0], [0], [1], [0, 0, 1, 1], [], []>} : vector<16x32xf32>, vector<32x64xf32>, vector<16x64xf32> -> vector<16x64xf32>
    %c1_127 = arith.constant 1 : index
    %c0_128 = arith.constant 0 : index
    %c0_129 = arith.constant 0 : index
    %286 = vector.load %arg14[%c1_127, %c0_128, %c0_129] : memref<2x1x64xf32, #tpu.memory_space<vmem>>, vector<1x1x64xf32>
    %287 = vector.shape_cast %286 : vector<1x1x64xf32> to vector<1x64xf32>
    %288 = vector.broadcast %287 : vector<1x64xf32> to vector<16x64xf32>
    %289 = arith.addf %285, %288 : vector<16x64xf32>
    %cst_130 = arith.constant 5.000000e-01 : f32
    %290 = vector.broadcast %cst_130 : f32 to vector<16x64xf32>
    %291 = arith.mulf %290, %289 : vector<16x64xf32>
    %cst_131 = arith.constant 4.471500e-02 : f32
    %292 = vector.broadcast %cst_131 : f32 to vector<16x64xf32>
    %293 = arith.mulf %292, %289 : vector<16x64xf32>
    %294 = arith.mulf %293, %289 : vector<16x64xf32>
    %295 = arith.mulf %294, %289 : vector<16x64xf32>
    %296 = arith.addf %289, %295 : vector<16x64xf32>
    %cst_132 = arith.constant 0.797884583 : f32
    %297 = vector.broadcast %cst_132 : f32 to vector<16x64xf32>
    %298 = arith.mulf %297, %296 : vector<16x64xf32>
    %299 = math.tanh %298 : vector<16x64xf32>
    %cst_133 = arith.constant 1.000000e+00 : f32
    %300 = vector.broadcast %cst_133 : f32 to vector<16x64xf32>
    %301 = arith.addf %300, %299 : vector<16x64xf32>
    %302 = arith.mulf %291, %301 : vector<16x64xf32>
    %c1_134 = arith.constant 1 : index
    %c0_135 = arith.constant 0 : index
    %c0_136 = arith.constant 0 : index
    %303 = vector.load %arg15[%c1_134, %c0_135, %c0_136] : memref<2x64x32xf32, #tpu.memory_space<vmem>>, vector<1x64x32xf32>
    %304 = vector.shape_cast %303 : vector<1x64x32xf32> to vector<64x32xf32>
    %cst_137 = arith.constant dense<0.000000e+00> : vector<16x32xf32>
    %305 = tpu.matmul %302, %304, %cst_137 {dimension_numbers = #tpu.dot_dimension_numbers<[1], [0], [0], [1], [0, 0, 1, 1], [], []>} : vector<16x64xf32>, vector<64x32xf32>, vector<16x32xf32> -> vector<16x32xf32>
    %c1_138 = arith.constant 1 : index
    %c0_139 = arith.constant 0 : index
    %c0_140 = arith.constant 0 : index
    %306 = vector.load %arg16[%c1_138, %c0_139, %c0_140] : memref<2x1x32xf32, #tpu.memory_space<vmem>>, vector<1x1x32xf32>
    %307 = vector.shape_cast %306 : vector<1x1x32xf32> to vector<1x32xf32>
    %308 = vector.broadcast %307 : vector<1x32xf32> to vector<16x32xf32>
    %309 = arith.addf %305, %308 : vector<16x32xf32>
    %310 = arith.addf %282, %309 : vector<16x32xf32>
    %c1_141 = arith.constant 1 : index
    %c0_142 = arith.constant 0 : index
    %c0_143 = arith.constant 0 : index
    %311 = vector.load %arg17[%c1_141, %c0_142, %c0_143] : memref<2x1x32xf32, #tpu.memory_space<vmem>>, vector<1x1x32xf32>
    %312 = vector.shape_cast %311 : vector<1x1x32xf32> to vector<1x32xf32>
    %c1_144 = arith.constant 1 : index
    %c0_145 = arith.constant 0 : index
    %c0_146 = arith.constant 0 : index
    %313 = vector.load %arg18[%c1_144, %c0_145, %c0_146] : memref<2x1x32xf32, #tpu.memory_space<vmem>>, vector<1x1x32xf32>
    %314 = vector.shape_cast %313 : vector<1x1x32xf32> to vector<1x32xf32>
    %cst_147 = arith.constant dense<0.000000e+00> : vector<16xf32>
    %315 = vector.multi_reduction <add>, %310, %cst_147 [1] : vector<16x32xf32> to vector<16xf32>
    %316 = vector.shape_cast %315 : vector<16xf32> to vector<16x1xf32>
    %cst_148 = arith.constant 3.200000e+01 : f32
    %317 = vector.broadcast %cst_148 : f32 to vector<16x1xf32>
    %318 = arith.divf %316, %317 : vector<16x1xf32>
    %319 = vector.broadcast %318 : vector<16x1xf32> to vector<16x32xf32>
    %320 = arith.subf %310, %319 : vector<16x32xf32>
    %321 = arith.mulf %320, %320 : vector<16x32xf32>
    %cst_149 = arith.constant dense<0.000000e+00> : vector<16xf32>
    %322 = vector.multi_reduction <add>, %321, %cst_149 [1] : vector<16x32xf32> to vector<16xf32>
    %323 = vector.shape_cast %322 : vector<16xf32> to vector<16x1xf32>
    %cst_150 = arith.constant 3.200000e+01 : f32
    %324 = vector.broadcast %cst_150 : f32 to vector<16x1xf32>
    %325 = arith.divf %323, %324 : vector<16x1xf32>
    %326 = vector.broadcast %318 : vector<16x1xf32> to vector<16x32xf32>
    %327 = arith.subf %310, %326 : vector<16x32xf32>
    %cst_151 = arith.constant 9.99999996E-13 : f32
    %328 = vector.broadcast %cst_151 : f32 to vector<16x1xf32>
    %329 = arith.addf %325, %328 : vector<16x1xf32>
    %330 = math.rsqrt %329 : vector<16x1xf32>
    %331 = vector.broadcast %330 : vector<16x1xf32> to vector<16x32xf32>
    %332 = arith.mulf %327, %331 : vector<16x32xf32>
    %333 = vector.broadcast %312 : vector<1x32xf32> to vector<16x32xf32>
    %334 = arith.mulf %332, %333 : vector<16x32xf32>
    %335 = vector.broadcast %314 : vector<1x32xf32> to vector<16x32xf32>
    %336 = arith.addf %334, %335 : vector<16x32xf32>
    %337 = vector.extract_strided_slice %336 {offsets = [0, 0], sizes = [1, 32], strides = [1, 1]} : vector<16x32xf32> to vector<1x32xf32>
    %338 = vector.extract_strided_slice %336 {offsets = [8, 0], sizes = [1, 32], strides = [1, 1]} : vector<16x32xf32> to vector<1x32xf32>
    %339 = tpu.concatenate %337, %338 in 0 : vector<1x32xf32>, vector<1x32xf32> -> vector<2x32xf32>
    %c0_152 = arith.constant 0 : index
    %c0_153 = arith.constant 0 : index
    %340 = vector.load %arg19[%c0_152, %c0_153] : memref<32x4xf32, #tpu.memory_space<vmem>>, vector<32x4xf32>
    %cst_154 = arith.constant dense<0.000000e+00> : vector<2x4xf32>
    %341 = tpu.matmul %339, %340, %cst_154 {dimension_numbers = #tpu.dot_dimension_numbers<[1], [0], [0], [1], [0, 0, 1, 1], [], []>} : vector<2x32xf32>, vector<32x4xf32>, vector<2x4xf32> -> vector<2x4xf32>
    %c0_155 = arith.constant 0 : index
    %c0_156 = arith.constant 0 : index
    %342 = vector.load %arg20[%c0_155, %c0_156] : memref<1x4xf32, #tpu.memory_space<vmem>>, vector<1x4xf32>
    %343 = vector.broadcast %342 : vector<1x4xf32> to vector<2x4xf32>
    %344 = arith.addf %341, %343 : vector<2x4xf32>
    %c0_157 = arith.constant 0 : index
    %c0_158 = arith.constant 0 : index
    %345 = vector.load %arg21[%c0_157, %c0_158] : memref<2x4xf32, #tpu.memory_space<vmem>>, vector<2x4xf32>
    tpu.vector_store %arg21[%c0_157, %c0_158], %344 {strides = array<i32>} : memref<2x4xf32, #tpu.memory_space<vmem>>, vector<2x4xf32>,
    return
  }
}

</mosaic_0001>

<llo_original>
// kernel: _forward.1
$region0: #{_forward.1}
  #allocation0 [shape = 'u32[]', space=smem, size = 0x4, offset = 0x4, fixed_abs, tag = 'smem constant byte address 0x4 - core index']
  #allocation1 [shape = 'u32[144,128]{1,0:T(1,128)}', space=vmem, size = 0x12000, scoped, tag = 'internal scratch']
  %s0 = inlined_call_operand.vmem [shape: s32[16,1], index: 0, kind: input, shape index: {}]
  %s1 = inlined_call_operand.vmem [shape: f32[2,1,8], index: 1, kind: input, shape index: {}]
  %s2 = inlined_call_operand.vmem [shape: f32[64,32], index: 2, kind: input, shape index: {}]
  %s3 = inlined_call_operand.vmem [shape: f32[8,32], index: 3, kind: input, shape index: {}]
  %s4 = inlined_call_operand.vmem [shape: f32[2,32], index: 4, kind: input, shape index: {}]
  %s5 = inlined_call_operand.vmem [shape: f32[1,32], index: 5, kind: input, shape index: {}]
  %s6 = inlined_call_operand.vmem [shape: f32[1,32], index: 6, kind: input, shape index: {}]
  %s7 = inlined_call_operand.vmem [shape: f32[2,32,96], index: 7, kind: input, shape index: {}]
  %s8 = inlined_call_operand.vmem [shape: f32[2,1,96], index: 8, kind: input, shape index: {}]
  %s9 = inlined_call_operand.vmem [shape: f32[2,32,32], index: 9, kind: input, shape index: {}]
  %s10 = inlined_call_operand.vmem [shape: f32[2,1,32], index: 10, kind: input, shape index: {}]
  %s11 = inlined_call_operand.vmem [shape: f32[2,1,32], index: 11, kind: input, shape index: {}]
  %s12 = inlined_call_operand.vmem [shape: f32[2,1,32], index: 12, kind: input, shape index: {}]
  %s13 = inlined_call_operand.vmem [shape: f32[2,32,64], index: 13, kind: input, shape index: {}]
  %s14 = inlined_call_operand.vmem [shape: f32[2,1,64], index: 14, kind: input, shape index: {}]
  %s15 = inlined_call_operand.vmem [shape: f32[2,64,32], index: 15, kind: input, shape index: {}]
  %s16 = inlined_call_operand.vmem [shape: f32[2,1,32], index: 16, kind: input, shape index: {}]
  %s17 = inlined_call_operand.vmem [shape: f32[2,1,32], index: 17, kind: input, shape index: {}]
  %s18 = inlined_call_operand.vmem [shape: f32[2,1,32], index: 18, kind: input, shape index: {}]
  %s19 = inlined_call_operand.vmem [shape: f32[32,4], index: 19, kind: input, shape index: {}]
  %s20 = inlined_call_operand.vmem [shape: f32[1,4], index: 20, kind: input, shape index: {}]
  %s21 = inlined_call_operand.vmem [shape: f32[2,4], index: 21, kind: output, shape index: {}]
  %s22 = sld [smem:[#allocation0]]
  $region94: #{_forward.1} parent=0
    _
  %s24 = ssub.s32 1, %s22
  %s25 = scalar_select 0, %s24, %s22
  // Predicated region
  $region2: #{_forward.1} parent=0 // pred_check
    _
  $region3: #{_forward.1} parent=0 // pred_check_branch
    %27 = sbr.rel (0) target = $region5
  $region4: #{_forward.1} parent=0 // pred_region
    _
  $region5: #{_forward.1} parent=0 // pred_fallthru
    _
  // Predicated region
  $region6: #{_forward.1} parent=0 // pred_check
    _
  $region7: #{_forward.1} parent=0 // pred_check_branch
    %29 = sbr.rel (0) target = $region9
  $region8: #{_forward.1} parent=0 // pred_region
    _
  $region9: #{_forward.1} parent=0 // pred_fallthru
    _
  // Predicated region
  $region10: #{_forward.1} parent=0 // pred_check
    _
  $region11: #{_forward.1} parent=0 // pred_check_branch
    %31 = sbr.rel (0) target = $region13
  $region12: #{_forward.1} parent=0 // pred_region
    _
  $region13: #{_forward.1} parent=0 // pred_fallthru
    _
  // Predicated region
  $region14: #{_forward.1} parent=0 // pred_check
    _
  $region15: #{_forward.1} parent=0 // pred_check_branch
    %33 = sbr.rel (0) target = $region17
  $region16: #{_forward.1} parent=0 // pred_region
    _
  $region17: #{_forward.1} parent=0 // pred_fallthru
    _
  // Predicated region
  $region18: #{_forward.1} parent=0 // pred_check
    _
  $region19: #{_forward.1} parent=0 // pred_check_branch
    %35 = sbr.rel (0) target = $region21
  $region20: #{_forward.1} parent=0 // pred_region
    _
  $region21: #{_forward.1} parent=0 // pred_fallthru
    _
  // Predicated region
  $region22: #{_forward.1} parent=0 // pred_check
    _
  $region23: #{_forward.1} parent=0 // pred_check_branch
    %37 = sbr.rel (0) target = $region25
  $region24: #{_forward.1} parent=0 // pred_region
    _
  $region25: #{_forward.1} parent=0 // pred_fallthru
    _
  // Predicated region
  $region26: #{_forward.1} parent=0 // pred_check
    _
  $region27: #{_forward.1} parent=0 // pred_check_branch
    %39 = sbr.rel (0) target = $region29
  $region28: #{_forward.1} parent=0 // pred_region
    _
  $region29: #{_forward.1} parent=0 // pred_fallthru
    _
  // Predicated region
  $region30: #{_forward.1} parent=0 // pred_check
    _
  $region31: #{_forward.1} parent=0 // pred_check_branch
    %41 = sbr.rel (0) target = $region33
  $region32: #{_forward.1} parent=0 // pred_region
    _
  $region33: #{_forward.1} parent=0 // pred_fallthru
    _
  // Predicated region
  $region34: #{_forward.1} parent=0 // pred_check
    _
  $region35: #{_forward.1} parent=0 // pred_check_branch
    %43 = sbr.rel (0) target = $region37
  $region36: #{_forward.1} parent=0 // pred_region
    _
  $region37: #{_forward.1} parent=0 // pred_fallthru
    _
  // Predicated region
  $region38: #{_forward.1} parent=0 // pred_check
    _
  $region39: #{_forward.1} parent=0 // pred_check_branch
    %45 = sbr.rel (0) target = $region41
  $region40: #{_forward.1} parent=0 // pred_region
    _
  $region41: #{_forward.1} parent=0 // pred_fallthru
    _
  // Predicated region
  $region42: #{_forward.1} parent=0 // pred_check
    _
  $region43: #{_forward.1} parent=0 // pred_check_branch
    %47 = sbr.rel (0) target = $region45
  $region44: #{_forward.1} parent=0 // pred_region
    _
  $region45: #{_forward.1} parent=0 // pred_fallthru
    _
  // Predicated region
  $region46: #{_forward.1} parent=0 // pred_check
    _
  $region47: #{_forward.1} parent=0 // pred_check_branch
    %49 = sbr.rel (0) target = $region49
  $region48: #{_forward.1} parent=0 // pred_region
    _
  $region49: #{_forward.1} parent=0 // pred_fallthru
    _
  // Predicated region
  $region50: #{_forward.1} parent=0 // pred_check
    _
  $region51: #{_forward.1} parent=0 // pred_check_branch
    %51 = sbr.rel (0) target = $region53
  $region52: #{_forward.1} parent=0 // pred_region
    _
  $region53: #{_forward.1} parent=0 // pred_fallthru
    _
  // Predicated region
  $region54: #{_forward.1} parent=0 // pred_check
    _
  $region55: #{_forward.1} parent=0 // pred_check_branch
    %53 = sbr.rel (0) target = $region57
  $region56: #{_forward.1} parent=0 // pred_region
    _
  $region57: #{_forward.1} parent=0 // pred_fallthru
    _
  // Predicated region
  $region58: #{_forward.1} parent=0 // pred_check
    _
  $region59: #{_forward.1} parent=0 // pred_check_branch
    %55 = sbr.rel (0) target = $region61
  $region60: #{_forward.1} parent=0 // pred_region
    _
  $region61: #{_forward.1} parent=0 // pred_fallthru
    _
  // Predicated region
  $region62: #{_forward.1} parent=0 // pred_check
    _
  $region63: #{_forward.1} parent=0 // pred_check_branch
    %57 = sbr.rel (0) target = $region65
  $region64: #{_forward.1} parent=0 // pred_region
    _
  $region65: #{_forward.1} parent=0 // pred_fallthru
    _
  // Predicated region
  $region66: #{_forward.1} parent=0 // pred_check
    _
  $region67: #{_forward.1} parent=0 // pred_check_branch
    %59 = sbr.rel (0) target = $region69
  $region68: #{_forward.1} parent=0 // pred_region
    _
  $region69: #{_forward.1} parent=0 // pred_fallthru
    _
  // Predicated region
  $region70: #{_forward.1} parent=0 // pred_check
    _
  $region71: #{_forward.1} parent=0 // pred_check_branch
    %61 = sbr.rel (0) target = $region73
  $region72: #{_forward.1} parent=0 // pred_region
    _
  $region73: #{_forward.1} parent=0 // pred_fallthru
    _
  // Predicated region
  $region74: #{_forward.1} parent=0 // pred_check
    _
  $region75: #{_forward.1} parent=0 // pred_check_branch
    %63 = sbr.rel (0) target = $region77
  $region76: #{_forward.1} parent=0 // pred_region
    _
  $region77: #{_forward.1} parent=0 // pred_fallthru
    _
  // Predicated region
  $region78: #{_forward.1} parent=0 // pred_check
    _
  $region79: #{_forward.1} parent=0 // pred_check_branch
    %65 = sbr.rel (0) target = $region81
  $region80: #{_forward.1} parent=0 // pred_region
    _
  $region81: #{_forward.1} parent=0 // pred_fallthru
    _
  // Predicated region
  $region82: #{_forward.1} parent=0 // pred_check
    _
  $region83: #{_forward.1} parent=0 // pred_check_branch
    %67 = sbr.rel (0) target = $region85
  $region84: #{_forward.1} parent=0 // pred_region
    _
  $region85: #{_forward.1} parent=0 // pred_fallthru
    _
  %v68 = vlaneseq
  %v69 = vand.u32 %v68, 127
  %v70 = vld [vmem:[%s0] sm:$0xff]
  %v71 = vld [vmem:[%s0 + $0x8] sm:$0xff]
  %72 = vset.pattern.permute.xlu0 0
  %73 = vperm.xlu0 %72, %v70
  %v74 = vpop.permute.xlu0 %73
  %75 = vset.pattern.permute.xlu0 0
  %76 = vperm.xlu0 %75, %v71
  %v77 = vpop.permute.xlu0 %76
  %vm78 = vcmp.eq.s32.totalorder %v74, %v69
  %vm79 = vcmp.eq.s32.totalorder %v77, %v69
  %v80 = vsel %vm78, 1, 0
  %v81 = vsel %vm79, 1, 0
  %v82 = vcvt.s32.f32 %v80
  %v83 = vcvt.s32.f32 %v81
  %v84 = vld [vmem:[%s2] sm:$0xff]
  %v85 = vld [vmem:[%s2 + $0x8] sm:$0xff]
  %v86 = vld [vmem:[%s2 + $0x10] sm:$0xff]
  %v87 = vld [vmem:[%s2 + $0x18] sm:$0xff]
  %v88 = vld [vmem:[%s2 + $0x20] sm:$0xff]
  %v89 = vld [vmem:[%s2 + $0x28] sm:$0xff]
  %v90 = vld [vmem:[%s2 + $0x30] sm:$0xff]
  %v91 = vld [vmem:[%s2 + $0x38] sm:$0xff]
  %v92 = vld [vmem:[%s3] sm:$0xff]
  %vm93 = vcmask 523264
  %v95 = vsel %vm93, %v82, 0
  %v98 = vsel %vm93, %v83, 0
  %100 = vmatprep.subr.mxu0 0.0
  %101 = vmatpush1.msra.mxu0 %v84
  %102 = vmatprep.subr.mxu0 0.0
  %103 = vmatpush1.msra.mxu0 %v85
  %104 = vmatprep.subr.mxu0 0.0
  %105 = vmatpush1.msra.mxu0 %v86
  %106 = vmatprep.subr.mxu0 0.0
  %107 = vmatpush1.msra.mxu0 %v87
  %108 = vmatprep.subr.mxu0 0.0
  %109 = vmatpush1.msra.mxu0 %v88
  %110 = vmatprep.subr.mxu0 0.0
  %111 = vmatpush1.msra.mxu0 %v89
  %112 = vmatprep.subr.mxu0 0.0
  %113 = vmatpush1.msra.mxu0 %v90
  %114 = vmatprep.subr.mxu0 0.0
  %115 = vmatpush1.msra.mxu0 %v91
  %116 = vmatprep.subr.mxu0 0.0
  %117 = vmatpush1.msra.mxu0 0.0
  %118 = vmatprep.subr.mxu0 0.0
  %119 = vmatpush1.msra.mxu0 0.0
  %120 = vmatprep.subr.mxu0 0.0
  %121 = vmatpush1.msra.mxu0 0.0
  %122 = vmatprep.subr.mxu0 0.0
  %123 = vmatpush1.msra.mxu0 0.0
  %124 = vmatprep.subr.mxu0 0.0
  %125 = vmatpush1.msra.mxu0 0.0
  %126 = vmatprep.subr.mxu0 0.0
  %127 = vmatpush1.msra.mxu0 0.0
  %128 = vmatprep.subr.mxu0 0.0
  %129 = vmatpush1.msra.mxu0 0.0
  %130 = vmatprep.subr.mxu0 0.0
  %131 = vmatpush1.msra.mxu0 0.0
  %132 = vmatprep.subr.mxu0 0.0
  %133 = vmatpush1.msra.mxu0 0.0
  %134 = vmatprep.subr.mxu0 0.0
  %135 = vmatpush1.msra.mxu0 0.0
  %136 = vmatprep.subr.mxu0 0.0
  %137 = vmatpush1.msra.mxu0 0.0
  %138 = vmatprep.subr.mxu0 0.0
  %139 = vmatpush1.msra.mxu0 0.0
  %140 = vmatprep.subr.mxu0 0.0
  %141 = vmatpush1.msra.mxu0 0.0
  %142 = vmatprep.subr.mxu0 0.0
  %143 = vmatpush1.msra.mxu0 0.0
  %144 = vmatprep.subr.mxu0 0.0
  %145 = vmatpush1.msra.mxu0 0.0
  %146 = vmatprep.subr.mxu0 0.0
  %147 = vmatpush1.msra.mxu0 0.0
  %148 = vmatprep.subr.mxu0 0.0
  %149 = vmatpush1.msra.mxu0 0.0
  %150 = vmatprep.subr.mxu0 0.0
  %151 = vmatpush1.msra.mxu0 0.0
  %152 = vmatprep.subr.mxu0 0.0
  %153 = vmatpush1.msra.mxu0 0.0
  %154 = vmatprep.subr.mxu0 0.0
  %155 = vmatpush1.msra.mxu0 0.0
  %156 = vmatprep.subr.mxu0 0.0
  %157 = vmatpush1.msra.mxu0 0.0
  %158 = vmatprep.subr.mxu0 0.0
  %159 = vmatpush1.msra.mxu0 0.0
  %160 = vmatprep.subr.mxu0 0.0
  %161 = vmatpush1.msra.mxu0 0.0
  %162 = vmatprep.subr.mxu0 0.0
  %163 = vmatpush1.msra.mxu0 0.0
  %164 = vmatprep.mubr.f32.mxu0 0.0
  %165 = vmatmul.mubr.f32.gmra.mrb[0].mxu0 %v95
  %v166 = vpop.f32.mrb[0].mxu0
  %v167 = vadd.f32 %v92, %v166
  %v168 = vpop.f32.mrb[0].mxu0
  %169 = vmatprep.mubr.f32.mxu0 0.0
  %170 = vmatmul.mubr.f32.gmra.mrb[0].mxu0 %v98
  %v171 = vpop.f32.mrb[0].mxu0
  %v172 = vadd.f32 %v92, %v171
  %v173 = vpop.f32.mrb[0].mxu0
  %174 = vdwg.mxu0
  %v175 = vld [vmem:[%s4] sm:$0x1]
  %v176 = vlaneseq
  %v177 = vshrl.u32 %v176, 7
  %v178 = vsub.s32 0, %v177
  %v179 = vrot.slane %v175, %v178
  %v180 = vadd.f32 %v167, %v179
  %v181 = vadd.f32 %v172, %v179
  %v182 = vld [vmem:[%s5] sm:$0x1]
  %v183 = vld [vmem:[%s6] sm:$0x1]
  %vm184 = vcmask 261120
  %v185 = vsel %vm184, %v180, 0.0
  %186 = vadd.xlane.f32.xlu0 %v185
  %v187 = vpop.xlane.xlu0 %186
  %v188 = vsel %vm184, %v181, 0.0
  %189 = vadd.xlane.f32.xlu0 %v188
  %v190 = vpop.xlane.xlu0 %189
  %v191 = vrcp.pop 32.0
  %v192 = vmul.f32 %v187, %v191
  %v193 = vmul.f32 %v190, %v191
  %v194 = vsub.f32 %v180, %v192
  %v195 = vsub.f32 %v181, %v193
  %v196 = vmul.f32 %v194, %v194
  %v197 = vmul.f32 %v195, %v195
  %v198 = vsel %vm184, %v196, 0.0
  %199 = vadd.xlane.f32.xlu0 %v198
  %v200 = vpop.xlane.xlu0 %199
  %v201 = vsel %vm184, %v197, 0.0
  %202 = vadd.xlane.f32.xlu0 %v201
  %v203 = vpop.xlane.xlu0 %202
  %v204 = vmul.f32 %v200, %v191
  %v205 = vmul.f32 %v203, %v191
  %v206 = vadd.f32 %v204, 1e-12
  %v207 = vadd.f32 %v205, 1e-12
  %v208 = vrsqrt.pop %v206
  %v209 = vrsqrt.pop %v207
  %v210 = vmul.f32 %v194, %v208
  %v211 = vmul.f32 %v195, %v209
  %v213 = vlaneseq
  %v214 = vshrl.u32 %v213, 7
  %v215 = vsub.s32 0, %v214
  %v216 = vrot.slane %v182, %v215
  %v218 = vmul.f32 %v210, %v216
  %v219 = vmul.f32 %v211, %v216
  %v221 = vlaneseq
  %v222 = vshrl.u32 %v221, 7
  %v223 = vsub.s32 0, %v222
  %v224 = vrot.slane %v183, %v223
  %v226 = vadd.f32 %v218, %v224
  %v227 = vadd.f32 %v219, %v224
  %v228 = vld [vmem:[%s1] sm:$0x1]
  %v229 = vld [vmem:[%s1 + $0x1] sm:$0x1]
  %v230 = vsub.f32 1.0, %v228
  %v231 = vsub.f32 1.0, %v229
  %v232 = vmul.f32 %v230, -1e+09
  %v233 = vmul.f32 %v231, -1e+09
  %v234 = vld [vmem:[%s7] sm:$0xff]
  %v235 = vld [vmem:[%s7 + $0x8] sm:$0xff]
  %v236 = vld [vmem:[%s7 + $0x10] sm:$0xff]
  %v237 = vld [vmem:[%s7 + $0x18] sm:$0xff]
  %v238 = vld [vmem:[%s8] sm:$0x1]
  %v240 = vlaneseq
  %v241 = vshrl.u32 %v240, 7
  %v242 = vsub.s32 0, %v241
  %v243 = vrot.slane %v238, %v242
  %v246 = vsel %vm184, %v226, 0
  %v249 = vsel %vm184, %v227, 0
  %251 = vmatprep.subr.mxu0 0.0
  %252 = vmatpush1.msra.mxu0 %v234
  %253 = vmatprep.subr.mxu0 0.0
  %254 = vmatpush1.msra.mxu0 %v235
  %255 = vmatprep.subr.mxu0 0.0
  %256 = vmatpush1.msra.mxu0 %v236
  %257 = vmatprep.subr.mxu0 0.0
  %258 = vmatpush1.msra.mxu0 %v237
  %259 = vmatprep.subr.mxu0 0.0
  %260 = vmatpush1.msra.mxu0 0.0
  %261 = vmatprep.subr.mxu0 0.0
  %262 = vmatpush1.msra.mxu0 0.0
  %263 = vmatprep.subr.mxu0 0.0
  %264 = vmatpush1.msra.mxu0 0.0
  %265 = vmatprep.subr.mxu0 0.0
  %266 = vmatpush1.msra.mxu0 0.0
  %267 = vmatprep.subr.mxu0 0.0
  %268 = vmatpush1.msra.mxu0 0.0
  %269 = vmatprep.subr.mxu0 0.0
  %270 = vmatpush1.msra.mxu0 0.0
  %271 = vmatprep.subr.mxu0 0.0
  %272 = vmatpush1.msra.mxu0 0.0
  %273 = vmatprep.subr.mxu0 0.0
  %274 = vmatpush1.msra.mxu0 0.0
  %275 = vmatprep.subr.mxu0 0.0
  %276 = vmatpush1.msra.mxu0 0.0
  %277 = vmatprep.subr.mxu0 0.0
  %278 = vmatpush1.msra.mxu0 0.0
  %279 = vmatprep.subr.mxu0 0.0
  %280 = vmatpush1.msra.mxu0 0.0
  %281 = vmatprep.subr.mxu0 0.0
  %282 = vmatpush1.msra.mxu0 0.0
  %283 = vmatprep.subr.mxu0 0.0
  %284 = vmatpush1.msra.mxu0 0.0
  %285 = vmatprep.subr.mxu0 0.0
  %286 = vmatpush1.msra.mxu0 0.0
  %287 = vmatprep.subr.mxu0 0.0
  %288 = vmatpush1.msra.mxu0 0.0
  %289 = vmatprep.subr.mxu0 0.0
  %290 = vmatpush1.msra.mxu0 0.0
  %291 = vmatprep.subr.mxu0 0.0
  %292 = vmatpush1.msra.mxu0 0.0
  %293 = vmatprep.subr.mxu0 0.0
  %294 = vmatpush1.msra.mxu0 0.0
  %295 = vmatprep.subr.mxu0 0.0
  %296 = vmatpush1.msra.mxu0 0.0
  %297 = vmatprep.subr.mxu0 0.0
  %298 = vmatpush1.msra.mxu0 0.0
  %299 = vmatprep.subr.mxu0 0.0
  %300 = vmatpush1.msra.mxu0 0.0
  %301 = vmatprep.subr.mxu0 0.0
  %302 = vmatpush1.msra.mxu0 0.0
  %303 = vmatprep.subr.mxu0 0.0
  %304 = vmatpush1.msra.mxu0 0.0
  %305 = vmatprep.subr.mxu0 0.0
  %306 = vmatpush1.msra.mxu0 0.0
  %307 = vmatprep.subr.mxu0 0.0
  %308 = vmatpush1.msra.mxu0 0.0
  %309 = vmatprep.subr.mxu0 0.0
  %310 = vmatpush1.msra.mxu0 0.0
  %311 = vmatprep.subr.mxu0 0.0
  %312 = vmatpush1.msra.mxu0 0.0
  %313 = vmatprep.subr.mxu0 0.0
  %314 = vmatpush1.msra.mxu0 0.0
  %315 = vmatprep.mubr.f32.mxu0 0.0
  %316 = vmatmul.mubr.f32.gmra.mrb[0].mxu0 %v246
  %v317 = vpop.f32.mrb[0].mxu0
  %v318 = vadd.f32 %v243, %v317
  %v319 = vpop.f32.mrb[0].mxu0
  %320 = vmatprep.mubr.f32.mxu0 0.0
  %321 = vmatmul.mubr.f32.gmra.mrb[0].mxu0 %v249
  %v322 = vpop.f32.mrb[0].mxu0
  %v323 = vadd.f32 %v243, %v322
  %v324 = vpop.f32.mrb[0].mxu0
  %325 = vdwg.mxu0
  %v326 = vld [vmem:[%s9] sm:$0xff]
  %v327 = vld [vmem:[%s9 + $0x8] sm:$0xff]
  %v328 = vld [vmem:[%s9 + $0x10] sm:$0xff]
  %v329 = vld [vmem:[%s9 + $0x18] sm:$0xff]
  %331 = vrot.lane.b32.xlu0 %v318, 96
  %v332 = vpop.permute.xlu0 %331
  %vm333 = vcmask 130048
  %v334 = vsel %vm333, %v318, 0
  %v336 = vsel %vm333, %v332, 0
  %338 = vmatprep.subr.mxu0 0.0
  %339 = vmatpush1.xpose.msra.mxu0 %v336
  %340 = vmatprep.subr.mxu0 0.0
  %341 = vmatpush1.xpose.msra.mxu0 0.0
  %342 = vmatprep.subr.mxu0 0.0
  %343 = vmatpush1.xpose.msra.mxu0 0.0
  %344 = vmatprep.subr.mxu0 0.0
  %345 = vmatpush1.xpose.msra.mxu0 0.0
  %346 = vmatprep.subr.mxu0 0.0
  %347 = vmatpush1.xpose.msra.mxu0 0.0
  %348 = vmatprep.subr.mxu0 0.0
  %349 = vmatpush1.xpose.msra.mxu0 0.0
  %350 = vmatprep.subr.mxu0 0.0
  %351 = vmatpush1.xpose.msra.mxu0 0.0
  %352 = vmatprep.subr.mxu0 0.0
  %353 = vmatpush1.xpose.msra.mxu0 0.0
  %354 = vmatprep.subr.mxu0 0.0
  %355 = vmatpush1.xpose.msra.mxu0 0.0
  %356 = vmatprep.subr.mxu0 0.0
  %357 = vmatpush1.xpose.msra.mxu0 0.0
  %358 = vmatprep.subr.mxu0 0.0
  %359 = vmatpush1.xpose.msra.mxu0 0.0
  %360 = vmatprep.subr.mxu0 0.0
  %361 = vmatpush1.xpose.msra.mxu0 0.0
  %362 = vmatprep.subr.mxu0 0.0
  %363 = vmatpush1.xpose.msra.mxu0 0.0
  %364 = vmatprep.subr.mxu0 0.0
  %365 = vmatpush1.xpose.msra.mxu0 0.0
  %366 = vmatprep.subr.mxu0 0.0
  %367 = vmatpush1.xpose.msra.mxu0 0.0
  %368 = vmatprep.subr.mxu0 0.0
  %369 = vmatpush1.xpose.msra.mxu0 0.0
  %370 = vmatprep.subr.mxu0 0.0
  %371 = vmatpush1.xpose.msra.mxu0 0.0
  %372 = vmatprep.subr.mxu0 0.0
  %373 = vmatpush1.xpose.msra.mxu0 0.0
  %374 = vmatprep.subr.mxu0 0.0
  %375 = vmatpush1.xpose.msra.mxu0 0.0
  %376 = vmatprep.subr.mxu0 0.0
  %377 = vmatpush1.xpose.msra.mxu0 0.0
  %378 = vmatprep.subr.mxu0 0.0
  %379 = vmatpush1.xpose.msra.mxu0 0.0
  %380 = vmatprep.subr.mxu0 0.0
  %381 = vmatpush1.xpose.msra.mxu0 0.0
  %382 = vmatprep.subr.mxu0 0.0
  %383 = vmatpush1.xpose.msra.mxu0 0.0
  %384 = vmatprep.subr.mxu0 0.0
  %385 = vmatpush1.xpose.msra.mxu0 0.0
  %386 = vmatprep.subr.mxu0 0.0
  %387 = vmatpush1.xpose.msra.mxu0 0.0
  %388 = vmatprep.subr.mxu0 0.0
  %389 = vmatpush1.xpose.msra.mxu0 0.0
  %390 = vmatprep.subr.mxu0 0.0
  %391 = vmatpush1.xpose.msra.mxu0 0.0
  %392 = vmatprep.subr.mxu0 0.0
  %393 = vmatpush1.xpose.msra.mxu0 0.0
  %394 = vmatprep.subr.mxu0 0.0
  %395 = vmatpush1.xpose.msra.mxu0 0.0
  %396 = vmatprep.subr.mxu0 0.0
  %397 = vmatpush1.xpose.msra.mxu0 0.0
  %398 = vmatprep.subr.mxu0 0.0
  %399 = vmatpush1.xpose.msra.mxu0 0.0
  %400 = vmatprep.subr.mxu0 0.0
  %401 = vmatpush1.xpose.msra.mxu0 0.0
  %402 = vmatprep.mubr.f32.mxu0 0.0
  %403 = vmatmul.mubr.f32.gmra.mrb[0].mxu0 %v334
  %v404 = vpop.f32.mrb[0].mxu0
  %v405 = vadd.f32 0.0, %v404
  %v406 = vpop.f32.mrb[0].mxu0
  %407 = vdwg.mxu0
  %409 = vrot.lane.b32.xlu0 %v323, 96
  %v410 = vpop.permute.xlu0 %409
  %v411 = vsel %vm333, %v323, 0
  %v413 = vsel %vm333, %v410, 0
  %415 = vmatprep.subr.mxu0 0.0
  %416 = vmatpush1.xpose.msra.mxu0 %v413
  %417 = vmatprep.subr.mxu0 0.0
  %418 = vmatpush1.xpose.msra.mxu0 0.0
  %419 = vmatprep.subr.mxu0 0.0
  %420 = vmatpush1.xpose.msra.mxu0 0.0
  %421 = vmatprep.subr.mxu0 0.0
  %422 = vmatpush1.xpose.msra.mxu0 0.0
  %423 = vmatprep.subr.mxu0 0.0
  %424 = vmatpush1.xpose.msra.mxu0 0.0
  %425 = vmatprep.subr.mxu0 0.0
  %426 = vmatpush1.xpose.msra.mxu0 0.0
  %427 = vmatprep.subr.mxu0 0.0
  %428 = vmatpush1.xpose.msra.mxu0 0.0
  %429 = vmatprep.subr.mxu0 0.0
  %430 = vmatpush1.xpose.msra.mxu0 0.0
  %431 = vmatprep.subr.mxu0 0.0
  %432 = vmatpush1.xpose.msra.mxu0 0.0
  %433 = vmatprep.subr.mxu0 0.0
  %434 = vmatpush1.xpose.msra.mxu0 0.0
  %435 = vmatprep.subr.mxu0 0.0
  %436 = vmatpush1.xpose.msra.mxu0 0.0
  %437 = vmatprep.subr.mxu0 0.0
  %438 = vmatpush1.xpose.msra.mxu0 0.0
  %439 = vmatprep.subr.mxu0 0.0
  %440 = vmatpush1.xpose.msra.mxu0 0.0
  %441 = vmatprep.subr.mxu0 0.0
  %442 = vmatpush1.xpose.msra.mxu0 0.0
  %443 = vmatprep.subr.mxu0 0.0
  %444 = vmatpush1.xpose.msra.mxu0 0.0
  %445 = vmatprep.subr.mxu0 0.0
  %446 = vmatpush1.xpose.msra.mxu0 0.0
  %447 = vmatprep.subr.mxu0 0.0
  %448 = vmatpush1.xpose.msra.mxu0 0.0
  %449 = vmatprep.subr.mxu0 0.0
  %450 = vmatpush1.xpose.msra.mxu0 0.0
  %451 = vmatprep.subr.mxu0 0.0
  %452 = vmatpush1.xpose.msra.mxu0 0.0
  %453 = vmatprep.subr.mxu0 0.0
  %454 = vmatpush1.xpose.msra.mxu0 0.0
  %455 = vmatprep.subr.mxu0 0.0
  %456 = vmatpush1.xpose.msra.mxu0 0.0
  %457 = vmatprep.subr.mxu0 0.0
  %458 = vmatpush1.xpose.msra.mxu0 0.0
  %459 = vmatprep.subr.mxu0 0.0
  %460 = vmatpush1.xpose.msra.mxu0 0.0
  %461 = vmatprep.subr.mxu0 0.0
  %462 = vmatpush1.xpose.msra.mxu0 0.0
  %463 = vmatprep.subr.mxu0 0.0
  %464 = vmatpush1.xpose.msra.mxu0 0.0
  %465 = vmatprep.subr.mxu0 0.0
  %466 = vmatpush1.xpose.msra.mxu0 0.0
  %467 = vmatprep.subr.mxu0 0.0
  %468 = vmatpush1.xpose.msra.mxu0 0.0
  %469 = vmatprep.subr.mxu0 0.0
  %470 = vmatpush1.xpose.msra.mxu0 0.0
  %471 = vmatprep.subr.mxu0 0.0
  %472 = vmatpush1.xpose.msra.mxu0 0.0
  %473 = vmatprep.subr.mxu0 0.0
  %474 = vmatpush1.xpose.msra.mxu0 0.0
  %475 = vmatprep.subr.mxu0 0.0
  %476 = vmatpush1.xpose.msra.mxu0 0.0
  %477 = vmatprep.subr.mxu0 0.0
  %478 = vmatpush1.xpose.msra.mxu0 0.0
  %479 = vmatprep.mubr.f32.mxu0 0.0
  %480 = vmatmul.mubr.f32.gmra.mrb[0].mxu0 %v411
  %v481 = vpop.f32.mrb[0].mxu0
  %v482 = vadd.f32 0.0, %v481
  %v483 = vpop.f32.mrb[0].mxu0
  %484 = vdwg.mxu0
  %v485 = vmul.f32 %v405, 0.25
  %v486 = vmul.f32 %v482, 0.25
  %v489 = vlaneseq
  %v490 = vshrl.u32 %v489, 7
  %v491 = vsub.s32 0, %v490
  %v492 = vrot.slane %v232, %v491
  %v493 = vlaneseq
  %v494 = vshrl.u32 %v493, 7
  %v495 = vsub.s32 0, %v494
  %v496 = vrot.slane %v233, %v495
  %v499 = vadd.f32 %v485, %v492
  %v500 = vadd.f32 %v486, %v496
  %vm501 = vcmask 64512
  %v502 = vsel %vm501, %v499, -inf
  %503 = vmax.xlane.f32.xlu0 %v502
  %v504 = vpop.xlane.xlu0 %503
  %v505 = vsel %vm501, %v500, -inf
  %506 = vmax.xlane.f32.xlu0 %v505
  %v507 = vpop.xlane.xlu0 %506
  %v508 = vsub.f32 %v499, %v504
  %v509 = vsub.f32 %v500, %v507
  %v510 = vmul.f32 %v508, 1.442695
  %v511 = vpow.pop %v510
  %v512 = vmul.f32 %v509, 1.442695
  %v513 = vpow.pop %v512
  %v514 = vsel %vm501, %v511, 0.0
  %515 = vadd.xlane.f32.xlu0 %v514
  %v516 = vpop.xlane.xlu0 %515
  %v517 = vsel %vm501, %v513, 0.0
  %518 = vadd.xlane.f32.xlu0 %v517
  %v519 = vpop.xlane.xlu0 %518
  %v520 = vrcp.pop %v516
  %v521 = vrcp.pop %v519
  %v522 = vmul.f32 %v511, %v520
  %v523 = vmul.f32 %v513, %v521
  %524 = vrot.lane.b32.xlu0 %v318, 64
  %v525 = vpop.permute.xlu0 %524
  %v528 = vsel %vm501, %v522, 0
  %530 = vmatprep.subr.mxu0 0.0
  %531 = vmatpush1.msra.mxu0 %v525
  %532 = vmatprep.subr.mxu0 0.0
  %533 = vmatpush1.msra.mxu0 0.0
  %534 = vmatprep.subr.mxu0 0.0
  %535 = vmatpush1.msra.mxu0 0.0
  %536 = vmatprep.subr.mxu0 0.0
  %537 = vmatpush1.msra.mxu0 0.0
  %538 = vmatprep.subr.mxu0 0.0
  %539 = vmatpush1.msra.mxu0 0.0
  %540 = vmatprep.subr.mxu0 0.0
  %541 = vmatpush1.msra.mxu0 0.0
  %542 = vmatprep.subr.mxu0 0.0
  %543 = vmatpush1.msra.mxu0 0.0
  %544 = vmatprep.subr.mxu0 0.0
  %545 = vmatpush1.msra.mxu0 0.0
  %546 = vmatprep.subr.mxu0 0.0
  %547 = vmatpush1.msra.mxu0 0.0
  %548 = vmatprep.subr.mxu0 0.0
  %549 = vmatpush1.msra.mxu0 0.0
  %550 = vmatprep.subr.mxu0 0.0
  %551 = vmatpush1.msra.mxu0 0.0
  %552 = vmatprep.subr.mxu0 0.0
  %553 = vmatpush1.msra.mxu0 0.0
  %554 = vmatprep.subr.mxu0 0.0
  %555 = vmatpush1.msra.mxu0 0.0
  %556 = vmatprep.subr.mxu0 0.0
  %557 = vmatpush1.msra.mxu0 0.0
  %558 = vmatprep.subr.mxu0 0.0
  %559 = vmatpush1.msra.mxu0 0.0
  %560 = vmatprep.subr.mxu0 0.0
  %561 = vmatpush1.msra.mxu0 0.0
  %562 = vmatprep.subr.mxu0 0.0
  %563 = vmatpush1.msra.mxu0 0.0
  %564 = vmatprep.subr.mxu0 0.0
  %565 = vmatpush1.msra.mxu0 0.0
  %566 = vmatprep.subr.mxu0 0.0
  %567 = vmatpush1.msra.mxu0 0.0
  %568 = vmatprep.subr.mxu0 0.0
  %569 = vmatpush1.msra.mxu0 0.0
  %570 = vmatprep.subr.mxu0 0.0
  %571 = vmatpush1.msra.mxu0 0.0
  %572 = vmatprep.subr.mxu0 0.0
  %573 = vmatpush1.msra.mxu0 0.0
  %574 = vmatprep.subr.mxu0 0.0
  %575 = vmatpush1.msra.mxu0 0.0
  %576 = vmatprep.subr.mxu0 0.0
  %577 = vmatpush1.msra.mxu0 0.0
  %578 = vmatprep.subr.mxu0 0.0
  %579 = vmatpush1.msra.mxu0 0.0
  %580 = vmatprep.subr.mxu0 0.0
  %581 = vmatpush1.msra.mxu0 0.0
  %582 = vmatprep.subr.mxu0 0.0
  %583 = vmatpush1.msra.mxu0 0.0
  %584 = vmatprep.subr.mxu0 0.0
  %585 = vmatpush1.msra.mxu0 0.0
  %586 = vmatprep.subr.mxu0 0.0
  %587 = vmatpush1.msra.mxu0 0.0
  %588 = vmatprep.subr.mxu0 0.0
  %589 = vmatpush1.msra.mxu0 0.0
  %590 = vmatprep.subr.mxu0 0.0
  %591 = vmatpush1.msra.mxu0 0.0
  %592 = vmatprep.subr.mxu0 0.0
  %593 = vmatpush1.msra.mxu0 0.0
  %594 = vmatprep.mubr.f32.mxu0 0.0
  %595 = vmatmul.mubr.f32.gmra.mrb[0].mxu0 %v528
  %v596 = vpop.f32.mrb[0].mxu0
  %v597 = vadd.f32 0.0, %v596
  %v598 = vpop.f32.mrb[0].mxu0
  %599 = vdwg.mxu0
  %600 = vrot.lane.b32.xlu0 %v323, 64
  %v601 = vpop.permute.xlu0 %600
  %v604 = vsel %vm501, %v523, 0
  %606 = vmatprep.subr.mxu0 0.0
  %607 = vmatpush1.msra.mxu0 %v601
  %608 = vmatprep.subr.mxu0 0.0
  %609 = vmatpush1.msra.mxu0 0.0
  %610 = vmatprep.subr.mxu0 0.0
  %611 = vmatpush1.msra.mxu0 0.0
  %612 = vmatprep.subr.mxu0 0.0
  %613 = vmatpush1.msra.mxu0 0.0
  %614 = vmatprep.subr.mxu0 0.0
  %615 = vmatpush1.msra.mxu0 0.0
  %616 = vmatprep.subr.mxu0 0.0
  %617 = vmatpush1.msra.mxu0 0.0
  %618 = vmatprep.subr.mxu0 0.0
  %619 = vmatpush1.msra.mxu0 0.0
  %620 = vmatprep.subr.mxu0 0.0
  %621 = vmatpush1.msra.mxu0 0.0
  %622 = vmatprep.subr.mxu0 0.0
  %623 = vmatpush1.msra.mxu0 0.0
  %624 = vmatprep.subr.mxu0 0.0
  %625 = vmatpush1.msra.mxu0 0.0
  %626 = vmatprep.subr.mxu0 0.0
  %627 = vmatpush1.msra.mxu0 0.0
  %628 = vmatprep.subr.mxu0 0.0
  %629 = vmatpush1.msra.mxu0 0.0
  %630 = vmatprep.subr.mxu0 0.0
  %631 = vmatpush1.msra.mxu0 0.0
  %632 = vmatprep.subr.mxu0 0.0
  %633 = vmatpush1.msra.mxu0 0.0
  %634 = vmatprep.subr.mxu0 0.0
  %635 = vmatpush1.msra.mxu0 0.0
  %636 = vmatprep.subr.mxu0 0.0
  %637 = vmatpush1.msra.mxu0 0.0
  %638 = vmatprep.subr.mxu0 0.0
  %639 = vmatpush1.msra.mxu0 0.0
  %640 = vmatprep.subr.mxu0 0.0
  %641 = vmatpush1.msra.mxu0 0.0
  %642 = vmatprep.subr.mxu0 0.0
  %643 = vmatpush1.msra.mxu0 0.0
  %644 = vmatprep.subr.mxu0 0.0
  %645 = vmatpush1.msra.mxu0 0.0
  %646 = vmatprep.subr.mxu0 0.0
  %647 = vmatpush1.msra.mxu0 0.0
  %648 = vmatprep.subr.mxu0 0.0
  %649 = vmatpush1.msra.mxu0 0.0
  %650 = vmatprep.subr.mxu0 0.0
  %651 = vmatpush1.msra.mxu0 0.0
  %652 = vmatprep.subr.mxu0 0.0
  %653 = vmatpush1.msra.mxu0 0.0
  %654 = vmatprep.subr.mxu0 0.0
  %655 = vmatpush1.msra.mxu0 0.0
  %656 = vmatprep.subr.mxu0 0.0
  %657 = vmatpush1.msra.mxu0 0.0
  %658 = vmatprep.subr.mxu0 0.0
  %659 = vmatpush1.msra.mxu0 0.0
  %660 = vmatprep.subr.mxu0 0.0
  %661 = vmatpush1.msra.mxu0 0.0
  %662 = vmatprep.subr.mxu0 0.0
  %663 = vmatpush1.msra.mxu0 0.0
  %664 = vmatprep.subr.mxu0 0.0
  %665 = vmatpush1.msra.mxu0 0.0
  %666 = vmatprep.subr.mxu0 0.0
  %667 = vmatpush1.msra.mxu0 0.0
  %668 = vmatprep.subr.mxu0 0.0
  %669 = vmatpush1.msra.mxu0 0.0
  %670 = vmatprep.mubr.f32.mxu0 0.0
  %671 = vmatmul.mubr.f32.gmra.mrb[0].mxu0 %v604
  %v672 = vpop.f32.mrb[0].mxu0
  %v673 = vadd.f32 0.0, %v672
  %v674 = vpop.f32.mrb[0].mxu0
  %675 = vdwg.mxu0
  %676 = vrot.lane.b32.xlu0 %v318, 112
  %v677 = vpop.permute.xlu0 %676
  %678 = vrot.lane.b32.xlu0 %v318, 80
  %v679 = vpop.permute.xlu0 %678
  %v680 = vsel %vm333, %v677, 0
  %v682 = vsel %vm333, %v679, 0
  %684 = vmatprep.subr.mxu0 0.0
  %685 = vmatpush1.xpose.msra.mxu0 %v682
  %686 = vmatprep.subr.mxu0 0.0
  %687 = vmatpush1.xpose.msra.mxu0 0.0
  %688 = vmatprep.subr.mxu0 0.0
  %689 = vmatpush1.xpose.msra.mxu0 0.0
  %690 = vmatprep.subr.mxu0 0.0
  %691 = vmatpush1.xpose.msra.mxu0 0.0
  %692 = vmatprep.subr.mxu0 0.0
  %693 = vmatpush1.xpose.msra.mxu0 0.0
  %694 = vmatprep.subr.mxu0 0.0
  %695 = vmatpush1.xpose.msra.mxu0 0.0
  %696 = vmatprep.subr.mxu0 0.0
  %697 = vmatpush1.xpose.msra.mxu0 0.0
  %698 = vmatprep.subr.mxu0 0.0
  %699 = vmatpush1.xpose.msra.mxu0 0.0
  %700 = vmatprep.subr.mxu0 0.0
  %701 = vmatpush1.xpose.msra.mxu0 0.0
  %702 = vmatprep.subr.mxu0 0.0
  %703 = vmatpush1.xpose.msra.mxu0 0.0
  %704 = vmatprep.subr.mxu0 0.0
  %705 = vmatpush1.xpose.msra.mxu0 0.0
  %706 = vmatprep.subr.mxu0 0.0
  %707 = vmatpush1.xpose.msra.mxu0 0.0
  %708 = vmatprep.subr.mxu0 0.0
  %709 = vmatpush1.xpose.msra.mxu0 0.0
  %710 = vmatprep.subr.mxu0 0.0
  %711 = vmatpush1.xpose.msra.mxu0 0.0
  %712 = vmatprep.subr.mxu0 0.0
  %713 = vmatpush1.xpose.msra.mxu0 0.0
  %714 = vmatprep.subr.mxu0 0.0
  %715 = vmatpush1.xpose.msra.mxu0 0.0
  %716 = vmatprep.subr.mxu0 0.0
  %717 = vmatpush1.xpose.msra.mxu0 0.0
  %718 = vmatprep.subr.mxu0 0.0
  %719 = vmatpush1.xpose.msra.mxu0 0.0
  %720 = vmatprep.subr.mxu0 0.0
  %721 = vmatpush1.xpose.msra.mxu0 0.0
  %722 = vmatprep.subr.mxu0 0.0
  %723 = vmatpush1.xpose.msra.mxu0 0.0
  %724 = vmatprep.subr.mxu0 0.0
  %725 = vmatpush1.xpose.msra.mxu0 0.0
  %726 = vmatprep.subr.mxu0 0.0
  %727 = vmatpush1.xpose.msra.mxu0 0.0
  %728 = vmatprep.subr.mxu0 0.0
  %729 = vmatpush1.xpose.msra.mxu0 0.0
  %730 = vmatprep.subr.mxu0 0.0
  %731 = vmatpush1.xpose.msra.mxu0 0.0
  %732 = vmatprep.subr.mxu0 0.0
  %733 = vmatpush1.xpose.msra.mxu0 0.0
  %734 = vmatprep.subr.mxu0 0.0
  %735 = vmatpush1.xpose.msra.mxu0 0.0
  %736 = vmatprep.subr.mxu0 0.0
  %737 = vmatpush1.xpose.msra.mxu0 0.0
  %738 = vmatprep.subr.mxu0 0.0
  %739 = vmatpush1.xpose.msra.mxu0 0.0
  %740 = vmatprep.subr.mxu0 0.0
  %741 = vmatpush1.xpose.msra.mxu0 0.0
  %742 = vmatprep.subr.mxu0 0.0
  %743 = vmatpush1.xpose.msra.mxu0 0.0
  %744 = vmatprep.subr.mxu0 0.0
  %745 = vmatpush1.xpose.msra.mxu0 0.0
  %746 = vmatprep.subr.mxu0 0.0
  %747 = vmatpush1.xpose.msra.mxu0 0.0
  %748 = vmatprep.mubr.f32.mxu0 0.0
  %749 = vmatmul.mubr.f32.gmra.mrb[0].mxu0 %v680
  %v750 = vpop.f32.mrb[0].mxu0
  %v751 = vadd.f32 0.0, %v750
  %v752 = vpop.f32.mrb[0].mxu0
  %753 = vdwg.mxu0
  %754 = vrot.lane.b32.xlu0 %v323, 112
  %v755 = vpop.permute.xlu0 %754
  %756 = vrot.lane.b32.xlu0 %v323, 80
  %v757 = vpop.permute.xlu0 %756
  %v758 = vsel %vm333, %v755, 0
  %v760 = vsel %vm333, %v757, 0
  %762 = vmatprep.subr.mxu0 0.0
  %763 = vmatpush1.xpose.msra.mxu0 %v760
  %764 = vmatprep.subr.mxu0 0.0
  %765 = vmatpush1.xpose.msra.mxu0 0.0
  %766 = vmatprep.subr.mxu0 0.0
  %767 = vmatpush1.xpose.msra.mxu0 0.0
  %768 = vmatprep.subr.mxu0 0.0
  %769 = vmatpush1.xpose.msra.mxu0 0.0
  %770 = vmatprep.subr.mxu0 0.0
  %771 = vmatpush1.xpose.msra.mxu0 0.0
  %772 = vmatprep.subr.mxu0 0.0
  %773 = vmatpush1.xpose.msra.mxu0 0.0
  %774 = vmatprep.subr.mxu0 0.0
  %775 = vmatpush1.xpose.msra.mxu0 0.0
  %776 = vmatprep.subr.mxu0 0.0
  %777 = vmatpush1.xpose.msra.mxu0 0.0
  %778 = vmatprep.subr.mxu0 0.0
  %779 = vmatpush1.xpose.msra.mxu0 0.0
  %780 = vmatprep.subr.mxu0 0.0
  %781 = vmatpush1.xpose.msra.mxu0 0.0
  %782 = vmatprep.subr.mxu0 0.0
  %783 = vmatpush1.xpose.msra.mxu0 0.0
  %784 = vmatprep.subr.mxu0 0.0
  %785 = vmatpush1.xpose.msra.mxu0 0.0
  %786 = vmatprep.subr.mxu0 0.0
  %787 = vmatpush1.xpose.msra.mxu0 0.0
  %788 = vmatprep.subr.mxu0 0.0
  %789 = vmatpush1.xpose.msra.mxu0 0.0
  %790 = vmatprep.subr.mxu0 0.0
  %791 = vmatpush1.xpose.msra.mxu0 0.0
  %792 = vmatprep.subr.mxu0 0.0
  %793 = vmatpush1.xpose.msra.mxu0 0.0
  %794 = vmatprep.subr.mxu0 0.0
  %795 = vmatpush1.xpose.msra.mxu0 0.0
  %796 = vmatprep.subr.mxu0 0.0
  %797 = vmatpush1.xpose.msra.mxu0 0.0
  %798 = vmatprep.subr.mxu0 0.0
  %799 = vmatpush1.xpose.msra.mxu0 0.0
  %800 = vmatprep.subr.mxu0 0.0
  %801 = vmatpush1.xpose.msra.mxu0 0.0
  %802 = vmatprep.subr.mxu0 0.0
  %803 = vmatpush1.xpose.msra.mxu0 0.0
  %804 = vmatprep.subr.mxu0 0.0
  %805 = vmatpush1.xpose.msra.mxu0 0.0
  %806 = vmatprep.subr.mxu0 0.0
  %807 = vmatpush1.xpose.msra.mxu0 0.0
  %808 = vmatprep.subr.mxu0 0.0
  %809 = vmatpush1.xpose.msra.mxu0 0.0
  %810 = vmatprep.subr.mxu0 0.0
  %811 = vmatpush1.xpose.msra.mxu0 0.0
  %812 = vmatprep.subr.mxu0 0.0
  %813 = vmatpush1.xpose.msra.mxu0 0.0
  %814 = vmatprep.subr.mxu0 0.0
  %815 = vmatpush1.xpose.msra.mxu0 0.0
  %816 = vmatprep.subr.mxu0 0.0
  %817 = vmatpush1.xpose.msra.mxu0 0.0
  %818 = vmatprep.subr.mxu0 0.0
  %819 = vmatpush1.xpose.msra.mxu0 0.0
  %820 = vmatprep.subr.mxu0 0.0
  %821 = vmatpush1.xpose.msra.mxu0 0.0
  %822 = vmatprep.subr.mxu0 0.0
  %823 = vmatpush1.xpose.msra.mxu0 0.0
  %824 = vmatprep.subr.mxu0 0.0
  %825 = vmatpush1.xpose.msra.mxu0 0.0
  %826 = vmatprep.mubr.f32.mxu0 0.0
  %827 = vmatmul.mubr.f32.gmra.mrb[0].mxu0 %v758
  %v828 = vpop.f32.mrb[0].mxu0
  %v829 = vadd.f32 0.0, %v828
  %v830 = vpop.f32.mrb[0].mxu0
  %831 = vdwg.mxu0
  %v832 = vmul.f32 %v751, 0.25
  %v833 = vmul.f32 %v829, 0.25
  %v834 = vadd.f32 %v832, %v492
  %v835 = vadd.f32 %v833, %v496
  %v836 = vsel %vm501, %v834, -inf
  %837 = vmax.xlane.f32.xlu0 %v836
  %v838 = vpop.xlane.xlu0 %837
  %v839 = vsel %vm501, %v835, -inf
  %840 = vmax.xlane.f32.xlu0 %v839
  %v841 = vpop.xlane.xlu0 %840
  %v842 = vsub.f32 %v834, %v838
  %v843 = vsub.f32 %v835, %v841
  %v844 = vmul.f32 %v842, 1.442695
  %v845 = vpow.pop %v844
  %v846 = vmul.f32 %v843, 1.442695
  %v847 = vpow.pop %v846
  %v848 = vsel %vm501, %v845, 0.0
  %849 = vadd.xlane.f32.xlu0 %v848
  %v850 = vpop.xlane.xlu0 %849
  %v851 = vsel %vm501, %v847, 0.0
  %852 = vadd.xlane.f32.xlu0 %v851
  %v853 = vpop.xlane.xlu0 %852
  %v854 = vrcp.pop %v850
  %v855 = vrcp.pop %v853
  %v856 = vmul.f32 %v845, %v854
  %v857 = vmul.f32 %v847, %v855
  %858 = vrot.lane.b32.xlu0 %v318, 48
  %v859 = vpop.permute.xlu0 %858
  %v862 = vsel %vm501, %v856, 0
  %864 = vmatprep.subr.mxu0 0.0
  %865 = vmatpush1.msra.mxu0 %v859
  %866 = vmatprep.subr.mxu0 0.0
  %867 = vmatpush1.msra.mxu0 0.0
  %868 = vmatprep.subr.mxu0 0.0
  %869 = vmatpush1.msra.mxu0 0.0
  %870 = vmatprep.subr.mxu0 0.0
  %871 = vmatpush1.msra.mxu0 0.0
  %872 = vmatprep.subr.mxu0 0.0
  %873 = vmatpush1.msra.mxu0 0.0
  %874 = vmatprep.subr.mxu0 0.0
  %875 = vmatpush1.msra.mxu0 0.0
  %876 = vmatprep.subr.mxu0 0.0
  %877 = vmatpush1.msra.mxu0 0.0
  %878 = vmatprep.subr.mxu0 0.0
  %879 = vmatpush1.msra.mxu0 0.0
  %880 = vmatprep.subr.mxu0 0.0
  %881 = vmatpush1.msra.mxu0 0.0
  %882 = vmatprep.subr.mxu0 0.0
  %883 = vmatpush1.msra.mxu0 0.0
  %884 = vmatprep.subr.mxu0 0.0
  %885 = vmatpush1.msra.mxu0 0.0
  %886 = vmatprep.subr.mxu0 0.0
  %887 = vmatpush1.msra.mxu0 0.0
  %888 = vmatprep.subr.mxu0 0.0
  %889 = vmatpush1.msra.mxu0 0.0
  %890 = vmatprep.subr.mxu0 0.0
  %891 = vmatpush1.msra.mxu0 0.0
  %892 = vmatprep.subr.mxu0 0.0
  %893 = vmatpush1.msra.mxu0 0.0
  %894 = vmatprep.subr.mxu0 0.0
  %895 = vmatpush1.msra.mxu0 0.0
  %896 = vmatprep.subr.mxu0 0.0
  %897 = vmatpush1.msra.mxu0 0.0
  %898 = vmatprep.subr.mxu0 0.0
  %899 = vmatpush1.msra.mxu0 0.0
  %900 = vmatprep.subr.mxu0 0.0
  %901 = vmatpush1.msra.mxu0 0.0
  %902 = vmatprep.subr.mxu0 0.0
  %903 = vmatpush1.msra.mxu0 0.0
  %904 = vmatprep.subr.mxu0 0.0
  %905 = vmatpush1.msra.mxu0 0.0
  %906 = vmatprep.subr.mxu0 0.0
  %907 = vmatpush1.msra.mxu0 0.0
  %908 = vmatprep.subr.mxu0 0.0
  %909 = vmatpush1.msra.mxu0 0.0
  %910 = vmatprep.subr.mxu0 0.0
  %911 = vmatpush1.msra.mxu0 0.0
  %912 = vmatprep.subr.mxu0 0.0
  %913 = vmatpush1.msra.mxu0 0.0
  %914 = vmatprep.subr.mxu0 0.0
  %915 = vmatpush1.msra.mxu0 0.0
  %916 = vmatprep.subr.mxu0 0.0
  %917 = vmatpush1.msra.mxu0 0.0
  %918 = vmatprep.subr.mxu0 0.0
  %919 = vmatpush1.msra.mxu0 0.0
  %920 = vmatprep.subr.mxu0 0.0
  %921 = vmatpush1.msra.mxu0 0.0
  %922 = vmatprep.subr.mxu0 0.0
  %923 = vmatpush1.msra.mxu0 0.0
  %924 = vmatprep.subr.mxu0 0.0
  %925 = vmatpush1.msra.mxu0 0.0
  %926 = vmatprep.subr.mxu0 0.0
  %927 = vmatpush1.msra.mxu0 0.0
  %928 = vmatprep.mubr.f32.mxu0 0.0
  %929 = vmatmul.mubr.f32.gmra.mrb[0].mxu0 %v862
  %v930 = vpop.f32.mrb[0].mxu0
  %v931 = vadd.f32 0.0, %v930
  %v932 = vpop.f32.mrb[0].mxu0
  %933 = vdwg.mxu0
  %934 = vrot.lane.b32.xlu0 %v323, 48
  %v935 = vpop.permute.xlu0 %934
  %v938 = vsel %vm501, %v857, 0
  %940 = vmatprep.subr.mxu0 0.0
  %941 = vmatpush1.msra.mxu0 %v935
  %942 = vmatprep.subr.mxu0 0.0
  %943 = vmatpush1.msra.mxu0 0.0
  %944 = vmatprep.subr.mxu0 0.0
  %945 = vmatpush1.msra.mxu0 0.0
  %946 = vmatprep.subr.mxu0 0.0
  %947 = vmatpush1.msra.mxu0 0.0
  %948 = vmatprep.subr.mxu0 0.0
  %949 = vmatpush1.msra.mxu0 0.0
  %950 = vmatprep.subr.mxu0 0.0
  %951 = vmatpush1.msra.mxu0 0.0
  %952 = vmatprep.subr.mxu0 0.0
  %953 = vmatpush1.msra.mxu0 0.0
  %954 = vmatprep.subr.mxu0 0.0
  %955 = vmatpush1.msra.mxu0 0.0
  %956 = vmatprep.subr.mxu0 0.0
  %957 = vmatpush1.msra.mxu0 0.0
  %958 = vmatprep.subr.mxu0 0.0
  %959 = vmatpush1.msra.mxu0 0.0
  %960 = vmatprep.subr.mxu0 0.0
  %961 = vmatpush1.msra.mxu0 0.0
  %962 = vmatprep.subr.mxu0 0.0
  %963 = vmatpush1.msra.mxu0 0.0
  %964 = vmatprep.subr.mxu0 0.0
  %965 = vmatpush1.msra.mxu0 0.0
  %966 = vmatprep.subr.mxu0 0.0
  %967 = vmatpush1.msra.mxu0 0.0
  %968 = vmatprep.subr.mxu0 0.0
  %969 = vmatpush1.msra.mxu0 0.0
  %970 = vmatprep.subr.mxu0 0.0
  %971 = vmatpush1.msra.mxu0 0.0
  %972 = vmatprep.subr.mxu0 0.0
  %973 = vmatpush1.msra.mxu0 0.0
  %974 = vmatprep.subr.mxu0 0.0
  %975 = vmatpush1.msra.mxu0 0.0
  %976 = vmatprep.subr.mxu0 0.0
  %977 = vmatpush1.msra.mxu0 0.0
  %978 = vmatprep.subr.mxu0 0.0
  %979 = vmatpush1.msra.mxu0 0.0
  %980 = vmatprep.subr.mxu0 0.0
  %981 = vmatpush1.msra.mxu0 0.0
  %982 = vmatprep.subr.mxu0 0.0
  %983 = vmatpush1.msra.mxu0 0.0
  %984 = vmatprep.subr.mxu0 0.0
  %985 = vmatpush1.msra.mxu0 0.0
  %986 = vmatprep.subr.mxu0 0.0
  %987 = vmatpush1.msra.mxu0 0.0
  %988 = vmatprep.subr.mxu0 0.0
  %989 = vmatpush1.msra.mxu0 0.0
  %990 = vmatprep.subr.mxu0 0.0
  %991 = vmatpush1.msra.mxu0 0.0
  %992 = vmatprep.subr.mxu0 0.0
  %993 = vmatpush1.msra.mxu0 0.0
  %994 = vmatprep.subr.mxu0 0.0
  %995 = vmatpush1.msra.mxu0 0.0
  %996 = vmatprep.subr.mxu0 0.0
  %997 = vmatpush1.msra.mxu0 0.0
  %998 = vmatprep.subr.mxu0 0.0
  %999 = vmatpush1.msra.mxu0 0.0
  %1000 = vmatprep.subr.mxu0 0.0
  %1001 = vmatpush1.msra.mxu0 0.0
  %1002 = vmatprep.subr.mxu0 0.0
  %1003 = vmatpush1.msra.mxu0 0.0
  %1004 = vmatprep.mubr.f32.mxu0 0.0
  %1005 = vmatmul.mubr.f32.gmra.mrb[0].mxu0 %v938
  %v1006 = vpop.f32.mrb[0].mxu0
  %v1007 = vadd.f32 0.0, %v1006
  %v1008 = vpop.f32.mrb[0].mxu0
  %1009 = vdwg.mxu0
  %v1011 = vsel %vm333, %v931, 0
  %v1014 = vsel %vm333, %v1007, 0
  %1016 = vmatprep.subr.mxu0 0.0
  %1017 = vmatpush1.msra.mxu0 %v328
  %1018 = vmatprep.subr.mxu0 0.0
  %1019 = vmatpush1.msra.mxu0 %v329
  %1020 = vmatprep.subr.mxu0 0.0
  %1021 = vmatpush1.msra.mxu0 0.0
  %1022 = vmatprep.subr.mxu0 0.0
  %1023 = vmatpush1.msra.mxu0 0.0
  %1024 = vmatprep.subr.mxu0 0.0
  %1025 = vmatpush1.msra.mxu0 0.0
  %1026 = vmatprep.subr.mxu0 0.0
  %1027 = vmatpush1.msra.mxu0 0.0
  %1028 = vmatprep.subr.mxu0 0.0
  %1029 = vmatpush1.msra.mxu0 0.0
  %1030 = vmatprep.subr.mxu0 0.0
  %1031 = vmatpush1.msra.mxu0 0.0
  %1032 = vmatprep.subr.mxu0 0.0
  %1033 = vmatpush1.msra.mxu0 0.0
  %1034 = vmatprep.subr.mxu0 0.0
  %1035 = vmatpush1.msra.mxu0 0.0
  %1036 = vmatprep.subr.mxu0 0.0
  %1037 = vmatpush1.msra.mxu0 0.0
  %1038 = vmatprep.subr.mxu0 0.0
  %1039 = vmatpush1.msra.mxu0 0.0
  %1040 = vmatprep.subr.mxu0 0.0
  %1041 = vmatpush1.msra.mxu0 0.0
  %1042 = vmatprep.subr.mxu0 0.0
  %1043 = vmatpush1.msra.mxu0 0.0
  %1044 = vmatprep.subr.mxu0 0.0
  %1045 = vmatpush1.msra.mxu0 0.0
  %1046 = vmatprep.subr.mxu0 0.0
  %1047 = vmatpush1.msra.mxu0 0.0
  %1048 = vmatprep.subr.mxu0 0.0
  %1049 = vmatpush1.msra.mxu0 0.0
  %1050 = vmatprep.subr.mxu0 0.0
  %1051 = vmatpush1.msra.mxu0 0.0
  %1052 = vmatprep.subr.mxu0 0.0
  %1053 = vmatpush1.msra.mxu0 0.0
  %1054 = vmatprep.subr.mxu0 0.0
  %1055 = vmatpush1.msra.mxu0 0.0
  %1056 = vmatprep.subr.mxu0 0.0
  %1057 = vmatpush1.msra.mxu0 0.0
  %1058 = vmatprep.subr.mxu0 0.0
  %1059 = vmatpush1.msra.mxu0 0.0
  %1060 = vmatprep.subr.mxu0 0.0
  %1061 = vmatpush1.msra.mxu0 0.0
  %1062 = vmatprep.subr.mxu0 0.0
  %1063 = vmatpush1.msra.mxu0 0.0
  %1064 = vmatprep.subr.mxu0 0.0
  %1065 = vmatpush1.msra.mxu0 0.0
  %1066 = vmatprep.subr.mxu0 0.0
  %1067 = vmatpush1.msra.mxu0 0.0
  %1068 = vmatprep.subr.mxu0 0.0
  %1069 = vmatpush1.msra.mxu0 0.0
  %1070 = vmatprep.subr.mxu0 0.0
  %1071 = vmatpush1.msra.mxu0 0.0
  %1072 = vmatprep.subr.mxu0 0.0
  %1073 = vmatpush1.msra.mxu0 0.0
  %1074 = vmatprep.subr.mxu0 0.0
  %1075 = vmatpush1.msra.mxu0 0.0
  %1076 = vmatprep.subr.mxu0 0.0
  %1077 = vmatpush1.msra.mxu0 0.0
  %1078 = vmatprep.subr.mxu0 0.0
  %1079 = vmatpush1.msra.mxu0 0.0
  %1080 = vmatprep.mubr.f32.mxu0 0.0
  %1081 = vmatmul.mubr.f32.gmra.mrb[0].mxu0 %v1011
  %v1082 = vpop.f32.mrb[0].mxu0
  %v1083 = vadd.f32 0.0, %v1082
  %v1084 = vpop.f32.mrb[0].mxu0
  %1085 = vmatprep.mubr.f32.mxu0 0.0
  %1086 = vmatmul.mubr.f32.gmra.mrb[0].mxu0 %v1014
  %v1087 = vpop.f32.mrb[0].mxu0
  %v1088 = vadd.f32 0.0, %v1087
  %v1089 = vpop.f32.mrb[0].mxu0
  %1090 = vdwg.mxu0
  %v1092 = vsel %vm333, %v597, 0
  %v1095 = vsel %vm333, %v673, 0
  %1097 = vmatprep.subr.mxu0 0.0
  %1098 = vmatpush1.msra.mxu0 %v326
  %1099 = vmatprep.subr.mxu0 0.0
  %1100 = vmatpush1.msra.mxu0 %v327
  %1101 = vmatprep.subr.mxu0 0.0
  %1102 = vmatpush1.msra.mxu0 0.0
  %1103 = vmatprep.subr.mxu0 0.0
  %1104 = vmatpush1.msra.mxu0 0.0
  %1105 = vmatprep.subr.mxu0 0.0
  %1106 = vmatpush1.msra.mxu0 0.0
  %1107 = vmatprep.subr.mxu0 0.0
  %1108 = vmatpush1.msra.mxu0 0.0
  %1109 = vmatprep.subr.mxu0 0.0
  %1110 = vmatpush1.msra.mxu0 0.0
  %1111 = vmatprep.subr.mxu0 0.0
  %1112 = vmatpush1.msra.mxu0 0.0
  %1113 = vmatprep.subr.mxu0 0.0
  %1114 = vmatpush1.msra.mxu0 0.0
  %1115 = vmatprep.subr.mxu0 0.0
  %1116 = vmatpush1.msra.mxu0 0.0
  %1117 = vmatprep.subr.mxu0 0.0
  %1118 = vmatpush1.msra.mxu0 0.0
  %1119 = vmatprep.subr.mxu0 0.0
  %1120 = vmatpush1.msra.mxu0 0.0
  %1121 = vmatprep.subr.mxu0 0.0
  %1122 = vmatpush1.msra.mxu0 0.0
  %1123 = vmatprep.subr.mxu0 0.0
  %1124 = vmatpush1.msra.mxu0 0.0
  %1125 = vmatprep.subr.mxu0 0.0
  %1126 = vmatpush1.msra.mxu0 0.0
  %1127 = vmatprep.subr.mxu0 0.0
  %1128 = vmatpush1.msra.mxu0 0.0
  %1129 = vmatprep.subr.mxu0 0.0
  %1130 = vmatpush1.msra.mxu0 0.0
  %1131 = vmatprep.subr.mxu0 0.0
  %1132 = vmatpush1.msra.mxu0 0.0
  %1133 = vmatprep.subr.mxu0 0.0
  %1134 = vmatpush1.msra.mxu0 0.0
  %1135 = vmatprep.subr.mxu0 0.0
  %1136 = vmatpush1.msra.mxu0 0.0
  %1137 = vmatprep.subr.mxu0 0.0
  %1138 = vmatpush1.msra.mxu0 0.0
  %1139 = vmatprep.subr.mxu0 0.0
  %1140 = vmatpush1.msra.mxu0 0.0
  %1141 = vmatprep.subr.mxu0 0.0
  %1142 = vmatpush1.msra.mxu0 0.0
  %1143 = vmatprep.subr.mxu0 0.0
  %1144 = vmatpush1.msra.mxu0 0.0
  %1145 = vmatprep.subr.mxu0 0.0
  %1146 = vmatpush1.msra.mxu0 0.0
  %1147 = vmatprep.subr.mxu0 0.0
  %1148 = vmatpush1.msra.mxu0 0.0
  %1149 = vmatprep.subr.mxu0 0.0
  %1150 = vmatpush1.msra.mxu0 0.0
  %1151 = vmatprep.subr.mxu0 0.0
  %1152 = vmatpush1.msra.mxu0 0.0
  %1153 = vmatprep.subr.mxu0 0.0
  %1154 = vmatpush1.msra.mxu0 0.0
  %1155 = vmatprep.subr.mxu0 0.0
  %1156 = vmatpush1.msra.mxu0 0.0
  %1157 = vmatprep.subr.mxu0 0.0
  %1158 = vmatpush1.msra.mxu0 0.0
  %1159 = vmatprep.subr.mxu0 0.0
  %1160 = vmatpush1.msra.mxu0 0.0
  %1161 = vmatprep.mubr.f32.mxu0 0.0
  %1162 = vmatmul.mubr.f32.gmra.mrb[0].mxu0 %v1092
  %v1163 = vpop.f32.mrb[0].mxu0
  %v1164 = vadd.f32 %v1083, %v1163
  %v1165 = vpop.f32.mrb[0].mxu0
  %1166 = vmatprep.mubr.f32.mxu0 0.0
  %1167 = vmatmul.mubr.f32.gmra.mrb[0].mxu0 %v1095
  %v1168 = vpop.f32.mrb[0].mxu0
  %v1169 = vadd.f32 %v1088, %v1168
  %v1170 = vpop.f32.mrb[0].mxu0
  %1171 = vdwg.mxu0
  %v1172 = vld [vmem:[%s10] sm:$0x1]
  %v1174 = vlaneseq
  %v1175 = vshrl.u32 %v1174, 7
  %v1176 = vsub.s32 0, %v1175
  %v1177 = vrot.slane %v1172, %v1176
  %v1179 = vadd.f32 %v1164, %v1177
  %v1180 = vadd.f32 %v1169, %v1177
  %v1181 = vadd.f32 %v226, %v1179
  %v1182 = vadd.f32 %v227, %v1180
  %v1183 = vld [vmem:[%s11] sm:$0x1]
  %v1184 = vld [vmem:[%s12] sm:$0x1]
  %v1185 = vsel %vm184, %v1181, 0.0
  %1186 = vadd.xlane.f32.xlu0 %v1185
  %v1187 = vpop.xlane.xlu0 %1186
  %v1188 = vsel %vm184, %v1182, 0.0
  %1189 = vadd.xlane.f32.xlu0 %v1188
  %v1190 = vpop.xlane.xlu0 %1189
  %v1191 = vmul.f32 %v1187, %v191
  %v1192 = vmul.f32 %v1190, %v191
  %v1193 = vsub.f32 %v1181, %v1191
  %v1194 = vsub.f32 %v1182, %v1192
  %v1195 = vmul.f32 %v1193, %v1193
  %v1196 = vmul.f32 %v1194, %v1194
  %v1197 = vsel %vm184, %v1195, 0.0
  %1198 = vadd.xlane.f32.xlu0 %v1197
  %v1199 = vpop.xlane.xlu0 %1198
  %v1200 = vsel %vm184, %v1196, 0.0
  %1201 = vadd.xlane.f32.xlu0 %v1200
  %v1202 = vpop.xlane.xlu0 %1201
  %v1203 = vmul.f32 %v1199, %v191
  %v1204 = vmul.f32 %v1202, %v191
  %v1205 = vadd.f32 %v1203, 1e-12
  %v1206 = vadd.f32 %v1204, 1e-12
  %v1207 = vrsqrt.pop %v1205
  %v1208 = vrsqrt.pop %v1206
  %v1209 = vmul.f32 %v1193, %v1207
  %v1210 = vmul.f32 %v1194, %v1208
  %v1212 = vlaneseq
  %v1213 = vshrl.u32 %v1212, 7
  %v1214 = vsub.s32 0, %v1213
  %v1215 = vrot.slane %v1183, %v1214
  %v1217 = vmul.f32 %v1209, %v1215
  %v1218 = vmul.f32 %v1210, %v1215
  %v1220 = vlaneseq
  %v1221 = vshrl.u32 %v1220, 7
  %v1222 = vsub.s32 0, %v1221
  %v1223 = vrot.slane %v1184, %v1222
  %v1225 = vadd.f32 %v1217, %v1223
  %v1226 = vadd.f32 %v1218, %v1223
  %v1227 = vld [vmem:[%s13] sm:$0xff]
  %v1228 = vld [vmem:[%s13 + $0x8] sm:$0xff]
  %v1229 = vld [vmem:[%s13 + $0x10] sm:$0xff]
  %v1230 = vld [vmem:[%s13 + $0x18] sm:$0xff]
  %v1231 = vld [vmem:[%s14] sm:$0x1]
  %v1233 = vlaneseq
  %v1234 = vshrl.u32 %v1233, 7
  %v1235 = vsub.s32 0, %v1234
  %v1236 = vrot.slane %v1231, %v1235
  %v1239 = vsel %vm184, %v1225, 0
  %v1242 = vsel %vm184, %v1226, 0
  %1244 = vmatprep.subr.mxu0 0.0
  %1245 = vmatpush1.msra.mxu0 %v1227
  %1246 = vmatprep.subr.mxu0 0.0
  %1247 = vmatpush1.msra.mxu0 %v1228
  %1248 = vmatprep.subr.mxu0 0.0
  %1249 = vmatpush1.msra.mxu0 %v1229
  %1250 = vmatprep.subr.mxu0 0.0
  %1251 = vmatpush1.msra.mxu0 %v1230
  %1252 = vmatprep.subr.mxu0 0.0
  %1253 = vmatpush1.msra.mxu0 0.0
  %1254 = vmatprep.subr.mxu0 0.0
  %1255 = vmatpush1.msra.mxu0 0.0
  %1256 = vmatprep.subr.mxu0 0.0
  %1257 = vmatpush1.msra.mxu0 0.0
  %1258 = vmatprep.subr.mxu0 0.0
  %1259 = vmatpush1.msra.mxu0 0.0
  %1260 = vmatprep.subr.mxu0 0.0
  %1261 = vmatpush1.msra.mxu0 0.0
  %1262 = vmatprep.subr.mxu0 0.0
  %1263 = vmatpush1.msra.mxu0 0.0
  %1264 = vmatprep.subr.mxu0 0.0
  %1265 = vmatpush1.msra.mxu0 0.0
  %1266 = vmatprep.subr.mxu0 0.0
  %1267 = vmatpush1.msra.mxu0 0.0
  %1268 = vmatprep.subr.mxu0 0.0
  %1269 = vmatpush1.msra.mxu0 0.0
  %1270 = vmatprep.subr.mxu0 0.0
  %1271 = vmatpush1.msra.mxu0 0.0
  %1272 = vmatprep.subr.mxu0 0.0
  %1273 = vmatpush1.msra.mxu0 0.0
  %1274 = vmatprep.subr.mxu0 0.0
  %1275 = vmatpush1.msra.mxu0 0.0
  %1276 = vmatprep.subr.mxu0 0.0
  %1277 = vmatpush1.msra.mxu0 0.0
  %1278 = vmatprep.subr.mxu0 0.0
  %1279 = vmatpush1.msra.mxu0 0.0
  %1280 = vmatprep.subr.mxu0 0.0
  %1281 = vmatpush1.msra.mxu0 0.0
  %1282 = vmatprep.subr.mxu0 0.0
  %1283 = vmatpush1.msra.mxu0 0.0
  %1284 = vmatprep.subr.mxu0 0.0
  %1285 = vmatpush1.msra.mxu0 0.0
  %1286 = vmatprep.subr.mxu0 0.0
  %1287 = vmatpush1.msra.mxu0 0.0
  %1288 = vmatprep.subr.mxu0 0.0
  %1289 = vmatpush1.msra.mxu0 0.0
  %1290 = vmatprep.subr.mxu0 0.0
  %1291 = vmatpush1.msra.mxu0 0.0
  %1292 = vmatprep.subr.mxu0 0.0
  %1293 = vmatpush1.msra.mxu0 0.0
  %1294 = vmatprep.subr.mxu0 0.0
  %1295 = vmatpush1.msra.mxu0 0.0
  %1296 = vmatprep.subr.mxu0 0.0
  %1297 = vmatpush1.msra.mxu0 0.0
  %1298 = vmatprep.subr.mxu0 0.0
  %1299 = vmatpush1.msra.mxu0 0.0
  %1300 = vmatprep.subr.mxu0 0.0
  %1301 = vmatpush1.msra.mxu0 0.0
  %1302 = vmatprep.subr.mxu0 0.0
  %1303 = vmatpush1.msra.mxu0 0.0
  %1304 = vmatprep.subr.mxu0 0.0
  %1305 = vmatpush1.msra.mxu0 0.0
  %1306 = vmatprep.subr.mxu0 0.0
  %1307 = vmatpush1.msra.mxu0 0.0
  %1308 = vmatprep.mubr.f32.mxu0 0.0
  %1309 = vmatmul.mubr.f32.gmra.mrb[0].mxu0 %v1239
  %v1310 = vpop.f32.mrb[0].mxu0
  %v1311 = vadd.f32 %v1236, %v1310
  %v1312 = vpop.f32.mrb[0].mxu0
  %1313 = vmatprep.mubr.f32.mxu0 0.0
  %1314 = vmatmul.mubr.f32.gmra.mrb[0].mxu0 %v1242
  %v1315 = vpop.f32.mrb[0].mxu0
  %v1316 = vadd.f32 %v1236, %v1315
  %v1317 = vpop.f32.mrb[0].mxu0
  %1318 = vdwg.mxu0
  %v1319 = vmul.f32 %v1311, 0.5
  %v1320 = vmul.f32 %v1316, 0.5
  %v1321 = vmul.f32 %v1311, 0.044715
  %v1322 = vmul.f32 %v1316, 0.044715
  %v1323 = vmul.f32 %v1321, %v1311
  %v1324 = vmul.f32 %v1322, %v1316
  %v1325 = vmul.f32 %v1323, %v1311
  %v1326 = vmul.f32 %v1324, %v1316
  %v1327 = vadd.f32 %v1311, %v1325
  %v1328 = vadd.f32 %v1316, %v1326
  %v1329 = vmul.f32 %v1327, 0.7978846
  %v1330 = vmul.f32 %v1328, 0.7978846
  %v1331 = vtanh.pop %v1329
  %v1332 = vtanh.pop %v1330
  %v1333 = vadd.f32 %v1331, 1.0
  %v1334 = vadd.f32 %v1332, 1.0
  %v1335 = vmul.f32 %v1319, %v1333
  %v1336 = vmul.f32 %v1320, %v1334
  %v1337 = vld [vmem:[%s15] sm:$0xff]
  %v1338 = vld [vmem:[%s15 + $0x8] sm:$0xff]
  %v1339 = vld [vmem:[%s15 + $0x10] sm:$0xff]
  %v1340 = vld [vmem:[%s15 + $0x18] sm:$0xff]
  %v1341 = vld [vmem:[%s15 + $0x20] sm:$0xff]
  %v1342 = vld [vmem:[%s15 + $0x28] sm:$0xff]
  %v1343 = vld [vmem:[%s15 + $0x30] sm:$0xff]
  %v1344 = vld [vmem:[%s15 + $0x38] sm:$0xff]
  %v1345 = vld [vmem:[%s16] sm:$0x1]
  %v1347 = vlaneseq
  %v1348 = vshrl.u32 %v1347, 7
  %v1349 = vsub.s32 0, %v1348
  %v1350 = vrot.slane %v1345, %v1349
  %v1353 = vsel %vm93, %v1335, 0
  %v1356 = vsel %vm93, %v1336, 0
  %1358 = vmatprep.subr.mxu0 0.0
  %1359 = vmatpush1.msra.mxu0 %v1337
  %1360 = vmatprep.subr.mxu0 0.0
  %1361 = vmatpush1.msra.mxu0 %v1338
  %1362 = vmatprep.subr.mxu0 0.0
  %1363 = vmatpush1.msra.mxu0 %v1339
  %1364 = vmatprep.subr.mxu0 0.0
  %1365 = vmatpush1.msra.mxu0 %v1340
  %1366 = vmatprep.subr.mxu0 0.0
  %1367 = vmatpush1.msra.mxu0 %v1341
  %1368 = vmatprep.subr.mxu0 0.0
  %1369 = vmatpush1.msra.mxu0 %v1342
  %1370 = vmatprep.subr.mxu0 0.0
  %1371 = vmatpush1.msra.mxu0 %v1343
  %1372 = vmatprep.subr.mxu0 0.0
  %1373 = vmatpush1.msra.mxu0 %v1344
  %1374 = vmatprep.subr.mxu0 0.0
  %1375 = vmatpush1.msra.mxu0 0.0
  %1376 = vmatprep.subr.mxu0 0.0
  %1377 = vmatpush1.msra.mxu0 0.0
  %1378 = vmatprep.subr.mxu0 0.0
  %1379 = vmatpush1.msra.mxu0 0.0
  %1380 = vmatprep.subr.mxu0 0.0
  %1381 = vmatpush1.msra.mxu0 0.0
  %1382 = vmatprep.subr.mxu0 0.0
  %1383 = vmatpush1.msra.mxu0 0.0
  %1384 = vmatprep.subr.mxu0 0.0
  %1385 = vmatpush1.msra.mxu0 0.0
  %1386 = vmatprep.subr.mxu0 0.0
  %1387 = vmatpush1.msra.mxu0 0.0
  %1388 = vmatprep.subr.mxu0 0.0
  %1389 = vmatpush1.msra.mxu0 0.0
  %1390 = vmatprep.subr.mxu0 0.0
  %1391 = vmatpush1.msra.mxu0 0.0
  %1392 = vmatprep.subr.mxu0 0.0
  %1393 = vmatpush1.msra.mxu0 0.0
  %1394 = vmatprep.subr.mxu0 0.0
  %1395 = vmatpush1.msra.mxu0 0.0
  %1396 = vmatprep.subr.mxu0 0.0
  %1397 = vmatpush1.msra.mxu0 0.0
  %1398 = vmatprep.subr.mxu0 0.0
  %1399 = vmatpush1.msra.mxu0 0.0
  %1400 = vmatprep.subr.mxu0 0.0
  %1401 = vmatpush1.msra.mxu0 0.0
  %1402 = vmatprep.subr.mxu0 0.0
  %1403 = vmatpush1.msra.mxu0 0.0
  %1404 = vmatprep.subr.mxu0 0.0
  %1405 = vmatpush1.msra.mxu0 0.0
  %1406 = vmatprep.subr.mxu0 0.0
  %1407 = vmatpush1.msra.mxu0 0.0
  %1408 = vmatprep.subr.mxu0 0.0
  %1409 = vmatpush1.msra.mxu0 0.0
  %1410 = vmatprep.subr.mxu0 0.0
  %1411 = vmatpush1.msra.mxu0 0.0
  %1412 = vmatprep.subr.mxu0 0.0
  %1413 = vmatpush1.msra.mxu0 0.0
  %1414 = vmatprep.subr.mxu0 0.0
  %1415 = vmatpush1.msra.mxu0 0.0
  %1416 = vmatprep.subr.mxu0 0.0
  %1417 = vmatpush1.msra.mxu0 0.0
  %1418 = vmatprep.subr.mxu0 0.0
  %1419 = vmatpush1.msra.mxu0 0.0
  %1420 = vmatprep.subr.mxu0 0.0
  %1421 = vmatpush1.msra.mxu0 0.0
  %1422 = vmatprep.mubr.f32.mxu0 0.0
  %1423 = vmatmul.mubr.f32.gmra.mrb[0].mxu0 %v1353
  %v1424 = vpop.f32.mrb[0].mxu0
  %v1425 = vadd.f32 %v1350, %v1424
  %v1426 = vpop.f32.mrb[0].mxu0
  %1427 = vmatprep.mubr.f32.mxu0 0.0
  %1428 = vmatmul.mubr.f32.gmra.mrb[0].mxu0 %v1356
  %v1429 = vpop.f32.mrb[0].mxu0
  %v1430 = vadd.f32 %v1350, %v1429
  %v1431 = vpop.f32.mrb[0].mxu0
  %1432 = vdwg.mxu0
  %v1433 = vadd.f32 %v1225, %v1425
  %v1434 = vadd.f32 %v1226, %v1430
  %v1435 = vld [vmem:[%s17] sm:$0x1]
  %v1436 = vld [vmem:[%s18] sm:$0x1]
  %v1437 = vsel %vm184, %v1433, 0.0
  %1438 = vadd.xlane.f32.xlu0 %v1437
  %v1439 = vpop.xlane.xlu0 %1438
  %v1440 = vsel %vm184, %v1434, 0.0
  %1441 = vadd.xlane.f32.xlu0 %v1440
  %v1442 = vpop.xlane.xlu0 %1441
  %v1443 = vmul.f32 %v1439, %v191
  %v1444 = vmul.f32 %v1442, %v191
  %v1445 = vsub.f32 %v1433, %v1443
  %v1446 = vsub.f32 %v1434, %v1444
  %v1447 = vmul.f32 %v1445, %v1445
  %v1448 = vmul.f32 %v1446, %v1446
  %v1449 = vsel %vm184, %v1447, 0.0
  %1450 = vadd.xlane.f32.xlu0 %v1449
  %v1451 = vpop.xlane.xlu0 %1450
  %v1452 = vsel %vm184, %v1448, 0.0
  %1453 = vadd.xlane.f32.xlu0 %v1452
  %v1454 = vpop.xlane.xlu0 %1453
  %v1455 = vmul.f32 %v1451, %v191
  %v1456 = vmul.f32 %v1454, %v191
  %v1457 = vadd.f32 %v1455, 1e-12
  %v1458 = vadd.f32 %v1456, 1e-12
  %v1459 = vrsqrt.pop %v1457
  %v1460 = vrsqrt.pop %v1458
  %v1461 = vmul.f32 %v1445, %v1459
  %v1462 = vmul.f32 %v1446, %v1460
  %v1464 = vlaneseq
  %v1465 = vshrl.u32 %v1464, 7
  %v1466 = vsub.s32 0, %v1465
  %v1467 = vrot.slane %v1435, %v1466
  %v1469 = vmul.f32 %v1461, %v1467
  %v1470 = vmul.f32 %v1462, %v1467
  %v1472 = vlaneseq
  %v1473 = vshrl.u32 %v1472, 7
  %v1474 = vsub.s32 0, %v1473
  %v1475 = vrot.slane %v1436, %v1474
  %v1477 = vadd.f32 %v1469, %v1475
  %v1478 = vadd.f32 %v1470, %v1475
  %s1479 = scalar_lea.vmem %s7, 32
  %v1480 = vld [vmem:[%s1479] sm:$0xff]
  %v1481 = vld [vmem:[%s1479 + $0x8] sm:$0xff]
  %v1482 = vld [vmem:[%s1479 + $0x10] sm:$0xff]
  %v1483 = vld [vmem:[%s1479 + $0x18] sm:$0xff]
  %s1484 = scalar_lea.vmem %s8, 1
  %v1485 = vld [vmem:[%s1484] sm:$0x1]
  %v1487 = vlaneseq
  %v1488 = vshrl.u32 %v1487, 7
  %v1489 = vsub.s32 0, %v1488
  %v1490 = vrot.slane %v1485, %v1489
  %v1493 = vsel %vm184, %v1477, 0
  %v1496 = vsel %vm184, %v1478, 0
  %1498 = vmatprep.subr.mxu0 0.0
  %1499 = vmatpush1.msra.mxu0 %v1480
  %1500 = vmatprep.subr.mxu0 0.0
  %1501 = vmatpush1.msra.mxu0 %v1481
  %1502 = vmatprep.subr.mxu0 0.0
  %1503 = vmatpush1.msra.mxu0 %v1482
  %1504 = vmatprep.subr.mxu0 0.0
  %1505 = vmatpush1.msra.mxu0 %v1483
  %1506 = vmatprep.subr.mxu0 0.0
  %1507 = vmatpush1.msra.mxu0 0.0
  %1508 = vmatprep.subr.mxu0 0.0
  %1509 = vmatpush1.msra.mxu0 0.0
  %1510 = vmatprep.subr.mxu0 0.0
  %1511 = vmatpush1.msra.mxu0 0.0
  %1512 = vmatprep.subr.mxu0 0.0
  %1513 = vmatpush1.msra.mxu0 0.0
  %1514 = vmatprep.subr.mxu0 0.0
  %1515 = vmatpush1.msra.mxu0 0.0
  %1516 = vmatprep.subr.mxu0 0.0
  %1517 = vmatpush1.msra.mxu0 0.0
  %1518 = vmatprep.subr.mxu0 0.0
  %1519 = vmatpush1.msra.mxu0 0.0
  %1520 = vmatprep.subr.mxu0 0.0
  %1521 = vmatpush1.msra.mxu0 0.0
  %1522 = vmatprep.subr.mxu0 0.0
  %1523 = vmatpush1.msra.mxu0 0.0
  %1524 = vmatprep.subr.mxu0 0.0
  %1525 = vmatpush1.msra.mxu0 0.0
  %1526 = vmatprep.subr.mxu0 0.0
  %1527 = vmatpush1.msra.mxu0 0.0
  %1528 = vmatprep.subr.mxu0 0.0
  %1529 = vmatpush1.msra.mxu0 0.0
  %1530 = vmatprep.subr.mxu0 0.0
  %1531 = vmatpush1.msra.mxu0 0.0
  %1532 = vmatprep.subr.mxu0 0.0
  %1533 = vmatpush1.msra.mxu0 0.0
  %1534 = vmatprep.subr.mxu0 0.0
  %1535 = vmatpush1.msra.mxu0 0.0
  %1536 = vmatprep.subr.mxu0 0.0
  %1537 = vmatpush1.msra.mxu0 0.0
  %1538 = vmatprep.subr.mxu0 0.0
  %1539 = vmatpush1.msra.mxu0 0.0
  %1540 = vmatprep.subr.mxu0 0.0
  %1541 = vmatpush1.msra.mxu0 0.0
  %1542 = vmatprep.subr.mxu0 0.0
  %1543 = vmatpush1.msra.mxu0 0.0
  %1544 = vmatprep.subr.mxu0 0.0
  %1545 = vmatpush1.msra.mxu0 0.0
  %1546 = vmatprep.subr.mxu0 0.0
  %1547 = vmatpush1.msra.mxu0 0.0
  %1548 = vmatprep.subr.mxu0 0.0
  %1549 = vmatpush1.msra.mxu0 0.0
  %1550 = vmatprep.subr.mxu0 0.0
  %1551 = vmatpush1.msra.mxu0 0.0
  %1552 = vmatprep.subr.mxu0 0.0
  %1553 = vmatpush1.msra.mxu0 0.0
  %1554 = vmatprep.subr.mxu0 0.0
  %1555 = vmatpush1.msra.mxu0 0.0
  %1556 = vmatprep.subr.mxu0 0.0
  %1557 = vmatpush1.msra.mxu0 0.0
  %1558 = vmatprep.subr.mxu0 0.0
  %1559 = vmatpush1.msra.mxu0 0.0
  %1560 = vmatprep.subr.mxu0 0.0
  %1561 = vmatpush1.msra.mxu0 0.0
  %1562 = vmatprep.mubr.f32.mxu0 0.0
  %1563 = vmatmul.mubr.f32.gmra.mrb[0].mxu0 %v1493
  %v1564 = vpop.f32.mrb[0].mxu0
  %v1565 = vadd.f32 %v1490, %v1564
  %v1566 = vpop.f32.mrb[0].mxu0
  %1567 = vmatprep.mubr.f32.mxu0 0.0
  %1568 = vmatmul.mubr.f32.gmra.mrb[0].mxu0 %v1496
  %v1569 = vpop.f32.mrb[0].mxu0
  %v1570 = vadd.f32 %v1490, %v1569
  %v1571 = vpop.f32.mrb[0].mxu0
  %1572 = vdwg.mxu0
  %s1573 = scalar_lea.vmem %s9, 32
  %v1574 = vld [vmem:[%s1573] sm:$0xff]
  %v1575 = vld [vmem:[%s1573 + $0x8] sm:$0xff]
  %v1576 = vld [vmem:[%s1573 + $0x10] sm:$0xff]
  %v1577 = vld [vmem:[%s1573 + $0x18] sm:$0xff]
  %1579 = vrot.lane.b32.xlu0 %v1565, 96
  %v1580 = vpop.permute.xlu0 %1579
  %v1581 = vsel %vm333, %v1565, 0
  %v1583 = vsel %vm333, %v1580, 0
  %1585 = vmatprep.subr.mxu0 0.0
  %1586 = vmatpush1.xpose.msra.mxu0 %v1583
  %1587 = vmatprep.subr.mxu0 0.0
  %1588 = vmatpush1.xpose.msra.mxu0 0.0
  %1589 = vmatprep.subr.mxu0 0.0
  %1590 = vmatpush1.xpose.msra.mxu0 0.0
  %1591 = vmatprep.subr.mxu0 0.0
  %1592 = vmatpush1.xpose.msra.mxu0 0.0
  %1593 = vmatprep.subr.mxu0 0.0
  %1594 = vmatpush1.xpose.msra.mxu0 0.0
  %1595 = vmatprep.subr.mxu0 0.0
  %1596 = vmatpush1.xpose.msra.mxu0 0.0
  %1597 = vmatprep.subr.mxu0 0.0
  %1598 = vmatpush1.xpose.msra.mxu0 0.0
  %1599 = vmatprep.subr.mxu0 0.0
  %1600 = vmatpush1.xpose.msra.mxu0 0.0
  %1601 = vmatprep.subr.mxu0 0.0
  %1602 = vmatpush1.xpose.msra.mxu0 0.0
  %1603 = vmatprep.subr.mxu0 0.0
  %1604 = vmatpush1.xpose.msra.mxu0 0.0
  %1605 = vmatprep.subr.mxu0 0.0
  %1606 = vmatpush1.xpose.msra.mxu0 0.0
  %1607 = vmatprep.subr.mxu0 0.0
  %1608 = vmatpush1.xpose.msra.mxu0 0.0
  %1609 = vmatprep.subr.mxu0 0.0
  %1610 = vmatpush1.xpose.msra.mxu0 0.0
  %1611 = vmatprep.subr.mxu0 0.0
  %1612 = vmatpush1.xpose.msra.mxu0 0.0
  %1613 = vmatprep.subr.mxu0 0.0
  %1614 = vmatpush1.xpose.msra.mxu0 0.0
  %1615 = vmatprep.subr.mxu0 0.0
  %1616 = vmatpush1.xpose.msra.mxu0 0.0
  %1617 = vmatprep.subr.mxu0 0.0
  %1618 = vmatpush1.xpose.msra.mxu0 0.0
  %1619 = vmatprep.subr.mxu0 0.0
  %1620 = vmatpush1.xpose.msra.mxu0 0.0
  %1621 = vmatprep.subr.mxu0 0.0
  %1622 = vmatpush1.xpose.msra.mxu0 0.0
  %1623 = vmatprep.subr.mxu0 0.0
  %1624 = vmatpush1.xpose.msra.mxu0 0.0
  %1625 = vmatprep.subr.mxu0 0.0
  %1626 = vmatpush1.xpose.msra.mxu0 0.0
  %1627 = vmatprep.subr.mxu0 0.0
  %1628 = vmatpush1.xpose.msra.mxu0 0.0
  %1629 = vmatprep.subr.mxu0 0.0
  %1630 = vmatpush1.xpose.msra.mxu0 0.0
  %1631 = vmatprep.subr.mxu0 0.0
  %1632 = vmatpush1.xpose.msra.mxu0 0.0
  %1633 = vmatprep.subr.mxu0 0.0
  %1634 = vmatpush1.xpose.msra.mxu0 0.0
  %1635 = vmatprep.subr.mxu0 0.0
  %1636 = vmatpush1.xpose.msra.mxu0 0.0
  %1637 = vmatprep.subr.mxu0 0.0
  %1638 = vmatpush1.xpose.msra.mxu0 0.0
  %1639 = vmatprep.subr.mxu0 0.0
  %1640 = vmatpush1.xpose.msra.mxu0 0.0
  %1641 = vmatprep.subr.mxu0 0.0
  %1642 = vmatpush1.xpose.msra.mxu0 0.0
  %1643 = vmatprep.subr.mxu0 0.0
  %1644 = vmatpush1.xpose.msra.mxu0 0.0
  %1645 = vmatprep.subr.mxu0 0.0
  %1646 = vmatpush1.xpose.msra.mxu0 0.0
  %1647 = vmatprep.subr.mxu0 0.0
  %1648 = vmatpush1.xpose.msra.mxu0 0.0
  %1649 = vmatprep.mubr.f32.mxu0 0.0
  %1650 = vmatmul.mubr.f32.gmra.mrb[0].mxu0 %v1581
  %v1651 = vpop.f32.mrb[0].mxu0
  %v1652 = vadd.f32 0.0, %v1651
  %v1653 = vpop.f32.mrb[0].mxu0
  %1654 = vdwg.mxu0
  %1656 = vrot.lane.b32.xlu0 %v1570, 96
  %v1657 = vpop.permute.xlu0 %1656
  %v1658 = vsel %vm333, %v1570, 0
  %v1660 = vsel %vm333, %v1657, 0
  %1662 = vmatprep.subr.mxu0 0.0
  %1663 = vmatpush1.xpose.msra.mxu0 %v1660
  %1664 = vmatprep.subr.mxu0 0.0
  %1665 = vmatpush1.xpose.msra.mxu0 0.0
  %1666 = vmatprep.subr.mxu0 0.0
  %1667 = vmatpush1.xpose.msra.mxu0 0.0
  %1668 = vmatprep.subr.mxu0 0.0
  %1669 = vmatpush1.xpose.msra.mxu0 0.0
  %1670 = vmatprep.subr.mxu0 0.0
  %1671 = vmatpush1.xpose.msra.mxu0 0.0
  %1672 = vmatprep.subr.mxu0 0.0
  %1673 = vmatpush1.xpose.msra.mxu0 0.0
  %1674 = vmatprep.subr.mxu0 0.0
  %1675 = vmatpush1.xpose.msra.mxu0 0.0
  %1676 = vmatprep.subr.mxu0 0.0
  %1677 = vmatpush1.xpose.msra.mxu0 0.0
  %1678 = vmatprep.subr.mxu0 0.0
  %1679 = vmatpush1.xpose.msra.mxu0 0.0
  %1680 = vmatprep.subr.mxu0 0.0
  %1681 = vmatpush1.xpose.msra.mxu0 0.0
  %1682 = vmatprep.subr.mxu0 0.0
  %1683 = vmatpush1.xpose.msra.mxu0 0.0
  %1684 = vmatprep.subr.mxu0 0.0
  %1685 = vmatpush1.xpose.msra.mxu0 0.0
  %1686 = vmatprep.subr.mxu0 0.0
  %1687 = vmatpush1.xpose.msra.mxu0 0.0
  %1688 = vmatprep.subr.mxu0 0.0
  %1689 = vmatpush1.xpose.msra.mxu0 0.0
  %1690 = vmatprep.subr.mxu0 0.0
  %1691 = vmatpush1.xpose.msra.mxu0 0.0
  %1692 = vmatprep.subr.mxu0 0.0
  %1693 = vmatpush1.xpose.msra.mxu0 0.0
  %1694 = vmatprep.subr.mxu0 0.0
  %1695 = vmatpush1.xpose.msra.mxu0 0.0
  %1696 = vmatprep.subr.mxu0 0.0
  %1697 = vmatpush1.xpose.msra.mxu0 0.0
  %1698 = vmatprep.subr.mxu0 0.0
  %1699 = vmatpush1.xpose.msra.mxu0 0.0
  %1700 = vmatprep.subr.mxu0 0.0
  %1701 = vmatpush1.xpose.msra.mxu0 0.0
  %1702 = vmatprep.subr.mxu0 0.0
  %1703 = vmatpush1.xpose.msra.mxu0 0.0
  %1704 = vmatprep.subr.mxu0 0.0
  %1705 = vmatpush1.xpose.msra.mxu0 0.0
  %1706 = vmatprep.subr.mxu0 0.0
  %1707 = vmatpush1.xpose.msra.mxu0 0.0
  %1708 = vmatprep.subr.mxu0 0.0
  %1709 = vmatpush1.xpose.msra.mxu0 0.0
  %1710 = vmatprep.subr.mxu0 0.0
  %1711 = vmatpush1.xpose.msra.mxu0 0.0
  %1712 = vmatprep.subr.mxu0 0.0
  %1713 = vmatpush1.xpose.msra.mxu0 0.0
  %1714 = vmatprep.subr.mxu0 0.0
  %1715 = vmatpush1.xpose.msra.mxu0 0.0
  %1716 = vmatprep.subr.mxu0 0.0
  %1717 = vmatpush1.xpose.msra.mxu0 0.0
  %1718 = vmatprep.subr.mxu0 0.0
  %1719 = vmatpush1.xpose.msra.mxu0 0.0
  %1720 = vmatprep.subr.mxu0 0.0
  %1721 = vmatpush1.xpose.msra.mxu0 0.0
  %1722 = vmatprep.subr.mxu0 0.0
  %1723 = vmatpush1.xpose.msra.mxu0 0.0
  %1724 = vmatprep.subr.mxu0 0.0
  %1725 = vmatpush1.xpose.msra.mxu0 0.0
  %1726 = vmatprep.mubr.f32.mxu0 0.0
  %1727 = vmatmul.mubr.f32.gmra.mrb[0].mxu0 %v1658
  %v1728 = vpop.f32.mrb[0].mxu0
  %v1729 = vadd.f32 0.0, %v1728
  %v1730 = vpop.f32.mrb[0].mxu0
  %1731 = vdwg.mxu0
  %v1732 = vmul.f32 %v1652, 0.25
  %v1733 = vmul.f32 %v1729, 0.25
  %v1734 = vadd.f32 %v1732, %v492
  %v1735 = vadd.f32 %v1733, %v496
  %v1736 = vsel %vm501, %v1734, -inf
  %1737 = vmax.xlane.f32.xlu0 %v1736
  %v1738 = vpop.xlane.xlu0 %1737
  %v1739 = vsel %vm501, %v1735, -inf
  %1740 = vmax.xlane.f32.xlu0 %v1739
  %v1741 = vpop.xlane.xlu0 %1740
  %v1742 = vsub.f32 %v1734, %v1738
  %v1743 = vsub.f32 %v1735, %v1741
  %v1744 = vmul.f32 %v1742, 1.442695
  %v1745 = vpow.pop %v1744
  %v1746 = vmul.f32 %v1743, 1.442695
  %v1747 = vpow.pop %v1746
  %v1748 = vsel %vm501, %v1745, 0.0
  %1749 = vadd.xlane.f32.xlu0 %v1748
  %v1750 = vpop.xlane.xlu0 %1749
  %v1751 = vsel %vm501, %v1747, 0.0
  %1752 = vadd.xlane.f32.xlu0 %v1751
  %v1753 = vpop.xlane.xlu0 %1752
  %v1754 = vrcp.pop %v1750
  %v1755 = vrcp.pop %v1753
  %v1756 = vmul.f32 %v1745, %v1754
  %v1757 = vmul.f32 %v1747, %v1755
  %1758 = vrot.lane.b32.xlu0 %v1565, 64
  %v1759 = vpop.permute.xlu0 %1758
  %v1762 = vsel %vm501, %v1756, 0
  %1764 = vmatprep.subr.mxu0 0.0
  %1765 = vmatpush1.msra.mxu0 %v1759
  %1766 = vmatprep.subr.mxu0 0.0
  %1767 = vmatpush1.msra.mxu0 0.0
  %1768 = vmatprep.subr.mxu0 0.0
  %1769 = vmatpush1.msra.mxu0 0.0
  %1770 = vmatprep.subr.mxu0 0.0
  %1771 = vmatpush1.msra.mxu0 0.0
  %1772 = vmatprep.subr.mxu0 0.0
  %1773 = vmatpush1.msra.mxu0 0.0
  %1774 = vmatprep.subr.mxu0 0.0
  %1775 = vmatpush1.msra.mxu0 0.0
  %1776 = vmatprep.subr.mxu0 0.0
  %1777 = vmatpush1.msra.mxu0 0.0
  %1778 = vmatprep.subr.mxu0 0.0
  %1779 = vmatpush1.msra.mxu0 0.0
  %1780 = vmatprep.subr.mxu0 0.0
  %1781 = vmatpush1.msra.mxu0 0.0
  %1782 = vmatprep.subr.mxu0 0.0
  %1783 = vmatpush1.msra.mxu0 0.0
  %1784 = vmatprep.subr.mxu0 0.0
  %1785 = vmatpush1.msra.mxu0 0.0
  %1786 = vmatprep.subr.mxu0 0.0
  %1787 = vmatpush1.msra.mxu0 0.0
  %1788 = vmatprep.subr.mxu0 0.0
  %1789 = vmatpush1.msra.mxu0 0.0
  %1790 = vmatprep.subr.mxu0 0.0
  %1791 = vmatpush1.msra.mxu0 0.0
  %1792 = vmatprep.subr.mxu0 0.0
  %1793 = vmatpush1.msra.mxu0 0.0
  %1794 = vmatprep.subr.mxu0 0.0
  %1795 = vmatpush1.msra.mxu0 0.0
  %1796 = vmatprep.subr.mxu0 0.0
  %1797 = vmatpush1.msra.mxu0 0.0
  %1798 = vmatprep.subr.mxu0 0.0
  %1799 = vmatpush1.msra.mxu0 0.0
  %1800 = vmatprep.subr.mxu0 0.0
  %1801 = vmatpush1.msra.mxu0 0.0
  %1802 = vmatprep.subr.mxu0 0.0
  %1803 = vmatpush1.msra.mxu0 0.0
  %1804 = vmatprep.subr.mxu0 0.0
  %1805 = vmatpush1.msra.mxu0 0.0
  %1806 = vmatprep.subr.mxu0 0.0
  %1807 = vmatpush1.msra.mxu0 0.0
  %1808 = vmatprep.subr.mxu0 0.0
  %1809 = vmatpush1.msra.mxu0 0.0
  %1810 = vmatprep.subr.mxu0 0.0
  %1811 = vmatpush1.msra.mxu0 0.0
  %1812 = vmatprep.subr.mxu0 0.0
  %1813 = vmatpush1.msra.mxu0 0.0
  %1814 = vmatprep.subr.mxu0 0.0
  %1815 = vmatpush1.msra.mxu0 0.0
  %1816 = vmatprep.subr.mxu0 0.0
  %1817 = vmatpush1.msra.mxu0 0.0
  %1818 = vmatprep.subr.mxu0 0.0
  %1819 = vmatpush1.msra.mxu0 0.0
  %1820 = vmatprep.subr.mxu0 0.0
  %1821 = vmatpush1.msra.mxu0 0.0
  %1822 = vmatprep.subr.mxu0 0.0
  %1823 = vmatpush1.msra.mxu0 0.0
  %1824 = vmatprep.subr.mxu0 0.0
  %1825 = vmatpush1.msra.mxu0 0.0
  %1826 = vmatprep.subr.mxu0 0.0
  %1827 = vmatpush1.msra.mxu0 0.0
  %1828 = vmatprep.mubr.f32.mxu0 0.0
  %1829 = vmatmul.mubr.f32.gmra.mrb[0].mxu0 %v1762
  %v1830 = vpop.f32.mrb[0].mxu0
  %v1831 = vadd.f32 0.0, %v1830
  %v1832 = vpop.f32.mrb[0].mxu0
  %1833 = vdwg.mxu0
  %1834 = vrot.lane.b32.xlu0 %v1570, 64
  %v1835 = vpop.permute.xlu0 %1834
  %v1838 = vsel %vm501, %v1757, 0
  %1840 = vmatprep.subr.mxu0 0.0
  %1841 = vmatpush1.msra.mxu0 %v1835
  %1842 = vmatprep.subr.mxu0 0.0
  %1843 = vmatpush1.msra.mxu0 0.0
  %1844 = vmatprep.subr.mxu0 0.0
  %1845 = vmatpush1.msra.mxu0 0.0
  %1846 = vmatprep.subr.mxu0 0.0
  %1847 = vmatpush1.msra.mxu0 0.0
  %1848 = vmatprep.subr.mxu0 0.0
  %1849 = vmatpush1.msra.mxu0 0.0
  %1850 = vmatprep.subr.mxu0 0.0
  %1851 = vmatpush1.msra.mxu0 0.0
  %1852 = vmatprep.subr.mxu0 0.0
  %1853 = vmatpush1.msra.mxu0 0.0
  %1854 = vmatprep.subr.mxu0 0.0
  %1855 = vmatpush1.msra.mxu0 0.0
  %1856 = vmatprep.subr.mxu0 0.0
  %1857 = vmatpush1.msra.mxu0 0.0
  %1858 = vmatprep.subr.mxu0 0.0
  %1859 = vmatpush1.msra.mxu0 0.0
  %1860 = vmatprep.subr.mxu0 0.0
  %1861 = vmatpush1.msra.mxu0 0.0
  %1862 = vmatprep.subr.mxu0 0.0
  %1863 = vmatpush1.msra.mxu0 0.0
  %1864 = vmatprep.subr.mxu0 0.0
  %1865 = vmatpush1.msra.mxu0 0.0
  %1866 = vmatprep.subr.mxu0 0.0
  %1867 = vmatpush1.msra.mxu0 0.0
  %1868 = vmatprep.subr.mxu0 0.0
  %1869 = vmatpush1.msra.mxu0 0.0
  %1870 = vmatprep.subr.mxu0 0.0
  %1871 = vmatpush1.msra.mxu0 0.0
  %1872 = vmatprep.subr.mxu0 0.0
  %1873 = vmatpush1.msra.mxu0 0.0
  %1874 = vmatprep.subr.mxu0 0.0
  %1875 = vmatpush1.msra.mxu0 0.0
  %1876 = vmatprep.subr.mxu0 0.0
  %1877 = vmatpush1.msra.mxu0 0.0
  %1878 = vmatprep.subr.mxu0 0.0
  %1879 = vmatpush1.msra.mxu0 0.0
  %1880 = vmatprep.subr.mxu0 0.0
  %1881 = vmatpush1.msra.mxu0 0.0
  %1882 = vmatprep.subr.mxu0 0.0
  %1883 = vmatpush1.msra.mxu0 0.0
  %1884 = vmatprep.subr.mxu0 0.0
  %1885 = vmatpush1.msra.mxu0 0.0
  %1886 = vmatprep.subr.mxu0 0.0
  %1887 = vmatpush1.msra.mxu0 0.0
  %1888 = vmatprep.subr.mxu0 0.0
  %1889 = vmatpush1.msra.mxu0 0.0
  %1890 = vmatprep.subr.mxu0 0.0
  %1891 = vmatpush1.msra.mxu0 0.0
  %1892 = vmatprep.subr.mxu0 0.0
  %1893 = vmatpush1.msra.mxu0 0.0
  %1894 = vmatprep.subr.mxu0 0.0
  %1895 = vmatpush1.msra.mxu0 0.0
  %1896 = vmatprep.subr.mxu0 0.0
  %1897 = vmatpush1.msra.mxu0 0.0
  %1898 = vmatprep.subr.mxu0 0.0
  %1899 = vmatpush1.msra.mxu0 0.0
  %1900 = vmatprep.subr.mxu0 0.0
  %1901 = vmatpush1.msra.mxu0 0.0
  %1902 = vmatprep.subr.mxu0 0.0
  %1903 = vmatpush1.msra.mxu0 0.0
  %1904 = vmatprep.mubr.f32.mxu0 0.0
  %1905 = vmatmul.mubr.f32.gmra.mrb[0].mxu0 %v1838
  %v1906 = vpop.f32.mrb[0].mxu0
  %v1907 = vadd.f32 0.0, %v1906
  %v1908 = vpop.f32.mrb[0].mxu0
  %1909 = vdwg.mxu0
  %1910 = vrot.lane.b32.xlu0 %v1565, 112
  %v1911 = vpop.permute.xlu0 %1910
  %1912 = vrot.lane.b32.xlu0 %v1565, 80
  %v1913 = vpop.permute.xlu0 %1912
  %v1914 = vsel %vm333, %v1911, 0
  %v1916 = vsel %vm333, %v1913, 0
  %1918 = vmatprep.subr.mxu0 0.0
  %1919 = vmatpush1.xpose.msra.mxu0 %v1916
  %1920 = vmatprep.subr.mxu0 0.0
  %1921 = vmatpush1.xpose.msra.mxu0 0.0
  %1922 = vmatprep.subr.mxu0 0.0
  %1923 = vmatpush1.xpose.msra.mxu0 0.0
  %1924 = vmatprep.subr.mxu0 0.0
  %1925 = vmatpush1.xpose.msra.mxu0 0.0
  %1926 = vmatprep.subr.mxu0 0.0
  %1927 = vmatpush1.xpose.msra.mxu0 0.0
  %1928 = vmatprep.subr.mxu0 0.0
  %1929 = vmatpush1.xpose.msra.mxu0 0.0
  %1930 = vmatprep.subr.mxu0 0.0
  %1931 = vmatpush1.xpose.msra.mxu0 0.0
  %1932 = vmatprep.subr.mxu0 0.0
  %1933 = vmatpush1.xpose.msra.mxu0 0.0
  %1934 = vmatprep.subr.mxu0 0.0
  %1935 = vmatpush1.xpose.msra.mxu0 0.0
  %1936 = vmatprep.subr.mxu0 0.0
  %1937 = vmatpush1.xpose.msra.mxu0 0.0
  %1938 = vmatprep.subr.mxu0 0.0
  %1939 = vmatpush1.xpose.msra.mxu0 0.0
  %1940 = vmatprep.subr.mxu0 0.0
  %1941 = vmatpush1.xpose.msra.mxu0 0.0
  %1942 = vmatprep.subr.mxu0 0.0
  %1943 = vmatpush1.xpose.msra.mxu0 0.0
  %1944 = vmatprep.subr.mxu0 0.0
  %1945 = vmatpush1.xpose.msra.mxu0 0.0
  %1946 = vmatprep.subr.mxu0 0.0
  %1947 = vmatpush1.xpose.msra.mxu0 0.0
  %1948 = vmatprep.subr.mxu0 0.0
  %1949 = vmatpush1.xpose.msra.mxu0 0.0
  %1950 = vmatprep.subr.mxu0 0.0
  %1951 = vmatpush1.xpose.msra.mxu0 0.0
  %1952 = vmatprep.subr.mxu0 0.0
  %1953 = vmatpush1.xpose.msra.mxu0 0.0
  %1954 = vmatprep.subr.mxu0 0.0
  %1955 = vmatpush1.xpose.msra.mxu0 0.0
  %1956 = vmatprep.subr.mxu0 0.0
  %1957 = vmatpush1.xpose.msra.mxu0 0.0
  %1958 = vmatprep.subr.mxu0 0.0
  %1959 = vmatpush1.xpose.msra.mxu0 0.0
  %1960 = vmatprep.subr.mxu0 0.0
  %1961 = vmatpush1.xpose.msra.mxu0 0.0
  %1962 = vmatprep.subr.mxu0 0.0
  %1963 = vmatpush1.xpose.msra.mxu0 0.0
  %1964 = vmatprep.subr.mxu0 0.0
  %1965 = vmatpush1.xpose.msra.mxu0 0.0
  %1966 = vmatprep.subr.mxu0 0.0
  %1967 = vmatpush1.xpose.msra.mxu0 0.0
  %1968 = vmatprep.subr.mxu0 0.0
  %1969 = vmatpush1.xpose.msra.mxu0 0.0
  %1970 = vmatprep.subr.mxu0 0.0
  %1971 = vmatpush1.xpose.msra.mxu0 0.0
  %1972 = vmatprep.subr.mxu0 0.0
  %1973 = vmatpush1.xpose.msra.mxu0 0.0
  %1974 = vmatprep.subr.mxu0 0.0
  %1975 = vmatpush1.xpose.msra.mxu0 0.0
  %1976 = vmatprep.subr.mxu0 0.0
  %1977 = vmatpush1.xpose.msra.mxu0 0.0
  %1978 = vmatprep.subr.mxu0 0.0
  %1979 = vmatpush1.xpose.msra.mxu0 0.0
  %1980 = vmatprep.subr.mxu0 0.0
  %1981 = vmatpush1.xpose.msra.mxu0 0.0
  %1982 = vmatprep.mubr.f32.mxu0 0.0
  %1983 = vmatmul.mubr.f32.gmra.mrb[0].mxu0 %v1914
  %v1984 = vpop.f32.mrb[0].mxu0
  %v1985 = vadd.f32 0.0, %v1984
  %v1986 = vpop.f32.mrb[0].mxu0
  %1987 = vdwg.mxu0
  %1988 = vrot.lane.b32.xlu0 %v1570, 112
  %v1989 = vpop.permute.xlu0 %1988
  %1990 = vrot.lane.b32.xlu0 %v1570, 80
  %v1991 = vpop.permute.xlu0 %1990
  %v1992 = vsel %vm333, %v1989, 0
  %v1994 = vsel %vm333, %v1991, 0
  %1996 = vmatprep.subr.mxu0 0.0
  %1997 = vmatpush1.xpose.msra.mxu0 %v1994
  %1998 = vmatprep.subr.mxu0 0.0
  %1999 = vmatpush1.xpose.msra.mxu0 0.0
  %2000 = vmatprep.subr.mxu0 0.0
  %2001 = vmatpush1.xpose.msra.mxu0 0.0
  %2002 = vmatprep.subr.mxu0 0.0
  %2003 = vmatpush1.xpose.msra.mxu0 0.0
  %2004 = vmatprep.subr.mxu0 0.0
  %2005 = vmatpush1.xpose.msra.mxu0 0.0
  %2006 = vmatprep.subr.mxu0 0.0
  %2007 = vmatpush1.xpose.msra.mxu0 0.0
  %2008 = vmatprep.subr.mxu0 0.0
  %2009 = vmatpush1.xpose.msra.mxu0 0.0
  %2010 = vmatprep.subr.mxu0 0.0
  %2011 = vmatpush1.xpose.msra.mxu0 0.0
  %2012 = vmatprep.subr.mxu0 0.0
  %2013 = vmatpush1.xpose.msra.mxu0 0.0
  %2014 = vmatprep.subr.mxu0 0.0
  %2015 = vmatpush1.xpose.msra.mxu0 0.0
  %2016 = vmatprep.subr.mxu0 0.0
  %2017 = vmatpush1.xpose.msra.mxu0 0.0
  %2018 = vmatprep.subr.mxu0 0.0
  %2019 = vmatpush1.xpose.msra.mxu0 0.0
  %2020 = vmatprep.subr.mxu0 0.0
  %2021 = vmatpush1.xpose.msra.mxu0 0.0
  %2022 = vmatprep.subr.mxu0 0.0
  %2023 = vmatpush1.xpose.msra.mxu0 0.0
  %2024 = vmatprep.subr.mxu0 0.0
  %2025 = vmatpush1.xpose.msra.mxu0 0.0
  %2026 = vmatprep.subr.mxu0 0.0
  %2027 = vmatpush1.xpose.msra.mxu0 0.0
  %2028 = vmatprep.subr.mxu0 0.0
  %2029 = vmatpush1.xpose.msra.mxu0 0.0
  %2030 = vmatprep.subr.mxu0 0.0
  %2031 = vmatpush1.xpose.msra.mxu0 0.0
  %2032 = vmatprep.subr.mxu0 0.0
  %2033 = vmatpush1.xpose.msra.mxu0 0.0
  %2034 = vmatprep.subr.mxu0 0.0
  %2035 = vmatpush1.xpose.msra.mxu0 0.0
  %2036 = vmatprep.subr.mxu0 0.0
  %2037 = vmatpush1.xpose.msra.mxu0 0.0
  %2038 = vmatprep.subr.mxu0 0.0
  %2039 = vmatpush1.xpose.msra.mxu0 0.0
  %2040 = vmatprep.subr.mxu0 0.0
  %2041 = vmatpush1.xpose.msra.mxu0 0.0
  %2042 = vmatprep.subr.mxu0 0.0
  %2043 = vmatpush1.xpose.msra.mxu0 0.0
  %2044 = vmatprep.subr.mxu0 0.0
  %2045 = vmatpush1.xpose.msra.mxu0 0.0
  %2046 = vmatprep.subr.mxu0 0.0
  %2047 = vmatpush1.xpose.msra.mxu0 0.0
  %2048 = vmatprep.subr.mxu0 0.0
  %2049 = vmatpush1.xpose.msra.mxu0 0.0
  %2050 = vmatprep.subr.mxu0 0.0
  %2051 = vmatpush1.xpose.msra.mxu0 0.0
  %2052 = vmatprep.subr.mxu0 0.0
  %2053 = vmatpush1.xpose.msra.mxu0 0.0
  %2054 = vmatprep.subr.mxu0 0.0
  %2055 = vmatpush1.xpose.msra.mxu0 0.0
  %2056 = vmatprep.subr.mxu0 0.0
  %2057 = vmatpush1.xpose.msra.mxu0 0.0
  %2058 = vmatprep.subr.mxu0 0.0
  %2059 = vmatpush1.xpose.msra.mxu0 0.0
  %2060 = vmatprep.mubr.f32.mxu0 0.0
  %2061 = vmatmul.mubr.f32.gmra.mrb[0].mxu0 %v1992
  %v2062 = vpop.f32.mrb[0].mxu0
  %v2063 = vadd.f32 0.0, %v2062
  %v2064 = vpop.f32.mrb[0].mxu0
  %2065 = vdwg.mxu0
  %v2066 = vmul.f32 %v1985, 0.25
  %v2067 = vmul.f32 %v2063, 0.25
  %v2068 = vadd.f32 %v2066, %v492
  %v2069 = vadd.f32 %v2067, %v496
  %v2070 = vsel %vm501, %v2068, -inf
  %2071 = vmax.xlane.f32.xlu0 %v2070
  %v2072 = vpop.xlane.xlu0 %2071
  %v2073 = vsel %vm501, %v2069, -inf
  %2074 = vmax.xlane.f32.xlu0 %v2073
  %v2075 = vpop.xlane.xlu0 %2074
  %v2076 = vsub.f32 %v2068, %v2072
  %v2077 = vsub.f32 %v2069, %v2075
  %v2078 = vmul.f32 %v2076, 1.442695
  %v2079 = vpow.pop %v2078
  %v2080 = vmul.f32 %v2077, 1.442695
  %v2081 = vpow.pop %v2080
  %v2082 = vsel %vm501, %v2079, 0.0
  %2083 = vadd.xlane.f32.xlu0 %v2082
  %v2084 = vpop.xlane.xlu0 %2083
  %v2085 = vsel %vm501, %v2081, 0.0
  %2086 = vadd.xlane.f32.xlu0 %v2085
  %v2087 = vpop.xlane.xlu0 %2086
  %v2088 = vrcp.pop %v2084
  %v2089 = vrcp.pop %v2087
  %v2090 = vmul.f32 %v2079, %v2088
  %v2091 = vmul.f32 %v2081, %v2089
  %2092 = vrot.lane.b32.xlu0 %v1565, 48
  %v2093 = vpop.permute.xlu0 %2092
  %v2096 = vsel %vm501, %v2090, 0
  %2098 = vmatprep.subr.mxu0 0.0
  %2099 = vmatpush1.msra.mxu0 %v2093
  %2100 = vmatprep.subr.mxu0 0.0
  %2101 = vmatpush1.msra.mxu0 0.0
  %2102 = vmatprep.subr.mxu0 0.0
  %2103 = vmatpush1.msra.mxu0 0.0
  %2104 = vmatprep.subr.mxu0 0.0
  %2105 = vmatpush1.msra.mxu0 0.0
  %2106 = vmatprep.subr.mxu0 0.0
  %2107 = vmatpush1.msra.mxu0 0.0
  %2108 = vmatprep.subr.mxu0 0.0
  %2109 = vmatpush1.msra.mxu0 0.0
  %2110 = vmatprep.subr.mxu0 0.0
  %2111 = vmatpush1.msra.mxu0 0.0
  %2112 = vmatprep.subr.mxu0 0.0
  %2113 = vmatpush1.msra.mxu0 0.0
  %2114 = vmatprep.subr.mxu0 0.0
  %2115 = vmatpush1.msra.mxu0 0.0
  %2116 = vmatprep.subr.mxu0 0.0
  %2117 = vmatpush1.msra.mxu0 0.0
  %2118 = vmatprep.subr.mxu0 0.0
  %2119 = vmatpush1.msra.mxu0 0.0
  %2120 = vmatprep.subr.mxu0 0.0
  %2121 = vmatpush1.msra.mxu0 0.0
  %2122 = vmatprep.subr.mxu0 0.0
  %2123 = vmatpush1.msra.mxu0 0.0
  %2124 = vmatprep.subr.mxu0 0.0
  %2125 = vmatpush1.msra.mxu0 0.0
  %2126 = vmatprep.subr.mxu0 0.0
  %2127 = vmatpush1.msra.mxu0 0.0
  %2128 = vmatprep.subr.mxu0 0.0
  %2129 = vmatpush1.msra.mxu0 0.0
  %2130 = vmatprep.subr.mxu0 0.0
  %2131 = vmatpush1.msra.mxu0 0.0
  %2132 = vmatprep.subr.mxu0 0.0
  %2133 = vmatpush1.msra.mxu0 0.0
  %2134 = vmatprep.subr.mxu0 0.0
  %2135 = vmatpush1.msra.mxu0 0.0
  %2136 = vmatprep.subr.mxu0 0.0
  %2137 = vmatpush1.msra.mxu0 0.0
  %2138 = vmatprep.subr.mxu0 0.0
  %2139 = vmatpush1.msra.mxu0 0.0
  %2140 = vmatprep.subr.mxu0 0.0
  %2141 = vmatpush1.msra.mxu0 0.0
  %2142 = vmatprep.subr.mxu0 0.0
  %2143 = vmatpush1.msra.mxu0 0.0
  %2144 = vmatprep.subr.mxu0 0.0
  %2145 = vmatpush1.msra.mxu0 0.0
  %2146 = vmatprep.subr.mxu0 0.0
  %2147 = vmatpush1.msra.mxu0 0.0
  %2148 = vmatprep.subr.mxu0 0.0
  %2149 = vmatpush1.msra.mxu0 0.0
  %2150 = vmatprep.subr.mxu0 0.0
  %2151 = vmatpush1.msra.mxu0 0.0
  %2152 = vmatprep.subr.mxu0 0.0
  %2153 = vmatpush1.msra.mxu0 0.0
  %2154 = vmatprep.subr.mxu0 0.0
  %2155 = vmatpush1.msra.mxu0 0.0
  %2156 = vmatprep.subr.mxu0 0.0
  %2157 = vmatpush1.msra.mxu0 0.0
  %2158 = vmatprep.subr.mxu0 0.0
  %2159 = vmatpush1.msra.mxu0 0.0
  %2160 = vmatprep.subr.mxu0 0.0
  %2161 = vmatpush1.msra.mxu0 0.0
  %2162 = vmatprep.mubr.f32.mxu0 0.0
  %2163 = vmatmul.mubr.f32.gmra.mrb[0].mxu0 %v2096
  %v2164 = vpop.f32.mrb[0].mxu0
  %v2165 = vadd.f32 0.0, %v2164
  %v2166 = vpop.f32.mrb[0].mxu0
  %2167 = vdwg.mxu0
  %2168 = vrot.lane.b32.xlu0 %v1570, 48
  %v2169 = vpop.permute.xlu0 %2168
  %v2172 = vsel %vm501, %v2091, 0
  %2174 = vmatprep.subr.mxu0 0.0
  %2175 = vmatpush1.msra.mxu0 %v2169
  %2176 = vmatprep.subr.mxu0 0.0
  %2177 = vmatpush1.msra.mxu0 0.0
  %2178 = vmatprep.subr.mxu0 0.0
  %2179 = vmatpush1.msra.mxu0 0.0
  %2180 = vmatprep.subr.mxu0 0.0
  %2181 = vmatpush1.msra.mxu0 0.0
  %2182 = vmatprep.subr.mxu0 0.0
  %2183 = vmatpush1.msra.mxu0 0.0
  %2184 = vmatprep.subr.mxu0 0.0
  %2185 = vmatpush1.msra.mxu0 0.0
  %2186 = vmatprep.subr.mxu0 0.0
  %2187 = vmatpush1.msra.mxu0 0.0
  %2188 = vmatprep.subr.mxu0 0.0
  %2189 = vmatpush1.msra.mxu0 0.0
  %2190 = vmatprep.subr.mxu0 0.0
  %2191 = vmatpush1.msra.mxu0 0.0
  %2192 = vmatprep.subr.mxu0 0.0
  %2193 = vmatpush1.msra.mxu0 0.0
  %2194 = vmatprep.subr.mxu0 0.0
  %2195 = vmatpush1.msra.mxu0 0.0
  %2196 = vmatprep.subr.mxu0 0.0
  %2197 = vmatpush1.msra.mxu0 0.0
  %2198 = vmatprep.subr.mxu0 0.0
  %2199 = vmatpush1.msra.mxu0 0.0
  %2200 = vmatprep.subr.mxu0 0.0
  %2201 = vmatpush1.msra.mxu0 0.0
  %2202 = vmatprep.subr.mxu0 0.0
  %2203 = vmatpush1.msra.mxu0 0.0
  %2204 = vmatprep.subr.mxu0 0.0
  %2205 = vmatpush1.msra.mxu0 0.0
  %2206 = vmatprep.subr.mxu0 0.0
  %2207 = vmatpush1.msra.mxu0 0.0
  %2208 = vmatprep.subr.mxu0 0.0
  %2209 = vmatpush1.msra.mxu0 0.0
  %2210 = vmatprep.subr.mxu0 0.0
  %2211 = vmatpush1.msra.mxu0 0.0
  %2212 = vmatprep.subr.mxu0 0.0
  %2213 = vmatpush1.msra.mxu0 0.0
  %2214 = vmatprep.subr.mxu0 0.0
  %2215 = vmatpush1.msra.mxu0 0.0
  %2216 = vmatprep.subr.mxu0 0.0
  %2217 = vmatpush1.msra.mxu0 0.0
  %2218 = vmatprep.subr.mxu0 0.0
  %2219 = vmatpush1.msra.mxu0 0.0
  %2220 = vmatprep.subr.mxu0 0.0
  %2221 = vmatpush1.msra.mxu0 0.0
  %2222 = vmatprep.subr.mxu0 0.0
  %2223 = vmatpush1.msra.mxu0 0.0
  %2224 = vmatprep.subr.mxu0 0.0
  %2225 = vmatpush1.msra.mxu0 0.0
  %2226 = vmatprep.subr.mxu0 0.0
  %2227 = vmatpush1.msra.mxu0 0.0
  %2228 = vmatprep.subr.mxu0 0.0
  %2229 = vmatpush1.msra.mxu0 0.0
  %2230 = vmatprep.subr.mxu0 0.0
  %2231 = vmatpush1.msra.mxu0 0.0
  %2232 = vmatprep.subr.mxu0 0.0
  %2233 = vmatpush1.msra.mxu0 0.0
  %2234 = vmatprep.subr.mxu0 0.0
  %2235 = vmatpush1.msra.mxu0 0.0
  %2236 = vmatprep.subr.mxu0 0.0
  %2237 = vmatpush1.msra.mxu0 0.0
  %2238 = vmatprep.mubr.f32.mxu0 0.0
  %2239 = vmatmul.mubr.f32.gmra.mrb[0].mxu0 %v2172
  %v2240 = vpop.f32.mrb[0].mxu0
  %v2241 = vadd.f32 0.0, %v2240
  %v2242 = vpop.f32.mrb[0].mxu0
  %2243 = vdwg.mxu0
  %v2245 = vsel %vm333, %v2165, 0
  %v2248 = vsel %vm333, %v2241, 0
  %2250 = vmatprep.subr.mxu0 0.0
  %2251 = vmatpush1.msra.mxu0 %v1576
  %2252 = vmatprep.subr.mxu0 0.0
  %2253 = vmatpush1.msra.mxu0 %v1577
  %2254 = vmatprep.subr.mxu0 0.0
  %2255 = vmatpush1.msra.mxu0 0.0
  %2256 = vmatprep.subr.mxu0 0.0
  %2257 = vmatpush1.msra.mxu0 0.0
  %2258 = vmatprep.subr.mxu0 0.0
  %2259 = vmatpush1.msra.mxu0 0.0
  %2260 = vmatprep.subr.mxu0 0.0
  %2261 = vmatpush1.msra.mxu0 0.0
  %2262 = vmatprep.subr.mxu0 0.0
  %2263 = vmatpush1.msra.mxu0 0.0
  %2264 = vmatprep.subr.mxu0 0.0
  %2265 = vmatpush1.msra.mxu0 0.0
  %2266 = vmatprep.subr.mxu0 0.0
  %2267 = vmatpush1.msra.mxu0 0.0
  %2268 = vmatprep.subr.mxu0 0.0
  %2269 = vmatpush1.msra.mxu0 0.0
  %2270 = vmatprep.subr.mxu0 0.0
  %2271 = vmatpush1.msra.mxu0 0.0
  %2272 = vmatprep.subr.mxu0 0.0
  %2273 = vmatpush1.msra.mxu0 0.0
  %2274 = vmatprep.subr.mxu0 0.0
  %2275 = vmatpush1.msra.mxu0 0.0
  %2276 = vmatprep.subr.mxu0 0.0
  %2277 = vmatpush1.msra.mxu0 0.0
  %2278 = vmatprep.subr.mxu0 0.0
  %2279 = vmatpush1.msra.mxu0 0.0
  %2280 = vmatprep.subr.mxu0 0.0
  %2281 = vmatpush1.msra.mxu0 0.0
  %2282 = vmatprep.subr.mxu0 0.0
  %2283 = vmatpush1.msra.mxu0 0.0
  %2284 = vmatprep.subr.mxu0 0.0
  %2285 = vmatpush1.msra.mxu0 0.0
  %2286 = vmatprep.subr.mxu0 0.0
  %2287 = vmatpush1.msra.mxu0 0.0
  %2288 = vmatprep.subr.mxu0 0.0
  %2289 = vmatpush1.msra.mxu0 0.0
  %2290 = vmatprep.subr.mxu0 0.0
  %2291 = vmatpush1.msra.mxu0 0.0
  %2292 = vmatprep.subr.mxu0 0.0
  %2293 = vmatpush1.msra.mxu0 0.0
  %2294 = vmatprep.subr.mxu0 0.0
  %2295 = vmatpush1.msra.mxu0 0.0
  %2296 = vmatprep.subr.mxu0 0.0
  %2297 = vmatpush1.msra.mxu0 0.0
  %2298 = vmatprep.subr.mxu0 0.0
  %2299 = vmatpush1.msra.mxu0 0.0
  %2300 = vmatprep.subr.mxu0 0.0
  %2301 = vmatpush1.msra.mxu0 0.0
  %2302 = vmatprep.subr.mxu0 0.0
  %2303 = vmatpush1.msra.mxu0 0.0
  %2304 = vmatprep.subr.mxu0 0.0
  %2305 = vmatpush1.msra.mxu0 0.0
  %2306 = vmatprep.subr.mxu0 0.0
  %2307 = vmatpush1.msra.mxu0 0.0
  %2308 = vmatprep.subr.mxu0 0.0
  %2309 = vmatpush1.msra.mxu0 0.0
  %2310 = vmatprep.subr.mxu0 0.0
  %2311 = vmatpush1.msra.mxu0 0.0
  %2312 = vmatprep.subr.mxu0 0.0
  %2313 = vmatpush1.msra.mxu0 0.0
  %2314 = vmatprep.mubr.f32.mxu0 0.0
  %2315 = vmatmul.mubr.f32.gmra.mrb[0].mxu0 %v2245
  %v2316 = vpop.f32.mrb[0].mxu0
  %v2317 = vadd.f32 0.0, %v2316
  %v2318 = vpop.f32.mrb[0].mxu0
  %2319 = vmatprep.mubr.f32.mxu0 0.0
  %2320 = vmatmul.mubr.f32.gmra.mrb[0].mxu0 %v2248
  %v2321 = vpop.f32.mrb[0].mxu0
  %v2322 = vadd.f32 0.0, %v2321
  %v2323 = vpop.f32.mrb[0].mxu0
  %2324 = vdwg.mxu0
  %v2326 = vsel %vm333, %v1831, 0
  %v2329 = vsel %vm333, %v1907, 0
  %2331 = vmatprep.subr.mxu0 0.0
  %2332 = vmatpush1.msra.mxu0 %v1574
  %2333 = vmatprep.subr.mxu0 0.0
  %2334 = vmatpush1.msra.mxu0 %v1575
  %2335 = vmatprep.subr.mxu0 0.0
  %2336 = vmatpush1.msra.mxu0 0.0
  %2337 = vmatprep.subr.mxu0 0.0
  %2338 = vmatpush1.msra.mxu0 0.0
  %2339 = vmatprep.subr.mxu0 0.0
  %2340 = vmatpush1.msra.mxu0 0.0
  %2341 = vmatprep.subr.mxu0 0.0
  %2342 = vmatpush1.msra.mxu0 0.0
  %2343 = vmatprep.subr.mxu0 0.0
  %2344 = vmatpush1.msra.mxu0 0.0
  %2345 = vmatprep.subr.mxu0 0.0
  %2346 = vmatpush1.msra.mxu0 0.0
  %2347 = vmatprep.subr.mxu0 0.0
  %2348 = vmatpush1.msra.mxu0 0.0
  %2349 = vmatprep.subr.mxu0 0.0
  %2350 = vmatpush1.msra.mxu0 0.0
  %2351 = vmatprep.subr.mxu0 0.0
  %2352 = vmatpush1.msra.mxu0 0.0
  %2353 = vmatprep.subr.mxu0 0.0
  %2354 = vmatpush1.msra.mxu0 0.0
  %2355 = vmatprep.subr.mxu0 0.0
  %2356 = vmatpush1.msra.mxu0 0.0
  %2357 = vmatprep.subr.mxu0 0.0
  %2358 = vmatpush1.msra.mxu0 0.0
  %2359 = vmatprep.subr.mxu0 0.0
  %2360 = vmatpush1.msra.mxu0 0.0
  %2361 = vmatprep.subr.mxu0 0.0
  %2362 = vmatpush1.msra.mxu0 0.0
  %2363 = vmatprep.subr.mxu0 0.0
  %2364 = vmatpush1.msra.mxu0 0.0
  %2365 = vmatprep.subr.mxu0 0.0
  %2366 = vmatpush1.msra.mxu0 0.0
  %2367 = vmatprep.subr.mxu0 0.0
  %2368 = vmatpush1.msra.mxu0 0.0
  %2369 = vmatprep.subr.mxu0 0.0
  %2370 = vmatpush1.msra.mxu0 0.0
  %2371 = vmatprep.subr.mxu0 0.0
  %2372 = vmatpush1.msra.mxu0 0.0
  %2373 = vmatprep.subr.mxu0 0.0
  %2374 = vmatpush1.msra.mxu0 0.0
  %2375 = vmatprep.subr.mxu0 0.0
  %2376 = vmatpush1.msra.mxu0 0.0
  %2377 = vmatprep.subr.mxu0 0.0
  %2378 = vmatpush1.msra.mxu0 0.0
  %2379 = vmatprep.subr.mxu0 0.0
  %2380 = vmatpush1.msra.mxu0 0.0
  %2381 = vmatprep.subr.mxu0 0.0
  %2382 = vmatpush1.msra.mxu0 0.0
  %2383 = vmatprep.subr.mxu0 0.0
  %2384 = vmatpush1.msra.mxu0 0.0
  %2385 = vmatprep.subr.mxu0 0.0
  %2386 = vmatpush1.msra.mxu0 0.0
  %2387 = vmatprep.subr.mxu0 0.0
  %2388 = vmatpush1.msra.mxu0 0.0
  %2389 = vmatprep.subr.mxu0 0.0
  %2390 = vmatpush1.msra.mxu0 0.0
  %2391 = vmatprep.subr.mxu0 0.0
  %2392 = vmatpush1.msra.mxu0 0.0
  %2393 = vmatprep.subr.mxu0 0.0
  %2394 = vmatpush1.msra.mxu0 0.0
  %2395 = vmatprep.mubr.f32.mxu0 0.0
  %2396 = vmatmul.mubr.f32.gmra.mrb[0].mxu0 %v2326
  %v2397 = vpop.f32.mrb[0].mxu0
  %v2398 = vadd.f32 %v2317, %v2397
  %v2399 = vpop.f32.mrb[0].mxu0
  %2400 = vmatprep.mubr.f32.mxu0 0.0
  %2401 = vmatmul.mubr.f32.gmra.mrb[0].mxu0 %v2329
  %v2402 = vpop.f32.mrb[0].mxu0
  %v2403 = vadd.f32 %v2322, %v2402
  %v2404 = vpop.f32.mrb[0].mxu0
  %2405 = vdwg.mxu0
  %s2406 = scalar_lea.vmem %s10, 1
  %v2407 = vld [vmem:[%s2406] sm:$0x1]
  %v2409 = vlaneseq
  %v2410 = vshrl.u32 %v2409, 7
  %v2411 = vsub.s32 0, %v2410
  %v2412 = vrot.slane %v2407, %v2411
  %v2414 = vadd.f32 %v2398, %v2412
  %v2415 = vadd.f32 %v2403, %v2412
  %v2416 = vadd.f32 %v1477, %v2414
  %v2417 = vadd.f32 %v1478, %v2415
  %s2418 = scalar_lea.vmem %s11, 1
  %v2419 = vld [vmem:[%s2418] sm:$0x1]
  %s2420 = scalar_lea.vmem %s12, 1
  %v2421 = vld [vmem:[%s2420] sm:$0x1]
  %v2422 = vsel %vm184, %v2416, 0.0
  %2423 = vadd.xlane.f32.xlu0 %v2422
  %v2424 = vpop.xlane.xlu0 %2423
  %v2425 = vsel %vm184, %v2417, 0.0
  %2426 = vadd.xlane.f32.xlu0 %v2425
  %v2427 = vpop.xlane.xlu0 %2426
  %v2428 = vmul.f32 %v2424, %v191
  %v2429 = vmul.f32 %v2427, %v191
  %v2430 = vsub.f32 %v2416, %v2428
  %v2431 = vsub.f32 %v2417, %v2429
  %v2432 = vmul.f32 %v2430, %v2430
  %v2433 = vmul.f32 %v2431, %v2431
  %v2434 = vsel %vm184, %v2432, 0.0
  %2435 = vadd.xlane.f32.xlu0 %v2434
  %v2436 = vpop.xlane.xlu0 %2435
  %v2437 = vsel %vm184, %v2433, 0.0
  %2438 = vadd.xlane.f32.xlu0 %v2437
  %v2439 = vpop.xlane.xlu0 %2438
  %v2440 = vmul.f32 %v2436, %v191
  %v2441 = vmul.f32 %v2439, %v191
  %v2442 = vadd.f32 %v2440, 1e-12
  %v2443 = vadd.f32 %v2441, 1e-12
  %v2444 = vrsqrt.pop %v2442
  %v2445 = vrsqrt.pop %v2443
  %v2446 = vmul.f32 %v2430, %v2444
  %v2447 = vmul.f32 %v2431, %v2445
  %v2449 = vlaneseq
  %v2450 = vshrl.u32 %v2449, 7
  %v2451 = vsub.s32 0, %v2450
  %v2452 = vrot.slane %v2419, %v2451
  %v2454 = vmul.f32 %v2446, %v2452
  %v2455 = vmul.f32 %v2447, %v2452
  %v2457 = vlaneseq
  %v2458 = vshrl.u32 %v2457, 7
  %v2459 = vsub.s32 0, %v2458
  %v2460 = vrot.slane %v2421, %v2459
  %v2462 = vadd.f32 %v2454, %v2460
  %v2463 = vadd.f32 %v2455, %v2460
  %s2464 = scalar_lea.vmem %s13, 32
  %v2465 = vld [vmem:[%s2464] sm:$0xff]
  %v2466 = vld [vmem:[%s2464 + $0x8] sm:$0xff]
  %v2467 = vld [vmem:[%s2464 + $0x10] sm:$0xff]
  %v2468 = vld [vmem:[%s2464 + $0x18] sm:$0xff]
  %s2469 = scalar_lea.vmem %s14, 1
  %v2470 = vld [vmem:[%s2469] sm:$0x1]
  %v2472 = vlaneseq
  %v2473 = vshrl.u32 %v2472, 7
  %v2474 = vsub.s32 0, %v2473
  %v2475 = vrot.slane %v2470, %v2474
  %v2478 = vsel %vm184, %v2462, 0
  %v2481 = vsel %vm184, %v2463, 0
  %2483 = vmatprep.subr.mxu0 0.0
  %2484 = vmatpush1.msra.mxu0 %v2465
  %2485 = vmatprep.subr.mxu0 0.0
  %2486 = vmatpush1.msra.mxu0 %v2466
  %2487 = vmatprep.subr.mxu0 0.0
  %2488 = vmatpush1.msra.mxu0 %v2467
  %2489 = vmatprep.subr.mxu0 0.0
  %2490 = vmatpush1.msra.mxu0 %v2468
  %2491 = vmatprep.subr.mxu0 0.0
  %2492 = vmatpush1.msra.mxu0 0.0
  %2493 = vmatprep.subr.mxu0 0.0
  %2494 = vmatpush1.msra.mxu0 0.0
  %2495 = vmatprep.subr.mxu0 0.0
  %2496 = vmatpush1.msra.mxu0 0.0
  %2497 = vmatprep.subr.mxu0 0.0
  %2498 = vmatpush1.msra.mxu0 0.0
  %2499 = vmatprep.subr.mxu0 0.0
  %2500 = vmatpush1.msra.mxu0 0.0
  %2501 = vmatprep.subr.mxu0 0.0
  %2502 = vmatpush1.msra.mxu0 0.0
  %2503 = vmatprep.subr.mxu0 0.0
  %2504 = vmatpush1.msra.mxu0 0.0
  %2505 = vmatprep.subr.mxu0 0.0
  %2506 = vmatpush1.msra.mxu0 0.0
  %2507 = vmatprep.subr.mxu0 0.0
  %2508 = vmatpush1.msra.mxu0 0.0
  %2509 = vmatprep.subr.mxu0 0.0
  %2510 = vmatpush1.msra.mxu0 0.0
  %2511 = vmatprep.subr.mxu0 0.0
  %2512 = vmatpush1.msra.mxu0 0.0
  %2513 = vmatprep.subr.mxu0 0.0
  %2514 = vmatpush1.msra.mxu0 0.0
  %2515 = vmatprep.subr.mxu0 0.0
  %2516 = vmatpush1.msra.mxu0 0.0
  %2517 = vmatprep.subr.mxu0 0.0
  %2518 = vmatpush1.msra.mxu0 0.0
  %2519 = vmatprep.subr.mxu0 0.0
  %2520 = vmatpush1.msra.mxu0 0.0
  %2521 = vmatprep.subr.mxu0 0.0
  %2522 = vmatpush1.msra.mxu0 0.0
  %2523 = vmatprep.subr.mxu0 0.0
  %2524 = vmatpush1.msra.mxu0 0.0
  %2525 = vmatprep.subr.mxu0 0.0
  %2526 = vmatpush1.msra.mxu0 0.0
  %2527 = vmatprep.subr.mxu0 0.0
  %2528 = vmatpush1.msra.mxu0 0.0
  %2529 = vmatprep.subr.mxu0 0.0
  %2530 = vmatpush1.msra.mxu0 0.0
  %2531 = vmatprep.subr.mxu0 0.0
  %2532 = vmatpush1.msra.mxu0 0.0
  %2533 = vmatprep.subr.mxu0 0.0
  %2534 = vmatpush1.msra.mxu0 0.0
  %2535 = vmatprep.subr.mxu0 0.0
  %2536 = vmatpush1.msra.mxu0 0.0
  %2537 = vmatprep.subr.mxu0 0.0
  %2538 = vmatpush1.msra.mxu0 0.0
  %2539 = vmatprep.subr.mxu0 0.0
  %2540 = vmatpush1.msra.mxu0 0.0
  %2541 = vmatprep.subr.mxu0 0.0
  %2542 = vmatpush1.msra.mxu0 0.0
  %2543 = vmatprep.subr.mxu0 0.0
  %2544 = vmatpush1.msra.mxu0 0.0
  %2545 = vmatprep.subr.mxu0 0.0
  %2546 = vmatpush1.msra.mxu0 0.0
  %2547 = vmatprep.mubr.f32.mxu0 0.0
  %2548 = vmatmul.mubr.f32.gmra.mrb[0].mxu0 %v2478
  %v2549 = vpop.f32.mrb[0].mxu0
  %v2550 = vadd.f32 %v2475, %v2549
  %v2551 = vpop.f32.mrb[0].mxu0
  %2552 = vmatprep.mubr.f32.mxu0 0.0
  %2553 = vmatmul.mubr.f32.gmra.mrb[0].mxu0 %v2481
  %v2554 = vpop.f32.mrb[0].mxu0
  %v2555 = vadd.f32 %v2475, %v2554
  %v2556 = vpop.f32.mrb[0].mxu0
  %2557 = vdwg.mxu0
  %v2558 = vmul.f32 %v2550, 0.5
  %v2559 = vmul.f32 %v2555, 0.5
  %v2560 = vmul.f32 %v2550, 0.044715
  %v2561 = vmul.f32 %v2555, 0.044715
  %v2562 = vmul.f32 %v2560, %v2550
  %v2563 = vmul.f32 %v2561, %v2555
  %v2564 = vmul.f32 %v2562, %v2550
  %v2565 = vmul.f32 %v2563, %v2555
  %v2566 = vadd.f32 %v2550, %v2564
  %v2567 = vadd.f32 %v2555, %v2565
  %v2568 = vmul.f32 %v2566, 0.7978846
  %v2569 = vmul.f32 %v2567, 0.7978846
  %v2570 = vtanh.pop %v2568
  %v2571 = vtanh.pop %v2569
  %v2572 = vadd.f32 %v2570, 1.0
  %v2573 = vadd.f32 %v2571, 1.0
  %v2574 = vmul.f32 %v2558, %v2572
  %v2575 = vmul.f32 %v2559, %v2573
  %s2576 = scalar_lea.vmem %s15, 64
  %v2577 = vld [vmem:[%s2576] sm:$0xff]
  %v2578 = vld [vmem:[%s2576 + $0x8] sm:$0xff]
  %v2579 = vld [vmem:[%s2576 + $0x10] sm:$0xff]
  %v2580 = vld [vmem:[%s2576 + $0x18] sm:$0xff]
  %v2581 = vld [vmem:[%s2576 + $0x20] sm:$0xff]
  %v2582 = vld [vmem:[%s2576 + $0x28] sm:$0xff]
  %v2583 = vld [vmem:[%s2576 + $0x30] sm:$0xff]
  %v2584 = vld [vmem:[%s2576 + $0x38] sm:$0xff]
  %s2585 = scalar_lea.vmem %s16, 1
  %v2586 = vld [vmem:[%s2585] sm:$0x1]
  %v2588 = vlaneseq
  %v2589 = vshrl.u32 %v2588, 7
  %v2590 = vsub.s32 0, %v2589
  %v2591 = vrot.slane %v2586, %v2590
  %v2594 = vsel %vm93, %v2574, 0
  %v2597 = vsel %vm93, %v2575, 0
  %2599 = vmatprep.subr.mxu0 0.0
  %2600 = vmatpush1.msra.mxu0 %v2577
  %2601 = vmatprep.subr.mxu0 0.0
  %2602 = vmatpush1.msra.mxu0 %v2578
  %2603 = vmatprep.subr.mxu0 0.0
  %2604 = vmatpush1.msra.mxu0 %v2579
  %2605 = vmatprep.subr.mxu0 0.0
  %2606 = vmatpush1.msra.mxu0 %v2580
  %2607 = vmatprep.subr.mxu0 0.0
  %2608 = vmatpush1.msra.mxu0 %v2581
  %2609 = vmatprep.subr.mxu0 0.0
  %2610 = vmatpush1.msra.mxu0 %v2582
  %2611 = vmatprep.subr.mxu0 0.0
  %2612 = vmatpush1.msra.mxu0 %v2583
  %2613 = vmatprep.subr.mxu0 0.0
  %2614 = vmatpush1.msra.mxu0 %v2584
  %2615 = vmatprep.subr.mxu0 0.0
  %2616 = vmatpush1.msra.mxu0 0.0
  %2617 = vmatprep.subr.mxu0 0.0
  %2618 = vmatpush1.msra.mxu0 0.0
  %2619 = vmatprep.subr.mxu0 0.0
  %2620 = vmatpush1.msra.mxu0 0.0
  %2621 = vmatprep.subr.mxu0 0.0
  %2622 = vmatpush1.msra.mxu0 0.0
  %2623 = vmatprep.subr.mxu0 0.0
  %2624 = vmatpush1.msra.mxu0 0.0
  %2625 = vmatprep.subr.mxu0 0.0
  %2626 = vmatpush1.msra.mxu0 0.0
  %2627 = vmatprep.subr.mxu0 0.0
  %2628 = vmatpush1.msra.mxu0 0.0
  %2629 = vmatprep.subr.mxu0 0.0
  %2630 = vmatpush1.msra.mxu0 0.0
  %2631 = vmatprep.subr.mxu0 0.0
  %2632 = vmatpush1.msra.mxu0 0.0
  %2633 = vmatprep.subr.mxu0 0.0
  %2634 = vmatpush1.msra.mxu0 0.0
  %2635 = vmatprep.subr.mxu0 0.0
  %2636 = vmatpush1.msra.mxu0 0.0
  %2637 = vmatprep.subr.mxu0 0.0
  %2638 = vmatpush1.msra.mxu0 0.0
  %2639 = vmatprep.subr.mxu0 0.0
  %2640 = vmatpush1.msra.mxu0 0.0
  %2641 = vmatprep.subr.mxu0 0.0
  %2642 = vmatpush1.msra.mxu0 0.0
  %2643 = vmatprep.subr.mxu0 0.0
  %2644 = vmatpush1.msra.mxu0 0.0
  %2645 = vmatprep.subr.mxu0 0.0
  %2646 = vmatpush1.msra.mxu0 0.0
  %2647 = vmatprep.subr.mxu0 0.0
  %2648 = vmatpush1.msra.mxu0 0.0
  %2649 = vmatprep.subr.mxu0 0.0
  %2650 = vmatpush1.msra.mxu0 0.0
  %2651 = vmatprep.subr.mxu0 0.0
  %2652 = vmatpush1.msra.mxu0 0.0
  %2653 = vmatprep.subr.mxu0 0.0
  %2654 = vmatpush1.msra.mxu0 0.0
  %2655 = vmatprep.subr.mxu0 0.0
  %2656 = vmatpush1.msra.mxu0 0.0
  %2657 = vmatprep.subr.mxu0 0.0
  %2658 = vmatpush1.msra.mxu0 0.0
  %2659 = vmatprep.subr.mxu0 0.0
  %2660 = vmatpush1.msra.mxu0 0.0
  %2661 = vmatprep.subr.mxu0 0.0
  %2662 = vmatpush1.msra.mxu0 0.0
  %2663 = vmatprep.mubr.f32.mxu0 0.0
  %2664 = vmatmul.mubr.f32.gmra.mrb[0].mxu0 %v2594
  %v2665 = vpop.f32.mrb[0].mxu0
  %v2666 = vadd.f32 %v2591, %v2665
  %v2667 = vpop.f32.mrb[0].mxu0
  %2668 = vmatprep.mubr.f32.mxu0 0.0
  %2669 = vmatmul.mubr.f32.gmra.mrb[0].mxu0 %v2597
  %v2670 = vpop.f32.mrb[0].mxu0
  %v2671 = vadd.f32 %v2591, %v2670
  %v2672 = vpop.f32.mrb[0].mxu0
  %2673 = vdwg.mxu0
  %v2674 = vadd.f32 %v2462, %v2666
  %v2675 = vadd.f32 %v2463, %v2671
  %s2676 = scalar_lea.vmem %s17, 1
  %v2677 = vld [vmem:[%s2676] sm:$0x1]
  %s2678 = scalar_lea.vmem %s18, 1
  %v2679 = vld [vmem:[%s2678] sm:$0x1]
  %v2680 = vsel %vm184, %v2674, 0.0
  %2681 = vadd.xlane.f32.xlu0 %v2680
  %v2682 = vpop.xlane.xlu0 %2681
  %v2683 = vsel %vm184, %v2675, 0.0
  %2684 = vadd.xlane.f32.xlu0 %v2683
  %v2685 = vpop.xlane.xlu0 %2684
  %v2686 = vmul.f32 %v2682, %v191
  %v2687 = vmul.f32 %v2685, %v191
  %v2688 = vsub.f32 %v2674, %v2686
  %v2689 = vsub.f32 %v2675, %v2687
  %v2690 = vmul.f32 %v2688, %v2688
  %v2691 = vmul.f32 %v2689, %v2689
  %v2692 = vsel %vm184, %v2690, 0.0
  %2693 = vadd.xlane.f32.xlu0 %v2692
  %v2694 = vpop.xlane.xlu0 %2693
  %v2695 = vsel %vm184, %v2691, 0.0
  %2696 = vadd.xlane.f32.xlu0 %v2695
  %v2697 = vpop.xlane.xlu0 %2696
  %v2698 = vmul.f32 %v2694, %v191
  %v2699 = vmul.f32 %v2697, %v191
  %v2700 = vadd.f32 %v2698, 1e-12
  %v2701 = vadd.f32 %v2699, 1e-12
  %v2702 = vrsqrt.pop %v2700
  %v2703 = vrsqrt.pop %v2701
  %v2704 = vmul.f32 %v2688, %v2702
  %v2705 = vmul.f32 %v2689, %v2703
  %v2707 = vlaneseq
  %v2708 = vshrl.u32 %v2707, 7
  %v2709 = vsub.s32 0, %v2708
  %v2710 = vrot.slane %v2677, %v2709
  %v2712 = vmul.f32 %v2704, %v2710
  %v2713 = vmul.f32 %v2705, %v2710
  %v2715 = vlaneseq
  %v2716 = vshrl.u32 %v2715, 7
  %v2717 = vsub.s32 0, %v2716
  %v2718 = vrot.slane %v2679, %v2717
  %v2720 = vadd.f32 %v2712, %v2718
  %v2721 = vadd.f32 %v2713, %v2718
  %v2723 = vrot.slane %v2721, 7
  %vm2725 = vcmask 1040384
  %v2726 = vsel %vm2725, %v2720, %v2723
  %v2727 = vld [vmem:[%s19] sm:$0xff]
  %v2728 = vld [vmem:[%s19 + $0x8] sm:$0xff]
  %v2729 = vld [vmem:[%s19 + $0x10] sm:$0xff]
  %v2730 = vld [vmem:[%s19 + $0x18] sm:$0xff]
  %v2731 = vld [vmem:[%s20] sm:$0x1]
  %v2733 = vlaneseq
  %v2734 = vshrl.u32 %v2733, 7
  %v2735 = vsub.s32 0, %v2734
  %v2736 = vrot.slane %v2731, %v2735
  %v2739 = vsel %vm184, %v2726, 0
  %2741 = vmatprep.subr.mxu0 0.0
  %2742 = vmatpush1.msra.mxu0 %v2727
  %2743 = vmatprep.subr.mxu0 0.0
  %2744 = vmatpush1.msra.mxu0 %v2728
  %2745 = vmatprep.subr.mxu0 0.0
  %2746 = vmatpush1.msra.mxu0 %v2729
  %2747 = vmatprep.subr.mxu0 0.0
  %2748 = vmatpush1.msra.mxu0 %v2730
  %2749 = vmatprep.subr.mxu0 0.0
  %2750 = vmatpush1.msra.mxu0 0.0
  %2751 = vmatprep.subr.mxu0 0.0
  %2752 = vmatpush1.msra.mxu0 0.0
  %2753 = vmatprep.subr.mxu0 0.0
  %2754 = vmatpush1.msra.mxu0 0.0
  %2755 = vmatprep.subr.mxu0 0.0
  %2756 = vmatpush1.msra.mxu0 0.0
  %2757 = vmatprep.subr.mxu0 0.0
  %2758 = vmatpush1.msra.mxu0 0.0
  %2759 = vmatprep.subr.mxu0 0.0
  %2760 = vmatpush1.msra.mxu0 0.0
  %2761 = vmatprep.subr.mxu0 0.0
  %2762 = vmatpush1.msra.mxu0 0.0
  %2763 = vmatprep.subr.mxu0 0.0
  %2764 = vmatpush1.msra.mxu0 0.0
  %2765 = vmatprep.subr.mxu0 0.0
  %2766 = vmatpush1.msra.mxu0 0.0
  %2767 = vmatprep.subr.mxu0 0.0
  %2768 = vmatpush1.msra.mxu0 0.0
  %2769 = vmatprep.subr.mxu0 0.0
  %2770 = vmatpush1.msra.mxu0 0.0
  %2771 = vmatprep.subr.mxu0 0.0
  %2772 = vmatpush1.msra.mxu0 0.0
  %2773 = vmatprep.subr.mxu0 0.0
  %2774 = vmatpush1.msra.mxu0 0.0
  %2775 = vmatprep.subr.mxu0 0.0
  %2776 = vmatpush1.msra.mxu0 0.0
  %2777 = vmatprep.subr.mxu0 0.0
  %2778 = vmatpush1.msra.mxu0 0.0
  %2779 = vmatprep.subr.mxu0 0.0
  %2780 = vmatpush1.msra.mxu0 0.0
  %2781 = vmatprep.subr.mxu0 0.0
  %2782 = vmatpush1.msra.mxu0 0.0
  %2783 = vmatprep.subr.mxu0 0.0
  %2784 = vmatpush1.msra.mxu0 0.0
  %2785 = vmatprep.subr.mxu0 0.0
  %2786 = vmatpush1.msra.mxu0 0.0
  %2787 = vmatprep.subr.mxu0 0.0
  %2788 = vmatpush1.msra.mxu0 0.0
  %2789 = vmatprep.subr.mxu0 0.0
  %2790 = vmatpush1.msra.mxu0 0.0
  %2791 = vmatprep.subr.mxu0 0.0
  %2792 = vmatpush1.msra.mxu0 0.0
  %2793 = vmatprep.subr.mxu0 0.0
  %2794 = vmatpush1.msra.mxu0 0.0
  %2795 = vmatprep.subr.mxu0 0.0
  %2796 = vmatpush1.msra.mxu0 0.0
  %2797 = vmatprep.subr.mxu0 0.0
  %2798 = vmatpush1.msra.mxu0 0.0
  %2799 = vmatprep.subr.mxu0 0.0
  %2800 = vmatpush1.msra.mxu0 0.0
  %2801 = vmatprep.subr.mxu0 0.0
  %2802 = vmatpush1.msra.mxu0 0.0
  %2803 = vmatprep.subr.mxu0 0.0
  %2804 = vmatpush1.msra.mxu0 0.0
  %2805 = vmatprep.mubr.f32.mxu0 0.0
  %2806 = vmatmul.mubr.f32.gmra.mrb[0].mxu0 %v2739
  %v2807 = vpop.f32.mrb[0].mxu0
  %v2808 = vadd.f32 %v2736, %v2807
  %v2809 = vpop.f32.mrb[0].mxu0
  %2810 = vdwg.mxu0
  %vm2811 = vcmask 25600
  %2812 = vst.msk [vmem:[%s21] sm:$0x3] %vm2811, %v2808
  // Predicated region
  $region86: #{_forward.1} parent=0 // pred_check
    _
  $region87: #{_forward.1} parent=0 // pred_check_branch
    %2814 = sbr.rel (0) target = $region89
  $region88: #{_forward.1} parent=0 // pred_region
    _
  $region89: #{_forward.1} parent=0 // pred_fallthru
    _
  // Predicated region
  $region90: #{_forward.1} parent=0 // pred_check
    _
  $region91: #{_forward.1} parent=0 // pred_check_branch
    %2816 = sbr.rel (0) target = $region93
  $region92: #{_forward.1} parent=0 // pred_region
    _
  $region93: #{_forward.1} parent=0 // pred_fallthru
    _

</llo_original>
